<compile_context>
chip_gen: v7x
topology: tpu7x:2x2x1
jax: 0.10.0
libtpu: 0.0.40
codegen_flags: <defaults>
</compile_context>

<pallas_src>
import functools

import jax
import jax.numpy as jnp
from jax import lax
from jax.experimental import pallas as pl
from jax.experimental.pallas import tpu as pltpu

IM_SIZE = 24
LATENT_DIM = 32
NE = 32
DIM_INPUT = 3
LN_EPS = 1e-5


# ----------------------------------------------------------------------------
# Pallas kernel 1: fused conv stage, one image per grid step.
#   patches block: (1, K, S)  with S = Ho*Wo on the lane axis, K = Cin*kh*kw
#   weight       : (Cout, K)
#   out block    : (1, Cout, S)   [lane-dense store]
#   mode: "none" | "ln_relu" (LayerNorm over (Cout,S) per image + ReLU) | "sigmoid"
# ----------------------------------------------------------------------------
def _conv_stage_kernel(*refs, mode):
    if mode == "ln_relu":
        p_ref, w_ref, b_ref, g_ref, bt_ref, o_ref = refs
    else:
        p_ref, w_ref, b_ref, o_ref = refs

    y = jnp.dot(w_ref[...], p_ref[0], preferred_element_type=jnp.float32) + b_ref[...]
    if mode == "ln_relu":
        # Mean of row-means == full mean (all rows have equal logical length S);
        # reductions stay on logical shapes, no lane padding enters the stats.
        mu = jnp.mean(jnp.mean(y, axis=1, keepdims=True), axis=0, keepdims=True)
        yc = y - mu
        var = jnp.mean(jnp.mean(yc * yc, axis=1, keepdims=True),
                       axis=0, keepdims=True)
        y = yc * lax.rsqrt(var + LN_EPS)
        y = jnp.maximum(y * g_ref[...] + bt_ref[...], 0.0)
    elif mode == "sigmoid":
        y = jax.nn.sigmoid(y)
    o_ref[0] = y


def conv_stage(patches, w2, b2, gamma=None, beta=None, mode="none"):
    n_img, k, s = patches.shape
    cout = w2.shape[0]

    ins = [patches, w2, b2]
    in_specs = [
        pl.BlockSpec((1, k, s), lambda n: (n, 0, 0)),
        pl.BlockSpec((cout, k), lambda n: (0, 0)),
        pl.BlockSpec((cout, 1), lambda n: (0, 0)),
    ]
    if mode == "ln_relu":
        ins += [gamma, beta]
        in_specs += [pl.BlockSpec((cout, s), lambda n: (0, 0)),
                     pl.BlockSpec((cout, s), lambda n: (0, 0))]

    return pl.pallas_call(
        functools.partial(_conv_stage_kernel, mode=mode),
        out_shape=jax.ShapeDtypeStruct((n_img, cout, s), jnp.float32),
        grid_spec=pltpu.PrefetchScalarGridSpec(
            num_scalar_prefetch=0,
            grid=(n_img,),
            in_specs=in_specs,
            out_specs=pl.BlockSpec((1, cout, s), lambda n: (n, 0, 0)),
        ),
        compiler_params=pltpu.CompilerParams(dimension_semantics=("parallel",)),
    )(*ins)


# ----------------------------------------------------------------------------
# Pallas kernel 2: (folded conv3 + mask) input projection + LSTM recurrence
# + fc_obs + ReLU, all in one kernel.
#   x     : (N, 256)  time-major rows (t*B + b)  -- flattened pooled features
#   mask  : (N, 1)    time-major
#   w_enc : (256, 128)  conv3 (w/o bias) composed with W_ih[:, :64]^T
#   w_msk : (1, 128)    W_ih[:, 64]^T
#   bias  : (1, 128)    b_ih + b_hh + conv3-bias projected through W_ih[:, :64]^T
#   whh_t : (32, 128),  fcw_t: (32, 288),  fcb: (1, 288)
#   out   : (N, 288)
# ----------------------------------------------------------------------------
def _lstm_fc_kernel(x_ref, m_ref, wenc_ref, wmsk_ref, b_ref, whh_ref,
                    fcw_ref, fcb_ref, o_ref, xg_ref, h_ref, *, t_len, bsz, hdim):
    # Hoisted input projection: one MXU matmul for all (t, b) pairs.
    xg_ref[...] = (jnp.dot(x_ref[...], wenc_ref[...],
                           preferred_element_type=jnp.float32)
                   + m_ref[...] * wmsk_ref[...] + b_ref[...])
    whh = whh_ref[...]

    def step(t, carry):
        h, c = carry
        g = xg_ref[pl.ds(t * bsz, bsz), :] + jnp.dot(
            h, whh, preferred_element_type=jnp.float32)
        sig = jax.nn.sigmoid(g)                        # one full-width EUP pass
        i_g = sig[:, 0 * hdim:1 * hdim]
        f_g = sig[:, 1 * hdim:2 * hdim]
        o_g = sig[:, 3 * hdim:4 * hdim]
        g_g = jnp.tanh(g[:, 2 * hdim:3 * hdim])        # tanh only on the g gate
        c_new = f_g * c + i_g * g_g
        h_new = o_g * jnp.tanh(c_new)
        h_ref[pl.ds(t * bsz, bsz), :] = h_new
        return (h_new, c_new)

    zeros = jnp.zeros((bsz, hdim), jnp.float32)
    lax.fori_loop(0, t_len, step, (zeros, zeros), unroll=bool(t_len <= 8))

    # fc_obs + ReLU on all timesteps at once (off the serial recurrence path).
    y = jnp.dot(h_ref[...], fcw_ref[...],
                preferred_element_type=jnp.float32) + fcb_ref[...]
    o_ref[...] = jnp.maximum(y, 0.0)


def lstm_encoder_head(x_flat, mask_flat, w_enc, w_msk, bias, whh_t, fcw_t, fcb,
                      *, t_len, bsz):
    n, d = x_flat.shape
    hdim = whh_t.shape[0]
    n_out = fcw_t.shape[1]
    return pl.pallas_call(
        functools.partial(_lstm_fc_kernel, t_len=t_len, bsz=bsz, hdim=hdim),
        out_shape=jax.ShapeDtypeStruct((n, n_out), jnp.float32),
        grid_spec=pltpu.PrefetchScalarGridSpec(
            num_scalar_prefetch=0,
            grid=(1,),
            in_specs=[
                pl.BlockSpec((n, d), lambda i: (0, 0)),
                pl.BlockSpec((n, 1), lambda i: (0, 0)),
                pl.BlockSpec((d, 4 * hdim), lambda i: (0, 0)),
                pl.BlockSpec((1, 4 * hdim), lambda i: (0, 0)),
                pl.BlockSpec((1, 4 * hdim), lambda i: (0, 0)),
                pl.BlockSpec((hdim, 4 * hdim), lambda i: (0, 0)),
                pl.BlockSpec((hdim, n_out), lambda i: (0, 0)),
                pl.BlockSpec((1, n_out), lambda i: (0, 0)),
            ],
            out_specs=pl.BlockSpec((n, n_out), lambda i: (0, 0)),
            scratch_shapes=[pltpu.VMEM((n, 4 * hdim), jnp.float32),
                            pltpu.VMEM((n, hdim), jnp.float32)],
        ),
        compiler_params=pltpu.CompilerParams(dimension_semantics=("arbitrary",)),
    )(x_flat, mask_flat, w_enc, w_msk, bias, whh_t, fcw_t, fcb)


# ----------------------------------------------------------------------------
# XLA glue (tiny tensors, fused by XLA under jit):
# TODO(synk): im2col patch extraction, MaxPool2d and ConvTranspose zero-dilation
# remain XLA glue; fusing them in-kernel needs unaligned lane-split reshapes /
# strided scatters that Mosaic does not express cleanly.
# ----------------------------------------------------------------------------
def extract_patches(x, kh, kw):
    """x: (N, C, H, W) -> patches (N, C*kh*kw, Ho*Wo), K ordered ci*kh*kw+di*kw+dj."""
    n, c, h, w = x.shape
    ho, wo = h - kh + 1, w - kw + 1
    cols = [x[:, :, di:di + ho, dj:dj + wo] for di in range(kh) for dj in range(kw)]
    p = jnp.stack(cols, axis=2)                       # (N, C, kh*kw, Ho, Wo)
    return p.reshape(n, c * kh * kw, ho * wo), (ho, wo)


def maxpool2(x):
    n, c, h, w = x.shape
    ho, wo = h // 2, w // 2
    x = x[:, :, :2 * ho, :2 * wo].reshape(n, c, ho, 2, wo, 2)
    return jnp.max(x, axis=(3, 5))


def dilate_pad(x, stride, k):
    """Zero-dilate by `stride` and pad by k-1 (ConvTranspose as a conv)."""
    n, c, h, w = x.shape
    if stride > 1:
        xd = jnp.zeros((n, c, (h - 1) * stride + 1, (w - 1) * stride + 1), x.dtype)
        xd = xd.at[:, :, ::stride, ::stride].set(x)
    else:
        xd = x
    return jnp.pad(xd, ((0, 0), (0, 0), (k - 1, k - 1), (k - 1, k - 1)))


# ----------------------------------------------------------------------------
# Parameters (deterministic synthetic init) and one-time packing.
# ----------------------------------------------------------------------------
def init_params(key):
    ks = jax.random.split(key, 16)
    s = 0.05
    nd = jax.random.normal
    p = {
        "c1_w": nd(ks[0], (16, 1, 3, 3)) * s,  "c1_b": nd(ks[1], (16,)) * s,
        "ln1_g": jnp.ones((16, 22, 22)),       "ln1_b": jnp.zeros((16, 22, 22)),
        "c2_w": nd(ks[2], (16, 16, 3, 3)) * s, "c2_b": nd(ks[3], (16,)) * s,
        "ln2_g": jnp.ones((16, 9, 9)),         "ln2_b": jnp.zeros((16, 9, 9)),
        "c3_w": nd(ks[4], (16, 16, 3, 3)) * s, "c3_b": nd(ks[5], (16,)) * s,
        "lstm_w_ih": nd(ks[6], (4 * LATENT_DIM, 16 * 2 * 2 + 1)) * s,
        "lstm_w_hh": nd(ks[7], (4 * LATENT_DIM, LATENT_DIM)) * s,
        "lstm_b_ih": nd(ks[8], (4 * LATENT_DIM,)) * s,
        "lstm_b_hh": nd(ks[9], (4 * LATENT_DIM,)) * s,
        "fc_w": nd(ks[10], (NE * DIM_INPUT ** 2, LATENT_DIM)) * s,
        "fc_b": nd(ks[11], (NE * DIM_INPUT ** 2,)) * s,
        "d1_w": nd(ks[12], (NE, 16, 5, 5)) * s, "d1_b": nd(ks[13], (16,)) * s,
        "dln1_g": jnp.ones((16, 11, 11)),       "dln1_b": jnp.zeros((16, 11, 11)),
        "d2_w": nd(ks[14], (16, 12, 3, 3)) * s, "d2_b": nd(ks[15], (12,)) * s,
        "dln2_g": jnp.ones((12, 23, 23)),       "dln2_b": jnp.zeros((12, 23, 23)),
        "d3_w": nd(jax.random.fold_in(key, 99), (12, 1, 2, 2)) * s,
        "d3_b": nd(jax.random.fold_in(key, 100), (1,)) * s,
    }
    return jax.tree_util.tree_map(lambda a: a.astype(jnp.float32), p)


def prepare_params(p):
    """Pack weights once into kernel-ready layouts (done outside the forward)."""
    def conv_w(w):                       # (Cout, Cin, kh, kw) -> (Cout, K)
        co = w.shape[0]
        return w.reshape(co, -1)

    def deconv_w(w):                     # (Cin, Cout, kh, kw) -> conv-equiv (Cout, K)
        w = jnp.flip(w, axis=(2, 3)).transpose(1, 0, 2, 3)
        return conv_w(w)

    # Fold conv3 (linear: im2col gather + matmul) and the LSTM input projection
    # into a single (256, 128) matrix + bias; mask gets its own (1, 128) column.
    eye = jnp.eye(16 * 4 * 4, dtype=jnp.float32).reshape(-1, 16, 4, 4)
    p_eye, _ = extract_patches(eye, 3, 3)                       # (256, 144, 4)
    conv3_map = jnp.einsum("ok,nks->nos", conv_w(p["c3_w"]), p_eye)  # (256, 16, 4)
    m_mat = conv3_map.reshape(256, 64)                          # x2_flat -> conv3 flat
    wih1_t = p["lstm_w_ih"][:, :64].T                           # (64, 128)
    enc_w = m_mat @ wih1_t                                      # (256, 128)
    mask_w = p["lstm_w_ih"][:, 64:65].T                         # (1, 128)
    b3_proj = jnp.repeat(p["c3_b"], 4) @ wih1_t                 # (128,)
    lstm_b = (p["lstm_b_ih"] + p["lstm_b_hh"] + b3_proj).reshape(1, -1)

    return {
        "c1_w": conv_w(p["c1_w"]), "c1_b": p["c1_b"].reshape(-1, 1),
        "ln1_g": p["ln1_g"].reshape(16, -1), "ln1_b": p["ln1_b"].reshape(16, -1),
        "c2_w": conv_w(p["c2_w"]), "c2_b": p["c2_b"].reshape(-1, 1),
        "ln2_g": p["ln2_g"].reshape(16, -1), "ln2_b": p["ln2_b"].reshape(16, -1),
        "enc_w": enc_w, "mask_w": mask_w, "lstm_b": lstm_b,
        "lstm_w_hh_t": p["lstm_w_hh"].T,                        # (32, 128)
        "fc_w_t": p["fc_w"].T,                                  # (32, 288)
        "fc_b": p["fc_b"].reshape(1, -1),
        "d1_w": deconv_w(p["d1_w"]), "d1_b": p["d1_b"].reshape(-1, 1),
        "dln1_g": p["dln1_g"].reshape(16, -1), "dln1_b": p["dln1_b"].reshape(16, -1),
        "d2_w": deconv_w(p["d2_w"]), "d2_b": p["d2_b"].reshape(-1, 1),
        "dln2_g": p["dln2_g"].reshape(12, -1), "dln2_b": p["dln2_b"].reshape(12, -1),
        "d3_w": deconv_w(p["d3_w"]), "d3_b": p["d3_b"].reshape(-1, 1),
    }


# ----------------------------------------------------------------------------
# Full forward, mirroring RNN.forward.
# ----------------------------------------------------------------------------
def rnn_forward(pp, obs, mask):
    bsz, t_len, c, h, w = obs.shape
    n = bsz * t_len
    # Time-major image ordering (row = t*B + b) so the LSTM kernel reads
    # contiguous per-timestep row blocks with no mid-graph transpose.
    x = obs.transpose(1, 0, 2, 3, 4).reshape(n, c, h, w)
    mask_tm = mask.transpose(1, 0, 2).reshape(n, 1)

    # ---- Encoder: conv + LN + ReLU fused, one image per grid step ----
    p, (ho, wo) = extract_patches(x, 3, 3)                             # (N,9,484)
    x = conv_stage(p, pp["c1_w"], pp["c1_b"], pp["ln1_g"], pp["ln1_b"], "ln_relu")
    x = maxpool2(x.reshape(n, 16, ho, wo))                             # (N,16,11,11)

    p, (ho, wo) = extract_patches(x, 3, 3)                             # (N,144,81)
    x = conv_stage(p, pp["c2_w"], pp["c2_b"], pp["ln2_g"], pp["ln2_b"], "ln_relu")
    x = maxpool2(x.reshape(n, 16, ho, wo))                             # (N,16,4,4)

    # ---- conv3 + mask + LSTM + fc_obs + ReLU: single fused kernel ----
    x2 = x.reshape(n, 16 * 4 * 4)                                      # (N,256)
    y = lstm_encoder_head(x2, mask_tm, pp["enc_w"], pp["mask_w"], pp["lstm_b"],
                          pp["lstm_w_hh_t"], pp["fc_w_t"], pp["fc_b"],
                          t_len=t_len, bsz=bsz)                        # (N,288)
    x = y.reshape(n, NE, DIM_INPUT, DIM_INPUT)                         # (N,32,3,3)

    # ---- Decoder: conv-transpose (as conv on dilated input) + LN/ReLU fused ----
    xp = dilate_pad(x, 3, 5)                                           # (N,32,15,15)
    p, (ho, wo) = extract_patches(xp, 5, 5)                            # (N,800,121)
    x = conv_stage(p, pp["d1_w"], pp["d1_b"], pp["dln1_g"], pp["dln1_b"], "ln_relu")
    x = x.reshape(n, 16, ho, wo)                                       # (N,16,11,11)

    xp = dilate_pad(x, 2, 3)                                           # (N,16,25,25)
    p, (ho, wo) = extract_patches(xp, 3, 3)                            # (N,144,529)
    x = conv_stage(p, pp["d2_w"], pp["d2_b"], pp["dln2_g"], pp["dln2_b"], "ln_relu")
    x = x.reshape(n, 12, ho, wo)                                       # (N,12,23,23)

    xp = dilate_pad(x, 1, 2)                                           # (N,12,25,25)
    p, _ = extract_patches(xp, 2, 2)                                   # (N,48,576)
    x = conv_stage(p, pp["d3_w"], pp["d3_b"], mode="sigmoid")          # (N,1,576)

    out = x.reshape(t_len, bsz, c, h, w).transpose(1, 0, 2, 3, 4)
    return out


if __name__ == "__main__":
    key = jax.random.PRNGKey(0)
    k_p, k_obs, k_mask = jax.random.split(key, 3)

    bsz, t_len = 2, 3
    obs = jax.random.normal(k_obs, (bsz, t_len, 1, IM_SIZE, IM_SIZE), jnp.float32)
    mask = (jax.random.uniform(k_mask, (bsz, t_len, 1)) > 0.5).astype(jnp.float32)

    params = prepare_params(init_params(k_p))
    fwd = jax.jit(rnn_forward)
    out = fwd(params, obs, mask)
    out = jax.block_until_ready(out)

    assert out.shape == (bsz, t_len, 1, IM_SIZE, IM_SIZE), out.shape
    assert bool(jnp.all(jnp.isfinite(out)))
    assert bool(jnp.all((out >= 0.0) & (out <= 1.0)))  # sigmoid output range
    print("KERNEL_OK")
</pallas_src>

<mosaic_0001>
module attributes {stable_mosaic.version = 11 : i64} {
  func.func @_conv_stage_kernel(%arg0: i32, %arg1: memref<1x9x484xf32, #tpu.memory_space<vmem>>, %arg2: memref<16x9xf32, #tpu.memory_space<vmem>>, %arg3: memref<16x1xf32, #tpu.memory_space<vmem>>, %arg4: memref<16x484xf32, #tpu.memory_space<vmem>>, %arg5: memref<16x484xf32, #tpu.memory_space<vmem>>, %arg6: memref<1x16x484xf32, #tpu.memory_space<vmem>>) attributes {dimension_semantics = [#tpu.dimension_semantics<parallel>], iteration_bounds = array<i64: 6>, scalar_prefetch = 0 : i64, scratch_operands = 0 : i64, tpu.core_type = #tpu.core_type<tc>, window_params = [{transform_indices = @transform_0, window_bounds = array<i64: 1, 9, 484>}, {pipeline_mode = #tpu.pipeline_mode<synchronous>, transform_indices = @transform_1, window_bounds = array<i64: 16, 9>}, {pipeline_mode = #tpu.pipeline_mode<synchronous>, transform_indices = @transform_2, window_bounds = array<i64: 16, 1>}, {pipeline_mode = #tpu.pipeline_mode<synchronous>, transform_indices = @transform_3, window_bounds = array<i64: 16, 484>}, {pipeline_mode = #tpu.pipeline_mode<synchronous>, transform_indices = @transform_4, window_bounds = array<i64: 16, 484>}, {transform_indices = @transform_5, window_bounds = array<i64: 1, 16, 484>}]} {
    %c0 = arith.constant 0 : index
    %c0_0 = arith.constant 0 : index
    %0 = vector.load %arg2[%c0, %c0_0] : memref<16x9xf32, #tpu.memory_space<vmem>>, vector<16x9xf32>
    %c0_1 = arith.constant 0 : index
    %c0_2 = arith.constant 0 : index
    %c0_3 = arith.constant 0 : index
    %1 = vector.load %arg1[%c0_1, %c0_2, %c0_3] : memref<1x9x484xf32, #tpu.memory_space<vmem>>, vector<1x9x484xf32>
    %2 = vector.shape_cast %1 : vector<1x9x484xf32> to vector<9x484xf32>
    %cst = arith.constant dense<0.000000e+00> : vector<16x484xf32>
    %3 = tpu.matmul %0, %2, %cst {dimension_numbers = #tpu.dot_dimension_numbers<[1], [0], [0], [1], [0, 0, 1, 1], [], []>} : vector<16x9xf32>, vector<9x484xf32>, vector<16x484xf32> -> vector<16x484xf32>
    %c0_4 = arith.constant 0 : index
    %c0_5 = arith.constant 0 : index
    %4 = vector.load %arg3[%c0_4, %c0_5] : memref<16x1xf32, #tpu.memory_space<vmem>>, vector<16x1xf32>
    %5 = vector.broadcast %4 : vector<16x1xf32> to vector<16x484xf32>
    %6 = arith.addf %3, %5 : vector<16x484xf32>
    %cst_6 = arith.constant dense<0.000000e+00> : vector<16xf32>
    %7 = vector.multi_reduction <add>, %6, %cst_6 [1] : vector<16x484xf32> to vector<16xf32>
    %8 = vector.shape_cast %7 : vector<16xf32> to vector<16x1xf32>
    %cst_7 = arith.constant 4.840000e+02 : f32
    %9 = vector.broadcast %cst_7 : f32 to vector<16x1xf32>
    %10 = arith.divf %8, %9 : vector<16x1xf32>
    %cst_8 = arith.constant dense<0.000000e+00> : vector<1xf32>
    %11 = vector.multi_reduction <add>, %10, %cst_8 [0] : vector<16x1xf32> to vector<1xf32>
    %12 = vector.shape_cast %11 : vector<1xf32> to vector<1x1xf32>
    %cst_9 = arith.constant 1.600000e+01 : f32
    %13 = vector.broadcast %cst_9 : f32 to vector<1x1xf32>
    %14 = arith.divf %12, %13 : vector<1x1xf32>
    %15 = vector.broadcast %14 : vector<1x1xf32> to vector<16x484xf32>
    %16 = arith.subf %6, %15 : vector<16x484xf32>
    %17 = arith.mulf %16, %16 : vector<16x484xf32>
    %cst_10 = arith.constant dense<0.000000e+00> : vector<16xf32>
    %18 = vector.multi_reduction <add>, %17, %cst_10 [1] : vector<16x484xf32> to vector<16xf32>
    %19 = vector.shape_cast %18 : vector<16xf32> to vector<16x1xf32>
    %cst_11 = arith.constant 4.840000e+02 : f32
    %20 = vector.broadcast %cst_11 : f32 to vector<16x1xf32>
    %21 = arith.divf %19, %20 : vector<16x1xf32>
    %cst_12 = arith.constant dense<0.000000e+00> : vector<1xf32>
    %22 = vector.multi_reduction <add>, %21, %cst_12 [0] : vector<16x1xf32> to vector<1xf32>
    %23 = vector.shape_cast %22 : vector<1xf32> to vector<1x1xf32>
    %cst_13 = arith.constant 1.600000e+01 : f32
    %24 = vector.broadcast %cst_13 : f32 to vector<1x1xf32>
    %25 = arith.divf %23, %24 : vector<1x1xf32>
    %cst_14 = arith.constant 9.99999974E-6 : f32
    %26 = vector.broadcast %cst_14 : f32 to vector<1x1xf32>
    %27 = arith.addf %25, %26 : vector<1x1xf32>
    %28 = math.rsqrt %27 : vector<1x1xf32>
    %29 = vector.broadcast %28 : vector<1x1xf32> to vector<16x484xf32>
    %30 = arith.mulf %16, %29 : vector<16x484xf32>
    %c0_15 = arith.constant 0 : index
    %c0_16 = arith.constant 0 : index
    %31 = vector.load %arg4[%c0_15, %c0_16] : memref<16x484xf32, #tpu.memory_space<vmem>>, vector<16x484xf32>
    %32 = arith.mulf %30, %31 : vector<16x484xf32>
    %c0_17 = arith.constant 0 : index
    %c0_18 = arith.constant 0 : index
    %33 = vector.load %arg5[%c0_17, %c0_18] : memref<16x484xf32, #tpu.memory_space<vmem>>, vector<16x484xf32>
    %34 = arith.addf %32, %33 : vector<16x484xf32>
    %cst_19 = arith.constant 0.000000e+00 : f32
    %35 = vector.broadcast %cst_19 : f32 to vector<16x484xf32>
    %36 = arith.maximumf %34, %35 : vector<16x484xf32>
    %c0_20 = arith.constant 0 : index
    %c0_21 = arith.constant 0 : index
    %c0_22 = arith.constant 0 : index
    %37 = vector.load %arg6[%c0_20, %c0_21, %c0_22] : memref<1x16x484xf32, #tpu.memory_space<vmem>>, vector<1x16x484xf32>
    %38 = vector.shape_cast %37 : vector<1x16x484xf32> to vector<16x484xf32>
    %39 = vector.shape_cast %36 : vector<16x484xf32> to vector<1x16x484xf32>
    tpu.vector_store %arg6[%c0_20, %c0_21, %c0_22], %39 {strides = array<i32>} : memref<1x16x484xf32, #tpu.memory_space<vmem>>, vector<1x16x484xf32>,
    return
  }
  func.func @transform_0(%arg0: i32) -> (i32, i32, i32) {
    %c0_i32 = arith.constant 0 : i32
    %c0_i32_0 = arith.constant 0 : i32
    %c0_i32_1 = arith.constant 0 : i32
    return %arg0, %c0_i32, %c0_i32_0 : i32, i32, i32
  }
  func.func @transform_1(%arg0: i32) -> (i32, i32) {
    %c0_i32 = arith.constant 0 : i32
    %c0_i32_0 = arith.constant 0 : i32
    %c0_i32_1 = arith.constant 0 : i32
    return %c0_i32, %c0_i32_0 : i32, i32
  }
  func.func @transform_2(%arg0: i32) -> (i32, i32) {
    %c0_i32 = arith.constant 0 : i32
    %c0_i32_0 = arith.constant 0 : i32
    %c0_i32_1 = arith.constant 0 : i32
    return %c0_i32, %c0_i32_0 : i32, i32
  }
  func.func @transform_3(%arg0: i32) -> (i32, i32) {
    %c0_i32 = arith.constant 0 : i32
    %c0_i32_0 = arith.constant 0 : i32
    %c0_i32_1 = arith.constant 0 : i32
    return %c0_i32, %c0_i32_0 : i32, i32
  }
  func.func @transform_4(%arg0: i32) -> (i32, i32) {
    %c0_i32 = arith.constant 0 : i32
    %c0_i32_0 = arith.constant 0 : i32
    %c0_i32_1 = arith.constant 0 : i32
    return %c0_i32, %c0_i32_0 : i32, i32
  }
  func.func @transform_5(%arg0: i32) -> (i32, i32, i32) {
    %c0_i32 = arith.constant 0 : i32
    %c0_i32_0 = arith.constant 0 : i32
    %c0_i32_1 = arith.constant 0 : i32
    return %arg0, %c0_i32, %c0_i32_0 : i32, i32, i32
  }
}

module attributes {stable_mosaic.version = 11 : i64} {
  func.func @_conv_stage_kernel(%arg0: i32, %arg1: memref<1x144x81xf32, #tpu.memory_space<vmem>>, %arg2: memref<16x144xf32, #tpu.memory_space<vmem>>, %arg3: memref<16x1xf32, #tpu.memory_space<vmem>>, %arg4: memref<16x81xf32, #tpu.memory_space<vmem>>, %arg5: memref<16x81xf32, #tpu.memory_space<vmem>>, %arg6: memref<1x16x81xf32, #tpu.memory_space<vmem>>) attributes {dimension_semantics = [#tpu.dimension_semantics<parallel>], iteration_bounds = array<i64: 6>, scalar_prefetch = 0 : i64, scratch_operands = 0 : i64, tpu.core_type = #tpu.core_type<tc>, window_params = [{transform_indices = @transform_0, window_bounds = array<i64: 1, 144, 81>}, {pipeline_mode = #tpu.pipeline_mode<synchronous>, transform_indices = @transform_1, window_bounds = array<i64: 16, 144>}, {pipeline_mode = #tpu.pipeline_mode<synchronous>, transform_indices = @transform_2, window_bounds = array<i64: 16, 1>}, {pipeline_mode = #tpu.pipeline_mode<synchronous>, transform_indices = @transform_3, window_bounds = array<i64: 16, 81>}, {pipeline_mode = #tpu.pipeline_mode<synchronous>, transform_indices = @transform_4, window_bounds = array<i64: 16, 81>}, {transform_indices = @transform_5, window_bounds = array<i64: 1, 16, 81>}]} {
    %c0 = arith.constant 0 : index
    %c0_0 = arith.constant 0 : index
    %0 = vector.load %arg2[%c0, %c0_0] : memref<16x144xf32, #tpu.memory_space<vmem>>, vector<16x144xf32>
    %c0_1 = arith.constant 0 : index
    %c0_2 = arith.constant 0 : index
    %c0_3 = arith.constant 0 : index
    %1 = vector.load %arg1[%c0_1, %c0_2, %c0_3] : memref<1x144x81xf32, #tpu.memory_space<vmem>>, vector<1x144x81xf32>
    %2 = vector.shape_cast %1 : vector<1x144x81xf32> to vector<144x81xf32>
    %cst = arith.constant dense<0.000000e+00> : vector<16x81xf32>
    %3 = tpu.matmul %0, %2, %cst {dimension_numbers = #tpu.dot_dimension_numbers<[1], [0], [0], [1], [0, 0, 1, 1], [], []>} : vector<16x144xf32>, vector<144x81xf32>, vector<16x81xf32> -> vector<16x81xf32>
    %c0_4 = arith.constant 0 : index
    %c0_5 = arith.constant 0 : index
    %4 = vector.load %arg3[%c0_4, %c0_5] : memref<16x1xf32, #tpu.memory_space<vmem>>, vector<16x1xf32>
    %5 = vector.broadcast %4 : vector<16x1xf32> to vector<16x81xf32>
    %6 = arith.addf %3, %5 : vector<16x81xf32>
    %cst_6 = arith.constant dense<0.000000e+00> : vector<16xf32>
    %7 = vector.multi_reduction <add>, %6, %cst_6 [1] : vector<16x81xf32> to vector<16xf32>
    %8 = vector.shape_cast %7 : vector<16xf32> to vector<16x1xf32>
    %cst_7 = arith.constant 8.100000e+01 : f32
    %9 = vector.broadcast %cst_7 : f32 to vector<16x1xf32>
    %10 = arith.divf %8, %9 : vector<16x1xf32>
    %cst_8 = arith.constant dense<0.000000e+00> : vector<1xf32>
    %11 = vector.multi_reduction <add>, %10, %cst_8 [0] : vector<16x1xf32> to vector<1xf32>
    %12 = vector.shape_cast %11 : vector<1xf32> to vector<1x1xf32>
    %cst_9 = arith.constant 1.600000e+01 : f32
    %13 = vector.broadcast %cst_9 : f32 to vector<1x1xf32>
    %14 = arith.divf %12, %13 : vector<1x1xf32>
    %15 = vector.broadcast %14 : vector<1x1xf32> to vector<16x81xf32>
    %16 = arith.subf %6, %15 : vector<16x81xf32>
    %17 = arith.mulf %16, %16 : vector<16x81xf32>
    %cst_10 = arith.constant dense<0.000000e+00> : vector<16xf32>
    %18 = vector.multi_reduction <add>, %17, %cst_10 [1] : vector<16x81xf32> to vector<16xf32>
    %19 = vector.shape_cast %18 : vector<16xf32> to vector<16x1xf32>
    %cst_11 = arith.constant 8.100000e+01 : f32
    %20 = vector.broadcast %cst_11 : f32 to vector<16x1xf32>
    %21 = arith.divf %19, %20 : vector<16x1xf32>
    %cst_12 = arith.constant dense<0.000000e+00> : vector<1xf32>
    %22 = vector.multi_reduction <add>, %21, %cst_12 [0] : vector<16x1xf32> to vector<1xf32>
    %23 = vector.shape_cast %22 : vector<1xf32> to vector<1x1xf32>
    %cst_13 = arith.constant 1.600000e+01 : f32
    %24 = vector.broadcast %cst_13 : f32 to vector<1x1xf32>
    %25 = arith.divf %23, %24 : vector<1x1xf32>
    %cst_14 = arith.constant 9.99999974E-6 : f32
    %26 = vector.broadcast %cst_14 : f32 to vector<1x1xf32>
    %27 = arith.addf %25, %26 : vector<1x1xf32>
    %28 = math.rsqrt %27 : vector<1x1xf32>
    %29 = vector.broadcast %28 : vector<1x1xf32> to vector<16x81xf32>
    %30 = arith.mulf %16, %29 : vector<16x81xf32>
    %c0_15 = arith.constant 0 : index
    %c0_16 = arith.constant 0 : index
    %31 = vector.load %arg4[%c0_15, %c0_16] : memref<16x81xf32, #tpu.memory_space<vmem>>, vector<16x81xf32>
    %32 = arith.mulf %30, %31 : vector<16x81xf32>
    %c0_17 = arith.constant 0 : index
    %c0_18 = arith.constant 0 : index
    %33 = vector.load %arg5[%c0_17, %c0_18] : memref<16x81xf32, #tpu.memory_space<vmem>>, vector<16x81xf32>
    %34 = arith.addf %32, %33 : vector<16x81xf32>
    %cst_19 = arith.constant 0.000000e+00 : f32
    %35 = vector.broadcast %cst_19 : f32 to vector<16x81xf32>
    %36 = arith.maximumf %34, %35 : vector<16x81xf32>
    %c0_20 = arith.constant 0 : index
    %c0_21 = arith.constant 0 : index
    %c0_22 = arith.constant 0 : index
    %37 = vector.load %arg6[%c0_20, %c0_21, %c0_22] : memref<1x16x81xf32, #tpu.memory_space<vmem>>, vector<1x16x81xf32>
    %38 = vector.shape_cast %37 : vector<1x16x81xf32> to vector<16x81xf32>
    %39 = vector.shape_cast %36 : vector<16x81xf32> to vector<1x16x81xf32>
    tpu.vector_store %arg6[%c0_20, %c0_21, %c0_22], %39 {strides = array<i32>} : memref<1x16x81xf32, #tpu.memory_space<vmem>>, vector<1x16x81xf32>,
    return
  }
  func.func @transform_0(%arg0: i32) -> (i32, i32, i32) {
    %c0_i32 = arith.constant 0 : i32
    %c0_i32_0 = arith.constant 0 : i32
    %c0_i32_1 = arith.constant 0 : i32
    return %arg0, %c0_i32, %c0_i32_0 : i32, i32, i32
  }
  func.func @transform_1(%arg0: i32) -> (i32, i32) {
    %c0_i32 = arith.constant 0 : i32
    %c0_i32_0 = arith.constant 0 : i32
    %c0_i32_1 = arith.constant 0 : i32
    return %c0_i32, %c0_i32_0 : i32, i32
  }
  func.func @transform_2(%arg0: i32) -> (i32, i32) {
    %c0_i32 = arith.constant 0 : i32
    %c0_i32_0 = arith.constant 0 : i32
    %c0_i32_1 = arith.constant 0 : i32
    return %c0_i32, %c0_i32_0 : i32, i32
  }
  func.func @transform_3(%arg0: i32) -> (i32, i32) {
    %c0_i32 = arith.constant 0 : i32
    %c0_i32_0 = arith.constant 0 : i32
    %c0_i32_1 = arith.constant 0 : i32
    return %c0_i32, %c0_i32_0 : i32, i32
  }
  func.func @transform_4(%arg0: i32) -> (i32, i32) {
    %c0_i32 = arith.constant 0 : i32
    %c0_i32_0 = arith.constant 0 : i32
    %c0_i32_1 = arith.constant 0 : i32
    return %c0_i32, %c0_i32_0 : i32, i32
  }
  func.func @transform_5(%arg0: i32) -> (i32, i32, i32) {
    %c0_i32 = arith.constant 0 : i32
    %c0_i32_0 = arith.constant 0 : i32
    %c0_i32_1 = arith.constant 0 : i32
    return %arg0, %c0_i32, %c0_i32_0 : i32, i32, i32
  }
}

module attributes {stable_mosaic.version = 11 : i64} {
  func.func @_lstm_fc_kernel(%arg0: i32, %arg1: memref<6x256xf32, #tpu.memory_space<vmem>>, %arg2: memref<6x1xf32, #tpu.memory_space<vmem>>, %arg3: memref<256x128xf32, #tpu.memory_space<vmem>>, %arg4: memref<1x128xf32, #tpu.memory_space<vmem>>, %arg5: memref<1x128xf32, #tpu.memory_space<vmem>>, %arg6: memref<32x128xf32, #tpu.memory_space<vmem>>, %arg7: memref<32x288xf32, #tpu.memory_space<vmem>>, %arg8: memref<1x288xf32, #tpu.memory_space<vmem>>, %arg9: memref<6x288xf32, #tpu.memory_space<vmem>>, %arg10: memref<6x128xf32, #tpu.memory_space<vmem>>, %arg11: memref<6x32xf32, #tpu.memory_space<vmem>>) attributes {dimension_semantics = [#tpu.dimension_semantics<arbitrary>], iteration_bounds = array<i64: 1>, scalar_prefetch = 0 : i64, scratch_operands = 2 : i64, tpu.core_type = #tpu.core_type<tc>, window_params = [{pipeline_mode = #tpu.pipeline_mode<synchronous>, transform_indices = @transform_0, window_bounds = array<i64: 6, 256>}, {pipeline_mode = #tpu.pipeline_mode<synchronous>, transform_indices = @transform_1, window_bounds = array<i64: 6, 1>}, {pipeline_mode = #tpu.pipeline_mode<synchronous>, transform_indices = @transform_2, window_bounds = array<i64: 256, 128>}, {pipeline_mode = #tpu.pipeline_mode<synchronous>, transform_indices = @transform_3, window_bounds = array<i64: 1, 128>}, {pipeline_mode = #tpu.pipeline_mode<synchronous>, transform_indices = @transform_4, window_bounds = array<i64: 1, 128>}, {pipeline_mode = #tpu.pipeline_mode<synchronous>, transform_indices = @transform_5, window_bounds = array<i64: 32, 128>}, {pipeline_mode = #tpu.pipeline_mode<synchronous>, transform_indices = @transform_6, window_bounds = array<i64: 32, 288>}, {pipeline_mode = #tpu.pipeline_mode<synchronous>, transform_indices = @transform_7, window_bounds = array<i64: 1, 288>}, {pipeline_mode = #tpu.pipeline_mode<synchronous>, transform_indices = @transform_8, window_bounds = array<i64: 6, 288>}]} {
    %c0 = arith.constant 0 : index
    %c0_0 = arith.constant 0 : index
    %0 = vector.load %arg1[%c0, %c0_0] : memref<6x256xf32, #tpu.memory_space<vmem>>, vector<6x256xf32>
    %c0_1 = arith.constant 0 : index
    %c0_2 = arith.constant 0 : index
    %1 = vector.load %arg3[%c0_1, %c0_2] : memref<256x128xf32, #tpu.memory_space<vmem>>, vector<256x128xf32>
    %cst = arith.constant dense<0.000000e+00> : vector<6x128xf32>
    %2 = tpu.matmul %0, %1, %cst {dimension_numbers = #tpu.dot_dimension_numbers<[1], [0], [0], [1], [0, 0, 1, 1], [], []>} : vector<6x256xf32>, vector<256x128xf32>, vector<6x128xf32> -> vector<6x128xf32>
    %c0_3 = arith.constant 0 : index
    %c0_4 = arith.constant 0 : index
    %3 = vector.load %arg2[%c0_3, %c0_4] : memref<6x1xf32, #tpu.memory_space<vmem>>, vector<6x1xf32>
    %c0_5 = arith.constant 0 : index
    %c0_6 = arith.constant 0 : index
    %4 = vector.load %arg4[%c0_5, %c0_6] : memref<1x128xf32, #tpu.memory_space<vmem>>, vector<1x128xf32>
    %5 = vector.broadcast %3 : vector<6x1xf32> to vector<6x128xf32>
    %6 = vector.broadcast %4 : vector<1x128xf32> to vector<6x128xf32>
    %7 = arith.mulf %5, %6 : vector<6x128xf32>
    %8 = arith.addf %2, %7 : vector<6x128xf32>
    %c0_7 = arith.constant 0 : index
    %c0_8 = arith.constant 0 : index
    %9 = vector.load %arg5[%c0_7, %c0_8] : memref<1x128xf32, #tpu.memory_space<vmem>>, vector<1x128xf32>
    %10 = vector.broadcast %9 : vector<1x128xf32> to vector<6x128xf32>
    %11 = arith.addf %8, %10 : vector<6x128xf32>
    %c0_9 = arith.constant 0 : index
    %c0_10 = arith.constant 0 : index
    %12 = vector.load %arg10[%c0_9, %c0_10] : memref<6x128xf32, #tpu.memory_space<vmem>>, vector<6x128xf32>
    tpu.vector_store %arg10[%c0_9, %c0_10], %11 {strides = array<i32>} : memref<6x128xf32, #tpu.memory_space<vmem>>, vector<6x128xf32>,
    %c0_11 = arith.constant 0 : index
    %c0_12 = arith.constant 0 : index
    %13 = vector.load %arg6[%c0_11, %c0_12] : memref<32x128xf32, #tpu.memory_space<vmem>>, vector<32x128xf32>
    %cst_13 = arith.constant 0.000000e+00 : f32
    %14 = vector.broadcast %cst_13 : f32 to vector<2x32xf32>
    %c0_i32 = arith.constant 0 : i32
    %c2_i32 = arith.constant 2 : i32
    %15 = arith.muli %c0_i32, %c2_i32 : i32
    %16 = arith.index_cast %15 : i32 to index
    %c0_14 = arith.constant 0 : index
    %17 = vector.load %arg10[%16, %c0_14] : memref<6x128xf32, #tpu.memory_space<vmem>>, vector<2x128xf32>
    %cst_15 = arith.constant dense<0.000000e+00> : vector<2x128xf32>
    %18 = tpu.matmul %14, %13, %cst_15 {dimension_numbers = #tpu.dot_dimension_numbers<[1], [0], [0], [1], [0, 0, 1, 1], [], []>} : vector<2x32xf32>, vector<32x128xf32>, vector<2x128xf32> -> vector<2x128xf32>
    %19 = arith.addf %17, %18 : vector<2x128xf32>
    %20 = arith.negf %19 : vector<2x128xf32>
    %21 = math.exp %20 : vector<2x128xf32>
    %cst_16 = arith.constant 1.000000e+00 : f32
    %22 = vector.broadcast %cst_16 : f32 to vector<2x128xf32>
    %23 = arith.addf %22, %21 : vector<2x128xf32>
    %24 = arith.divf %22, %23 : vector<2x128xf32>
    %25 = vector.extract_strided_slice %24 {offsets = [0, 0], sizes = [2, 32], strides = [1, 1]} : vector<2x128xf32> to vector<2x32xf32>
    %26 = vector.extract_strided_slice %24 {offsets = [0, 32], sizes = [2, 32], strides = [1, 1]} : vector<2x128xf32> to vector<2x32xf32>
    %27 = vector.extract_strided_slice %24 {offsets = [0, 96], sizes = [2, 32], strides = [1, 1]} : vector<2x128xf32> to vector<2x32xf32>
    %28 = vector.extract_strided_slice %19 {offsets = [0, 64], sizes = [2, 32], strides = [1, 1]} : vector<2x128xf32> to vector<2x32xf32>
    %29 = math.tanh %28 : vector<2x32xf32>
    %30 = arith.mulf %26, %14 : vector<2x32xf32>
    %31 = arith.mulf %25, %29 : vector<2x32xf32>
    %32 = arith.addf %30, %31 : vector<2x32xf32>
    %33 = math.tanh %32 : vector<2x32xf32>
    %34 = arith.mulf %27, %33 : vector<2x32xf32>
    %c2_i32_17 = arith.constant 2 : i32
    %35 = arith.muli %c0_i32, %c2_i32_17 : i32
    %36 = arith.index_cast %35 : i32 to index
    %c0_18 = arith.constant 0 : index
    %37 = vector.load %arg11[%36, %c0_18] : memref<6x32xf32, #tpu.memory_space<vmem>>, vector<2x32xf32>
    tpu.vector_store %arg11[%36, %c0_18], %34 {strides = array<i32>} : memref<6x32xf32, #tpu.memory_space<vmem>>, vector<2x32xf32>,
    %c1_i32 = arith.constant 1 : i32
    %c2_i32_19 = arith.constant 2 : i32
    %38 = arith.muli %c1_i32, %c2_i32_19 : i32
    %39 = arith.index_cast %38 : i32 to index
    %c0_20 = arith.constant 0 : index
    %40 = vector.load %arg10[%39, %c0_20] : memref<6x128xf32, #tpu.memory_space<vmem>>, vector<2x128xf32>
    %cst_21 = arith.constant dense<0.000000e+00> : vector<2x128xf32>
    %41 = tpu.matmul %34, %13, %cst_21 {dimension_numbers = #tpu.dot_dimension_numbers<[1], [0], [0], [1], [0, 0, 1, 1], [], []>} : vector<2x32xf32>, vector<32x128xf32>, vector<2x128xf32> -> vector<2x128xf32>
    %42 = arith.addf %40, %41 : vector<2x128xf32>
    %43 = arith.negf %42 : vector<2x128xf32>
    %44 = math.exp %43 : vector<2x128xf32>
    %cst_22 = arith.constant 1.000000e+00 : f32
    %45 = vector.broadcast %cst_22 : f32 to vector<2x128xf32>
    %46 = arith.addf %45, %44 : vector<2x128xf32>
    %47 = arith.divf %45, %46 : vector<2x128xf32>
    %48 = vector.extract_strided_slice %47 {offsets = [0, 0], sizes = [2, 32], strides = [1, 1]} : vector<2x128xf32> to vector<2x32xf32>
    %49 = vector.extract_strided_slice %47 {offsets = [0, 32], sizes = [2, 32], strides = [1, 1]} : vector<2x128xf32> to vector<2x32xf32>
    %50 = vector.extract_strided_slice %47 {offsets = [0, 96], sizes = [2, 32], strides = [1, 1]} : vector<2x128xf32> to vector<2x32xf32>
    %51 = vector.extract_strided_slice %42 {offsets = [0, 64], sizes = [2, 32], strides = [1, 1]} : vector<2x128xf32> to vector<2x32xf32>
    %52 = math.tanh %51 : vector<2x32xf32>
    %53 = arith.mulf %49, %32 : vector<2x32xf32>
    %54 = arith.mulf %48, %52 : vector<2x32xf32>
    %55 = arith.addf %53, %54 : vector<2x32xf32>
    %56 = math.tanh %55 : vector<2x32xf32>
    %57 = arith.mulf %50, %56 : vector<2x32xf32>
    %c2_i32_23 = arith.constant 2 : i32
    %58 = arith.muli %c1_i32, %c2_i32_23 : i32
    %59 = arith.index_cast %58 : i32 to index
    %c0_24 = arith.constant 0 : index
    %60 = vector.load %arg11[%59, %c0_24] : memref<6x32xf32, #tpu.memory_space<vmem>>, vector<2x32xf32>
    tpu.vector_store %arg11[%59, %c0_24], %57 {strides = array<i32>} : memref<6x32xf32, #tpu.memory_space<vmem>>, vector<2x32xf32>,
    %c2_i32_25 = arith.constant 2 : i32
    %c2_i32_26 = arith.constant 2 : i32
    %61 = arith.muli %c2_i32_25, %c2_i32_26 : i32
    %62 = arith.index_cast %61 : i32 to index
    %c0_27 = arith.constant 0 : index
    %63 = vector.load %arg10[%62, %c0_27] : memref<6x128xf32, #tpu.memory_space<vmem>>, vector<2x128xf32>
    %cst_28 = arith.constant dense<0.000000e+00> : vector<2x128xf32>
    %64 = tpu.matmul %57, %13, %cst_28 {dimension_numbers = #tpu.dot_dimension_numbers<[1], [0], [0], [1], [0, 0, 1, 1], [], []>} : vector<2x32xf32>, vector<32x128xf32>, vector<2x128xf32> -> vector<2x128xf32>
    %65 = arith.addf %63, %64 : vector<2x128xf32>
    %66 = arith.negf %65 : vector<2x128xf32>
    %67 = math.exp %66 : vector<2x128xf32>
    %cst_29 = arith.constant 1.000000e+00 : f32
    %68 = vector.broadcast %cst_29 : f32 to vector<2x128xf32>
    %69 = arith.addf %68, %67 : vector<2x128xf32>
    %70 = arith.divf %68, %69 : vector<2x128xf32>
    %71 = vector.extract_strided_slice %70 {offsets = [0, 0], sizes = [2, 32], strides = [1, 1]} : vector<2x128xf32> to vector<2x32xf32>
    %72 = vector.extract_strided_slice %70 {offsets = [0, 32], sizes = [2, 32], strides = [1, 1]} : vector<2x128xf32> to vector<2x32xf32>
    %73 = vector.extract_strided_slice %70 {offsets = [0, 96], sizes = [2, 32], strides = [1, 1]} : vector<2x128xf32> to vector<2x32xf32>
    %74 = vector.extract_strided_slice %65 {offsets = [0, 64], sizes = [2, 32], strides = [1, 1]} : vector<2x128xf32> to vector<2x32xf32>
    %75 = math.tanh %74 : vector<2x32xf32>
    %76 = arith.mulf %72, %55 : vector<2x32xf32>
    %77 = arith.mulf %71, %75 : vector<2x32xf32>
    %78 = arith.addf %76, %77 : vector<2x32xf32>
    %79 = math.tanh %78 : vector<2x32xf32>
    %80 = arith.mulf %73, %79 : vector<2x32xf32>
    %c2_i32_30 = arith.constant 2 : i32
    %81 = arith.muli %c2_i32_25, %c2_i32_30 : i32
    %82 = arith.index_cast %81 : i32 to index
    %c0_31 = arith.constant 0 : index
    %83 = vector.load %arg11[%82, %c0_31] : memref<6x32xf32, #tpu.memory_space<vmem>>, vector<2x32xf32>
    tpu.vector_store %arg11[%82, %c0_31], %80 {strides = array<i32>} : memref<6x32xf32, #tpu.memory_space<vmem>>, vector<2x32xf32>,
    %c3_i32 = arith.constant 3 : i32
    %c0_32 = arith.constant 0 : index
    %c0_33 = arith.constant 0 : index
    %84 = vector.load %arg11[%c0_32, %c0_33] : memref<6x32xf32, #tpu.memory_space<vmem>>, vector<6x32xf32>
    %c0_34 = arith.constant 0 : index
    %c0_35 = arith.constant 0 : index
    %85 = vector.load %arg7[%c0_34, %c0_35] : memref<32x288xf32, #tpu.memory_space<vmem>>, vector<32x288xf32>
    %cst_36 = arith.constant dense<0.000000e+00> : vector<6x288xf32>
    %86 = tpu.matmul %84, %85, %cst_36 {dimension_numbers = #tpu.dot_dimension_numbers<[1], [0], [0], [1], [0, 0, 1, 1], [], []>} : vector<6x32xf32>, vector<32x288xf32>, vector<6x288xf32> -> vector<6x288xf32>
    %c0_37 = arith.constant 0 : index
    %c0_38 = arith.constant 0 : index
    %87 = vector.load %arg8[%c0_37, %c0_38] : memref<1x288xf32, #tpu.memory_space<vmem>>, vector<1x288xf32>
    %88 = vector.broadcast %87 : vector<1x288xf32> to vector<6x288xf32>
    %89 = arith.addf %86, %88 : vector<6x288xf32>
    %cst_39 = arith.constant 0.000000e+00 : f32
    %90 = vector.broadcast %cst_39 : f32 to vector<6x288xf32>
    %91 = arith.maximumf %89, %90 : vector<6x288xf32>
    %c0_40 = arith.constant 0 : index
    %c0_41 = arith.constant 0 : index
    %92 = vector.load %arg9[%c0_40, %c0_41] : memref<6x288xf32, #tpu.memory_space<vmem>>, vector<6x288xf32>
    tpu.vector_store %arg9[%c0_40, %c0_41], %91 {strides = array<i32>} : memref<6x288xf32, #tpu.memory_space<vmem>>, vector<6x288xf32>,
    return
  }
  func.func @transform_0(%arg0: i32) -> (i32, i32) {
    %c0_i32 = arith.constant 0 : i32
    %c0_i32_0 = arith.constant 0 : i32
    %c0_i32_1 = arith.constant 0 : i32
    return %c0_i32, %c0_i32_0 : i32, i32
  }
  func.func @transform_1(%arg0: i32) -> (i32, i32) {
    %c0_i32 = arith.constant 0 : i32
    %c0_i32_0 = arith.constant 0 : i32
    %c0_i32_1 = arith.constant 0 : i32
    return %c0_i32, %c0_i32_0 : i32, i32
  }
  func.func @transform_2(%arg0: i32) -> (i32, i32) {
    %c0_i32 = arith.constant 0 : i32
    %c0_i32_0 = arith.constant 0 : i32
    %c0_i32_1 = arith.constant 0 : i32
    return %c0_i32, %c0_i32_0 : i32, i32
  }
  func.func @transform_3(%arg0: i32) -> (i32, i32) {
    %c0_i32 = arith.constant 0 : i32
    %c0_i32_0 = arith.constant 0 : i32
    %c0_i32_1 = arith.constant 0 : i32
    return %c0_i32, %c0_i32_0 : i32, i32
  }
  func.func @transform_4(%arg0: i32) -> (i32, i32) {
    %c0_i32 = arith.constant 0 : i32
    %c0_i32_0 = arith.constant 0 : i32
    %c0_i32_1 = arith.constant 0 : i32
    return %c0_i32, %c0_i32_0 : i32, i32
  }
  func.func @transform_5(%arg0: i32) -> (i32, i32) {
    %c0_i32 = arith.constant 0 : i32
    %c0_i32_0 = arith.constant 0 : i32
    %c0_i32_1 = arith.constant 0 : i32
    return %c0_i32, %c0_i32_0 : i32, i32
  }
  func.func @transform_6(%arg0: i32) -> (i32, i32) {
    %c0_i32 = arith.constant 0 : i32
    %c0_i32_0 = arith.constant 0 : i32
    %c0_i32_1 = arith.constant 0 : i32
    return %c0_i32, %c0_i32_0 : i32, i32
  }
  func.func @transform_7(%arg0: i32) -> (i32, i32) {
    %c0_i32 = arith.constant 0 : i32
    %c0_i32_0 = arith.constant 0 : i32
    %c0_i32_1 = arith.constant 0 : i32
    return %c0_i32, %c0_i32_0 : i32, i32
  }
  func.func @transform_8(%arg0: i32) -> (i32, i32) {
    %c0_i32 = arith.constant 0 : i32
    %c0_i32_0 = arith.constant 0 : i32
    %c0_i32_1 = arith.constant 0 : i32
    return %c0_i32, %c0_i32_0 : i32, i32
  }
}

module attributes {stable_mosaic.version = 11 : i64} {
  func.func @_conv_stage_kernel(%arg0: i32, %arg1: memref<1x800x121xf32, #tpu.memory_space<vmem>>, %arg2: memref<16x800xf32, #tpu.memory_space<vmem>>, %arg3: memref<16x1xf32, #tpu.memory_space<vmem>>, %arg4: memref<16x121xf32, #tpu.memory_space<vmem>>, %arg5: memref<16x121xf32, #tpu.memory_space<vmem>>, %arg6: memref<1x16x121xf32, #tpu.memory_space<vmem>>) attributes {dimension_semantics = [#tpu.dimension_semantics<parallel>], iteration_bounds = array<i64: 6>, scalar_prefetch = 0 : i64, scratch_operands = 0 : i64, tpu.core_type = #tpu.core_type<tc>, window_params = [{transform_indices = @transform_0, window_bounds = array<i64: 1, 800, 121>}, {pipeline_mode = #tpu.pipeline_mode<synchronous>, transform_indices = @transform_1, window_bounds = array<i64: 16, 800>}, {pipeline_mode = #tpu.pipeline_mode<synchronous>, transform_indices = @transform_2, window_bounds = array<i64: 16, 1>}, {pipeline_mode = #tpu.pipeline_mode<synchronous>, transform_indices = @transform_3, window_bounds = array<i64: 16, 121>}, {pipeline_mode = #tpu.pipeline_mode<synchronous>, transform_indices = @transform_4, window_bounds = array<i64: 16, 121>}, {transform_indices = @transform_5, window_bounds = array<i64: 1, 16, 121>}]} {
    %c0 = arith.constant 0 : index
    %c0_0 = arith.constant 0 : index
    %0 = vector.load %arg2[%c0, %c0_0] : memref<16x800xf32, #tpu.memory_space<vmem>>, vector<16x800xf32>
    %c0_1 = arith.constant 0 : index
    %c0_2 = arith.constant 0 : index
    %c0_3 = arith.constant 0 : index
    %1 = vector.load %arg1[%c0_1, %c0_2, %c0_3] : memref<1x800x121xf32, #tpu.memory_space<vmem>>, vector<1x800x121xf32>
    %2 = vector.shape_cast %1 : vector<1x800x121xf32> to vector<800x121xf32>
    %cst = arith.constant dense<0.000000e+00> : vector<16x121xf32>
    %3 = tpu.matmul %0, %2, %cst {dimension_numbers = #tpu.dot_dimension_numbers<[1], [0], [0], [1], [0, 0, 1, 1], [], []>} : vector<16x800xf32>, vector<800x121xf32>, vector<16x121xf32> -> vector<16x121xf32>
    %c0_4 = arith.constant 0 : index
    %c0_5 = arith.constant 0 : index
    %4 = vector.load %arg3[%c0_4, %c0_5] : memref<16x1xf32, #tpu.memory_space<vmem>>, vector<16x1xf32>
    %5 = vector.broadcast %4 : vector<16x1xf32> to vector<16x121xf32>
    %6 = arith.addf %3, %5 : vector<16x121xf32>
    %cst_6 = arith.constant dense<0.000000e+00> : vector<16xf32>
    %7 = vector.multi_reduction <add>, %6, %cst_6 [1] : vector<16x121xf32> to vector<16xf32>
    %8 = vector.shape_cast %7 : vector<16xf32> to vector<16x1xf32>
    %cst_7 = arith.constant 1.210000e+02 : f32
    %9 = vector.broadcast %cst_7 : f32 to vector<16x1xf32>
    %10 = arith.divf %8, %9 : vector<16x1xf32>
    %cst_8 = arith.constant dense<0.000000e+00> : vector<1xf32>
    %11 = vector.multi_reduction <add>, %10, %cst_8 [0] : vector<16x1xf32> to vector<1xf32>
    %12 = vector.shape_cast %11 : vector<1xf32> to vector<1x1xf32>
    %cst_9 = arith.constant 1.600000e+01 : f32
    %13 = vector.broadcast %cst_9 : f32 to vector<1x1xf32>
    %14 = arith.divf %12, %13 : vector<1x1xf32>
    %15 = vector.broadcast %14 : vector<1x1xf32> to vector<16x121xf32>
    %16 = arith.subf %6, %15 : vector<16x121xf32>
    %17 = arith.mulf %16, %16 : vector<16x121xf32>
    %cst_10 = arith.constant dense<0.000000e+00> : vector<16xf32>
    %18 = vector.multi_reduction <add>, %17, %cst_10 [1] : vector<16x121xf32> to vector<16xf32>
    %19 = vector.shape_cast %18 : vector<16xf32> to vector<16x1xf32>
    %cst_11 = arith.constant 1.210000e+02 : f32
    %20 = vector.broadcast %cst_11 : f32 to vector<16x1xf32>
    %21 = arith.divf %19, %20 : vector<16x1xf32>
    %cst_12 = arith.constant dense<0.000000e+00> : vector<1xf32>
    %22 = vector.multi_reduction <add>, %21, %cst_12 [0] : vector<16x1xf32> to vector<1xf32>
    %23 = vector.shape_cast %22 : vector<1xf32> to vector<1x1xf32>
    %cst_13 = arith.constant 1.600000e+01 : f32
    %24 = vector.broadcast %cst_13 : f32 to vector<1x1xf32>
    %25 = arith.divf %23, %24 : vector<1x1xf32>
    %cst_14 = arith.constant 9.99999974E-6 : f32
    %26 = vector.broadcast %cst_14 : f32 to vector<1x1xf32>
    %27 = arith.addf %25, %26 : vector<1x1xf32>
    %28 = math.rsqrt %27 : vector<1x1xf32>
    %29 = vector.broadcast %28 : vector<1x1xf32> to vector<16x121xf32>
    %30 = arith.mulf %16, %29 : vector<16x121xf32>
    %c0_15 = arith.constant 0 : index
    %c0_16 = arith.constant 0 : index
    %31 = vector.load %arg4[%c0_15, %c0_16] : memref<16x121xf32, #tpu.memory_space<vmem>>, vector<16x121xf32>
    %32 = arith.mulf %30, %31 : vector<16x121xf32>
    %c0_17 = arith.constant 0 : index
    %c0_18 = arith.constant 0 : index
    %33 = vector.load %arg5[%c0_17, %c0_18] : memref<16x121xf32, #tpu.memory_space<vmem>>, vector<16x121xf32>
    %34 = arith.addf %32, %33 : vector<16x121xf32>
    %cst_19 = arith.constant 0.000000e+00 : f32
    %35 = vector.broadcast %cst_19 : f32 to vector<16x121xf32>
    %36 = arith.maximumf %34, %35 : vector<16x121xf32>
    %c0_20 = arith.constant 0 : index
    %c0_21 = arith.constant 0 : index
    %c0_22 = arith.constant 0 : index
    %37 = vector.load %arg6[%c0_20, %c0_21, %c0_22] : memref<1x16x121xf32, #tpu.memory_space<vmem>>, vector<1x16x121xf32>
    %38 = vector.shape_cast %37 : vector<1x16x121xf32> to vector<16x121xf32>
    %39 = vector.shape_cast %36 : vector<16x121xf32> to vector<1x16x121xf32>
    tpu.vector_store %arg6[%c0_20, %c0_21, %c0_22], %39 {strides = array<i32>} : memref<1x16x121xf32, #tpu.memory_space<vmem>>, vector<1x16x121xf32>,
    return
  }
  func.func @transform_0(%arg0: i32) -> (i32, i32, i32) {
    %c0_i32 = arith.constant 0 : i32
    %c0_i32_0 = arith.constant 0 : i32
    %c0_i32_1 = arith.constant 0 : i32
    return %arg0, %c0_i32, %c0_i32_0 : i32, i32, i32
  }
  func.func @transform_1(%arg0: i32) -> (i32, i32) {
    %c0_i32 = arith.constant 0 : i32
    %c0_i32_0 = arith.constant 0 : i32
    %c0_i32_1 = arith.constant 0 : i32
    return %c0_i32, %c0_i32_0 : i32, i32
  }
  func.func @transform_2(%arg0: i32) -> (i32, i32) {
    %c0_i32 = arith.constant 0 : i32
    %c0_i32_0 = arith.constant 0 : i32
    %c0_i32_1 = arith.constant 0 : i32
    return %c0_i32, %c0_i32_0 : i32, i32
  }
  func.func @transform_3(%arg0: i32) -> (i32, i32) {
    %c0_i32 = arith.constant 0 : i32
    %c0_i32_0 = arith.constant 0 : i32
    %c0_i32_1 = arith.constant 0 : i32
    return %c0_i32, %c0_i32_0 : i32, i32
  }
  func.func @transform_4(%arg0: i32) -> (i32, i32) {
    %c0_i32 = arith.constant 0 : i32
    %c0_i32_0 = arith.constant 0 : i32
    %c0_i32_1 = arith.constant 0 : i32
    return %c0_i32, %c0_i32_0 : i32, i32
  }
  func.func @transform_5(%arg0: i32) -> (i32, i32, i32) {
    %c0_i32 = arith.constant 0 : i32
    %c0_i32_0 = arith.constant 0 : i32
    %c0_i32_1 = arith.constant 0 : i32
    return %arg0, %c0_i32, %c0_i32_0 : i32, i32, i32
  }
}

module attributes {stable_mosaic.version = 11 : i64} {
  func.func @_conv_stage_kernel(%arg0: i32, %arg1: memref<1x144x529xf32, #tpu.memory_space<vmem>>, %arg2: memref<12x144xf32, #tpu.memory_space<vmem>>, %arg3: memref<12x1xf32, #tpu.memory_space<vmem>>, %arg4: memref<12x529xf32, #tpu.memory_space<vmem>>, %arg5: memref<12x529xf32, #tpu.memory_space<vmem>>, %arg6: memref<1x12x529xf32, #tpu.memory_space<vmem>>) attributes {dimension_semantics = [#tpu.dimension_semantics<parallel>], iteration_bounds = array<i64: 6>, scalar_prefetch = 0 : i64, scratch_operands = 0 : i64, tpu.core_type = #tpu.core_type<tc>, window_params = [{transform_indices = @transform_0, window_bounds = array<i64: 1, 144, 529>}, {pipeline_mode = #tpu.pipeline_mode<synchronous>, transform_indices = @transform_1, window_bounds = array<i64: 12, 144>}, {pipeline_mode = #tpu.pipeline_mode<synchronous>, transform_indices = @transform_2, window_bounds = array<i64: 12, 1>}, {pipeline_mode = #tpu.pipeline_mode<synchronous>, transform_indices = @transform_3, window_bounds = array<i64: 12, 529>}, {pipeline_mode = #tpu.pipeline_mode<synchronous>, transform_indices = @transform_4, window_bounds = array<i64: 12, 529>}, {transform_indices = @transform_5, window_bounds = array<i64: 1, 12, 529>}]} {
    %c0 = arith.constant 0 : index
    %c0_0 = arith.constant 0 : index
    %0 = vector.load %arg2[%c0, %c0_0] : memref<12x144xf32, #tpu.memory_space<vmem>>, vector<12x144xf32>
    %c0_1 = arith.constant 0 : index
    %c0_2 = arith.constant 0 : index
    %c0_3 = arith.constant 0 : index
    %1 = vector.load %arg1[%c0_1, %c0_2, %c0_3] : memref<1x144x529xf32, #tpu.memory_space<vmem>>, vector<1x144x529xf32>
    %2 = vector.shape_cast %1 : vector<1x144x529xf32> to vector<144x529xf32>
    %cst = arith.constant dense<0.000000e+00> : vector<12x529xf32>
    %3 = tpu.matmul %0, %2, %cst {dimension_numbers = #tpu.dot_dimension_numbers<[1], [0], [0], [1], [0, 0, 1, 1], [], []>} : vector<12x144xf32>, vector<144x529xf32>, vector<12x529xf32> -> vector<12x529xf32>
    %c0_4 = arith.constant 0 : index
    %c0_5 = arith.constant 0 : index
    %4 = vector.load %arg3[%c0_4, %c0_5] : memref<12x1xf32, #tpu.memory_space<vmem>>, vector<12x1xf32>
    %5 = vector.broadcast %4 : vector<12x1xf32> to vector<12x529xf32>
    %6 = arith.addf %3, %5 : vector<12x529xf32>
    %cst_6 = arith.constant dense<0.000000e+00> : vector<12xf32>
    %7 = vector.multi_reduction <add>, %6, %cst_6 [1] : vector<12x529xf32> to vector<12xf32>
    %8 = vector.shape_cast %7 : vector<12xf32> to vector<12x1xf32>
    %cst_7 = arith.constant 5.290000e+02 : f32
    %9 = vector.broadcast %cst_7 : f32 to vector<12x1xf32>
    %10 = arith.divf %8, %9 : vector<12x1xf32>
    %cst_8 = arith.constant dense<0.000000e+00> : vector<1xf32>
    %11 = vector.multi_reduction <add>, %10, %cst_8 [0] : vector<12x1xf32> to vector<1xf32>
    %12 = vector.shape_cast %11 : vector<1xf32> to vector<1x1xf32>
    %cst_9 = arith.constant 1.200000e+01 : f32
    %13 = vector.broadcast %cst_9 : f32 to vector<1x1xf32>
    %14 = arith.divf %12, %13 : vector<1x1xf32>
    %15 = vector.broadcast %14 : vector<1x1xf32> to vector<12x529xf32>
    %16 = arith.subf %6, %15 : vector<12x529xf32>
    %17 = arith.mulf %16, %16 : vector<12x529xf32>
    %cst_10 = arith.constant dense<0.000000e+00> : vector<12xf32>
    %18 = vector.multi_reduction <add>, %17, %cst_10 [1] : vector<12x529xf32> to vector<12xf32>
    %19 = vector.shape_cast %18 : vector<12xf32> to vector<12x1xf32>
    %cst_11 = arith.constant 5.290000e+02 : f32
    %20 = vector.broadcast %cst_11 : f32 to vector<12x1xf32>
    %21 = arith.divf %19, %20 : vector<12x1xf32>
    %cst_12 = arith.constant dense<0.000000e+00> : vector<1xf32>
    %22 = vector.multi_reduction <add>, %21, %cst_12 [0] : vector<12x1xf32> to vector<1xf32>
    %23 = vector.shape_cast %22 : vector<1xf32> to vector<1x1xf32>
    %cst_13 = arith.constant 1.200000e+01 : f32
    %24 = vector.broadcast %cst_13 : f32 to vector<1x1xf32>
    %25 = arith.divf %23, %24 : vector<1x1xf32>
    %cst_14 = arith.constant 9.99999974E-6 : f32
    %26 = vector.broadcast %cst_14 : f32 to vector<1x1xf32>
    %27 = arith.addf %25, %26 : vector<1x1xf32>
    %28 = math.rsqrt %27 : vector<1x1xf32>
    %29 = vector.broadcast %28 : vector<1x1xf32> to vector<12x529xf32>
    %30 = arith.mulf %16, %29 : vector<12x529xf32>
    %c0_15 = arith.constant 0 : index
    %c0_16 = arith.constant 0 : index
    %31 = vector.load %arg4[%c0_15, %c0_16] : memref<12x529xf32, #tpu.memory_space<vmem>>, vector<12x529xf32>
    %32 = arith.mulf %30, %31 : vector<12x529xf32>
    %c0_17 = arith.constant 0 : index
    %c0_18 = arith.constant 0 : index
    %33 = vector.load %arg5[%c0_17, %c0_18] : memref<12x529xf32, #tpu.memory_space<vmem>>, vector<12x529xf32>
    %34 = arith.addf %32, %33 : vector<12x529xf32>
    %cst_19 = arith.constant 0.000000e+00 : f32
    %35 = vector.broadcast %cst_19 : f32 to vector<12x529xf32>
    %36 = arith.maximumf %34, %35 : vector<12x529xf32>
    %c0_20 = arith.constant 0 : index
    %c0_21 = arith.constant 0 : index
    %c0_22 = arith.constant 0 : index
    %37 = vector.load %arg6[%c0_20, %c0_21, %c0_22] : memref<1x12x529xf32, #tpu.memory_space<vmem>>, vector<1x12x529xf32>
    %38 = vector.shape_cast %37 : vector<1x12x529xf32> to vector<12x529xf32>
    %39 = vector.shape_cast %36 : vector<12x529xf32> to vector<1x12x529xf32>
    tpu.vector_store %arg6[%c0_20, %c0_21, %c0_22], %39 {strides = array<i32>} : memref<1x12x529xf32, #tpu.memory_space<vmem>>, vector<1x12x529xf32>,
    return
  }
  func.func @transform_0(%arg0: i32) -> (i32, i32, i32) {
    %c0_i32 = arith.constant 0 : i32
    %c0_i32_0 = arith.constant 0 : i32
    %c0_i32_1 = arith.constant 0 : i32
    return %arg0, %c0_i32, %c0_i32_0 : i32, i32, i32
  }
  func.func @transform_1(%arg0: i32) -> (i32, i32) {
    %c0_i32 = arith.constant 0 : i32
    %c0_i32_0 = arith.constant 0 : i32
    %c0_i32_1 = arith.constant 0 : i32
    return %c0_i32, %c0_i32_0 : i32, i32
  }
  func.func @transform_2(%arg0: i32) -> (i32, i32) {
    %c0_i32 = arith.constant 0 : i32
    %c0_i32_0 = arith.constant 0 : i32
    %c0_i32_1 = arith.constant 0 : i32
    return %c0_i32, %c0_i32_0 : i32, i32
  }
  func.func @transform_3(%arg0: i32) -> (i32, i32) {
    %c0_i32 = arith.constant 0 : i32
    %c0_i32_0 = arith.constant 0 : i32
    %c0_i32_1 = arith.constant 0 : i32
    return %c0_i32, %c0_i32_0 : i32, i32
  }
  func.func @transform_4(%arg0: i32) -> (i32, i32) {
    %c0_i32 = arith.constant 0 : i32
    %c0_i32_0 = arith.constant 0 : i32
    %c0_i32_1 = arith.constant 0 : i32
    return %c0_i32, %c0_i32_0 : i32, i32
  }
  func.func @transform_5(%arg0: i32) -> (i32, i32, i32) {
    %c0_i32 = arith.constant 0 : i32
    %c0_i32_0 = arith.constant 0 : i32
    %c0_i32_1 = arith.constant 0 : i32
    return %arg0, %c0_i32, %c0_i32_0 : i32, i32, i32
  }
}

module attributes {stable_mosaic.version = 11 : i64} {
  func.func @_conv_stage_kernel(%arg0: i32, %arg1: memref<1x48x576xf32, #tpu.memory_space<vmem>>, %arg2: memref<1x48xf32, #tpu.memory_space<vmem>>, %arg3: memref<1x1xf32, #tpu.memory_space<vmem>>, %arg4: memref<1x1x576xf32, #tpu.memory_space<vmem>>) attributes {dimension_semantics = [#tpu.dimension_semantics<parallel>], iteration_bounds = array<i64: 6>, scalar_prefetch = 0 : i64, scratch_operands = 0 : i64, tpu.core_type = #tpu.core_type<tc>, window_params = [{transform_indices = @transform_0, window_bounds = array<i64: 1, 48, 576>}, {pipeline_mode = #tpu.pipeline_mode<synchronous>, transform_indices = @transform_1, window_bounds = array<i64: 1, 48>}, {pipeline_mode = #tpu.pipeline_mode<synchronous>, transform_indices = @transform_2, window_bounds = array<i64: 1, 1>}, {transform_indices = @transform_3, window_bounds = array<i64: 1, 1, 576>}]} {
    %c0 = arith.constant 0 : index
    %c0_0 = arith.constant 0 : index
    %0 = vector.load %arg2[%c0, %c0_0] : memref<1x48xf32, #tpu.memory_space<vmem>>, vector<1x48xf32>
    %c0_1 = arith.constant 0 : index
    %c0_2 = arith.constant 0 : index
    %c0_3 = arith.constant 0 : index
    %1 = vector.load %arg1[%c0_1, %c0_2, %c0_3] : memref<1x48x576xf32, #tpu.memory_space<vmem>>, vector<1x48x576xf32>
    %2 = vector.shape_cast %1 : vector<1x48x576xf32> to vector<48x576xf32>
    %cst = arith.constant dense<0.000000e+00> : vector<1x576xf32>
    %3 = tpu.matmul %0, %2, %cst {dimension_numbers = #tpu.dot_dimension_numbers<[1], [0], [0], [1], [0, 0, 1, 1], [], []>} : vector<1x48xf32>, vector<48x576xf32>, vector<1x576xf32> -> vector<1x576xf32>
    %c0_4 = arith.constant 0 : index
    %c0_5 = arith.constant 0 : index
    %4 = vector.load %arg3[%c0_4, %c0_5] : memref<1x1xf32, #tpu.memory_space<vmem>>, vector<1x1xf32>
    %5 = vector.broadcast %4 : vector<1x1xf32> to vector<1x576xf32>
    %6 = arith.addf %3, %5 : vector<1x576xf32>
    %7 = arith.negf %6 : vector<1x576xf32>
    %8 = math.exp %7 : vector<1x576xf32>
    %cst_6 = arith.constant 1.000000e+00 : f32
    %9 = vector.broadcast %cst_6 : f32 to vector<1x576xf32>
    %10 = arith.addf %9, %8 : vector<1x576xf32>
    %11 = arith.divf %9, %10 : vector<1x576xf32>
    %c0_7 = arith.constant 0 : index
    %c0_8 = arith.constant 0 : index
    %c0_9 = arith.constant 0 : index
    %12 = vector.load %arg4[%c0_7, %c0_8, %c0_9] : memref<1x1x576xf32, #tpu.memory_space<vmem>>, vector<1x1x576xf32>
    %13 = vector.shape_cast %12 : vector<1x1x576xf32> to vector<1x576xf32>
    %14 = vector.shape_cast %11 : vector<1x576xf32> to vector<1x1x576xf32>
    tpu.vector_store %arg4[%c0_7, %c0_8, %c0_9], %14 {strides = array<i32>} : memref<1x1x576xf32, #tpu.memory_space<vmem>>, vector<1x1x576xf32>,
    return
  }
  func.func @transform_0(%arg0: i32) -> (i32, i32, i32) {
    %c0_i32 = arith.constant 0 : i32
    %c0_i32_0 = arith.constant 0 : i32
    %c0_i32_1 = arith.constant 0 : i32
    return %arg0, %c0_i32, %c0_i32_0 : i32, i32, i32
  }
  func.func @transform_1(%arg0: i32) -> (i32, i32) {
    %c0_i32 = arith.constant 0 : i32
    %c0_i32_0 = arith.constant 0 : i32
    %c0_i32_1 = arith.constant 0 : i32
    return %c0_i32, %c0_i32_0 : i32, i32
  }
  func.func @transform_2(%arg0: i32) -> (i32, i32) {
    %c0_i32 = arith.constant 0 : i32
    %c0_i32_0 = arith.constant 0 : i32
    %c0_i32_1 = arith.constant 0 : i32
    return %c0_i32, %c0_i32_0 : i32, i32
  }
  func.func @transform_3(%arg0: i32) -> (i32, i32, i32) {
    %c0_i32 = arith.constant 0 : i32
    %c0_i32_0 = arith.constant 0 : i32
    %c0_i32_1 = arith.constant 0 : i32
    return %arg0, %c0_i32, %c0_i32_0 : i32, i32, i32
  }
}

</mosaic_0001>

<llo_original>
// kernel: rnn_forward.6
$region0: #{rnn_forward.6}
  #allocation0 [shape = 'u32[]', space=smem, size = 0x4, offset = 0x4, fixed_abs, tag = 'smem constant byte address 0x4 - core index']
  #allocation1 [shape = 'u32[144,128]{1,0:T(1,128)}', space=vmem, size = 0x12000, scoped, tag = 'internal scratch']
  %s0 = inlined_call_operand.vmem [shape: f32[6,9,484], index: 0, kind: input, shape index: {}]
  %s1 = inlined_call_operand.hbm [shape: f32[16,9], index: 1, kind: input, shape index: {}]
  %s2 = inlined_call_operand.vmem [shape: f32[16,1], index: 2, kind: input, shape index: {}]
  %s3 = inlined_call_operand.hbm [shape: f32[16,484], index: 3, kind: input, shape index: {}]
  %s4 = inlined_call_operand.hbm [shape: f32[16,484], index: 4, kind: input, shape index: {}]
  %s5 = inlined_call_operand.vmem [shape: f32[6,16,484], index: 5, kind: output, shape index: {}]
  %s6 = sld [smem:[#allocation0]]
  $region65: #{rnn_forward.6} parent=0
    _
  %s8 = ssub.s32 1, %s6
  %s9 = scalar_select 0, %s8, %s6
  $region1: #{rnn_forward.6} parent=0
    #allocation2 [shape = 'u8[8192]{0}', space=vmem, size = 0x2000, scoped, tag = 'input window, operand 1, single buffered']
    #allocation3 [shape = 's32[2]{0}', space=sflag, size = 0x8, scoped, tag = 'scoped memory for rnn_forward.6']
    #allocation4 [shape = 'u8[32768]{0}', space=vmem, size = 0x8000, scoped, tag = 'input window, operand 3, single buffered']
    #allocation5 [shape = 's32[1]{0}', space=sflag, size = 0x4, scoped, tag = 'scoped memory for rnn_forward.6']
    #allocation6 [shape = 'u8[32768]{0}', space=vmem, size = 0x8000, scoped, tag = 'input window, operand 4, single buffered']
    %10 = vsyncpa [#allocation3], 0
    %11 = vsyncpa [#allocation5], 0
    loop: start=0, step=1, limit=8
    $region2: #{rnn_forward.6} parent=1 // loop_pre_header
      _
    $region3: #{rnn_forward.6} parent=1 // loop_header
      %s13 = sphi 0, %s17
      %p14 = scmp.ge.s32.totalorder %s13, 8
      %s23 = sphi 0, %s25
      %s26 = sphi 0, %s23
      %s27 = sphi 0, %s26
      %s43 = sphi 0, %s27
      %s47 = sphi 0, %s47
      %s49 = sphi 0, %s47
      %s50 = sphi 0, %s49
      %s64 = sphi 0, %s50
      %s68 = sphi 0, %s68
      %s70 = sphi 0, %s68
      %s71 = sphi 0, %s70
      %s85 = sphi 0, %s71
      %s89 = sphi 0, %s89
      %s91 = sphi 0, %s89
      %s92 = sphi 0, %s91
      %s106 = sphi 0, %s92
      %s110 = sphi 0, %s110
      %s112 = sphi 0, %s110
      %s113 = sphi 0, %s112
      %s127 = sphi 0, %s113
      %s133 = sphi 0, %s135
      %s136 = sphi 0, %s133
      %s137 = sphi 0, %s136
      %s153 = sphi 0, %s137
    $region4: #{rnn_forward.6} parent=1 // loop_header_branch
      %16 = sbr.rel (%p14) target = $region8
    $region5: #{rnn_forward.6} parent=1 // loop_body
      %s18 = ssub.s32 %s13, 1
      %s19 = ssub.s32 %s13, 2
      %s20 = sadd.s32 %s13, 1
      %s21 = ssub.s32 %s13, %s20
      %p22 = scmp.eq.s32.totalorder %s21, 0
      %s24 = sadd.s32 %s23, 1
      %s25 = scalar_select %p22, %s23, %s24
      %p28 = pneg %p22
      %p29 = scmp.eq.s32.totalorder %s13, 5
      %p30 = por %p28, %p29
      %p31 = scmp.ne.s32.totalorder %s23, %s26
      %p32 = scmp.eq.s32.totalorder %s13, 0
      %p33 = por %p31, %p32
      %p34 = scmp.ne.s32.totalorder %s23, %s26
      %p35 = scmp.eq.s32.totalorder %s18, 5
      %p36 = por %p34, %p35
      %p37 = scmp.ne.s32.totalorder %s26, %s27
      %p38 = scmp.eq.s32.totalorder %s18, 0
      %p39 = por %p37, %p38
      %p40 = scmp.ne.s32.totalorder %s26, %s27
      %p41 = scmp.eq.s32.totalorder %s19, 5
      %p42 = por %p40, %p41
      %p44 = scmp.ne.s32.totalorder %s27, %s43
      %p45 = scmp.eq.s32.totalorder %s19, 0
      %p46 = por %p44, %p45
      %s48 = sadd.s32 %s47, 1
      %p51 = scmp.eq.s32.totalorder %s13, 5
      %p52 = scmp.ne.s32.totalorder %s47, %s49
      %p53 = scmp.eq.s32.totalorder %s13, 0
      %p54 = por %p52, %p53
      %p55 = scmp.ne.s32.totalorder %s47, %s49
      %p56 = scmp.eq.s32.totalorder %s18, 5
      %p57 = por %p55, %p56
      %p58 = scmp.ne.s32.totalorder %s49, %s50
      %p59 = scmp.eq.s32.totalorder %s18, 0
      %p60 = por %p58, %p59
      %p61 = scmp.ne.s32.totalorder %s49, %s50
      %p62 = scmp.eq.s32.totalorder %s19, 5
      %p63 = por %p61, %p62
      %p65 = scmp.ne.s32.totalorder %s50, %s64
      %p66 = scmp.eq.s32.totalorder %s19, 0
      %p67 = por %p65, %p66
      %s69 = sadd.s32 %s68, 1
      %p72 = scmp.eq.s32.totalorder %s13, 5
      %p73 = scmp.ne.s32.totalorder %s68, %s70
      %p74 = scmp.eq.s32.totalorder %s13, 0
      %p75 = por %p73, %p74
      %p76 = scmp.ne.s32.totalorder %s68, %s70
      %p77 = scmp.eq.s32.totalorder %s18, 5
      %p78 = por %p76, %p77
      %p79 = scmp.ne.s32.totalorder %s70, %s71
      %p80 = scmp.eq.s32.totalorder %s18, 0
      %p81 = por %p79, %p80
      %p82 = scmp.ne.s32.totalorder %s70, %s71
      %p83 = scmp.eq.s32.totalorder %s19, 5
      %p84 = por %p82, %p83
      %p86 = scmp.ne.s32.totalorder %s71, %s85
      %p87 = scmp.eq.s32.totalorder %s19, 0
      %p88 = por %p86, %p87
      %s90 = sadd.s32 %s89, 1
      %p93 = scmp.eq.s32.totalorder %s13, 5
      %p94 = scmp.ne.s32.totalorder %s89, %s91
      %p95 = scmp.eq.s32.totalorder %s13, 0
      %p96 = por %p94, %p95
      %p97 = scmp.ne.s32.totalorder %s89, %s91
      %p98 = scmp.eq.s32.totalorder %s18, 5
      %p99 = por %p97, %p98
      %p100 = scmp.ne.s32.totalorder %s91, %s92
      %p101 = scmp.eq.s32.totalorder %s18, 0
      %p102 = por %p100, %p101
      %p103 = scmp.ne.s32.totalorder %s91, %s92
      %p104 = scmp.eq.s32.totalorder %s19, 5
      %p105 = por %p103, %p104
      %p107 = scmp.ne.s32.totalorder %s92, %s106
      %p108 = scmp.eq.s32.totalorder %s19, 0
      %p109 = por %p107, %p108
      %s111 = sadd.s32 %s110, 1
      %p114 = scmp.eq.s32.totalorder %s13, 5
      %p115 = scmp.ne.s32.totalorder %s110, %s112
      %p116 = scmp.eq.s32.totalorder %s13, 0
      %p117 = por %p115, %p116
      %p118 = scmp.ne.s32.totalorder %s110, %s112
      %p119 = scmp.eq.s32.totalorder %s18, 5
      %p120 = por %p118, %p119
      %p121 = scmp.ne.s32.totalorder %s112, %s113
      %p122 = scmp.eq.s32.totalorder %s18, 0
      %p123 = por %p121, %p122
      %p124 = scmp.ne.s32.totalorder %s112, %s113
      %p125 = scmp.eq.s32.totalorder %s19, 5
      %p126 = por %p124, %p125
      %p128 = scmp.ne.s32.totalorder %s113, %s127
      %p129 = scmp.eq.s32.totalorder %s19, 0
      %p130 = por %p128, %p129
      %s131 = ssub.s32 %s13, %s20
      %p132 = scmp.eq.s32.totalorder %s131, 0
      %s134 = sadd.s32 %s133, 1
      %s135 = scalar_select %p132, %s133, %s134
      %p138 = pneg %p132
      %p139 = scmp.eq.s32.totalorder %s13, 5
      %p140 = por %p138, %p139
      %p141 = scmp.ne.s32.totalorder %s133, %s136
      %p142 = scmp.eq.s32.totalorder %s13, 0
      %p143 = por %p141, %p142
      %p144 = scmp.ne.s32.totalorder %s133, %s136
      %p145 = scmp.eq.s32.totalorder %s18, 5
      %p146 = por %p144, %p145
      %p147 = scmp.ne.s32.totalorder %s136, %s137
      %p148 = scmp.eq.s32.totalorder %s18, 0
      %p149 = por %p147, %p148
      %p150 = scmp.ne.s32.totalorder %s136, %s137
      %p151 = scmp.eq.s32.totalorder %s19, 5
      %p152 = por %p150, %p151
      %p154 = scmp.ne.s32.totalorder %s137, %s153
      %p155 = scmp.eq.s32.totalorder %s19, 0
      %p156 = por %p154, %p155
      %p157 = scmp.le.s32.totalorder 1, %s13
      %p158 = scmp.lt.s32.totalorder %s13, 7
      %p159 = pnand %p157, %p158
      %p160 = pneg %p159
      // Predicated region
      $region9: #{rnn_forward.6} parent=5 // pred_check
        _
      $region10: #{rnn_forward.6} parent=5 // pred_check_branch
        %162 = sbr.rel (%p159) target = $region12
      $region11: #{rnn_forward.6} parent=5 // pred_region
        %s163 = ssub.s32 %s13, 1
        // Predicated region
        $region13: #{rnn_forward.6} parent=11 // pred_check
          %p164 = pneg %p60
        $region14: #{rnn_forward.6} parent=11 // pred_check_branch
          %166 = sbr.rel (%p164) target = $region16
        $region15: #{rnn_forward.6} parent=11 // pred_region
          %s168 = ssub.s32 256, 256
          %169 = vsyncadd [#allocation3], %s168
          %s170 = sshll.u32 [#allocation2], 4
          %s171 = int_to_ptr.vmem [resolvable:$true] %s170
          %176 = dma.hbm_to_vmem [thread:$0]  %s1, 256, %s171, [#allocation3], 128, 128, 8
        $region16: #{rnn_forward.6} parent=11 // pred_fallthru
          _
        // Predicated region
        $region17: #{rnn_forward.6} parent=11 // pred_check
          %p177 = pneg %p81
        $region18: #{rnn_forward.6} parent=11 // pred_check_branch
          %179 = sbr.rel (%p177) target = $region20
        $region19: #{rnn_forward.6} parent=11 // pred_region
          _
        $region20: #{rnn_forward.6} parent=11 // pred_fallthru
          _
        // Predicated region
        $region21: #{rnn_forward.6} parent=11 // pred_check
          %p180 = pneg %p102
        $region22: #{rnn_forward.6} parent=11 // pred_check_branch
          %182 = sbr.rel (%p180) target = $region24
        $region23: #{rnn_forward.6} parent=11 // pred_region
          %s184 = ssub.s32 1024, 1024
          %185 = vsyncadd [#allocation5], %s184
          %s186 = sshll.u32 [#allocation4], 4
          %s187 = int_to_ptr.vmem [resolvable:$true] %s186
          %192 = dma.hbm_to_vmem [thread:$0]  %s3, 1024, %s187, [#allocation5], 512, 512, 32
        $region24: #{rnn_forward.6} parent=11 // pred_fallthru
          _
        // Predicated region
        $region25: #{rnn_forward.6} parent=11 // pred_check
          %p193 = pneg %p123
        $region26: #{rnn_forward.6} parent=11 // pred_check_branch
          %195 = sbr.rel (%p193) target = $region28
        $region27: #{rnn_forward.6} parent=11 // pred_region
          %s197 = ssub.s32 1024, 1024
          %198 = vsyncadd [#allocation5], %s197
          %s199 = sshll.u32 [#allocation6], 4
          %s200 = int_to_ptr.vmem [resolvable:$true] %s199
          %205 = dma.hbm_to_vmem [thread:$0]  %s4, 1024, %s200, [#allocation5], 512, 512, 32
        $region28: #{rnn_forward.6} parent=11 // pred_fallthru
          _
      $region12: #{rnn_forward.6} parent=5 // pred_fallthru
        _
      %p206 = scmp.lt.s32.totalorder %s13, 6
      // Predicated region
      $region29: #{rnn_forward.6} parent=5 // pred_check
        %p207 = pneg %p206
      $region30: #{rnn_forward.6} parent=5 // pred_check_branch
        %209 = sbr.rel (%p207) target = $region32
      $region31: #{rnn_forward.6} parent=5 // pred_region
        // Predicated region
        $region33: #{rnn_forward.6} parent=31 // pred_check
          %p210 = pneg %p33
        $region34: #{rnn_forward.6} parent=31 // pred_check_branch
          %212 = sbr.rel (%p210) target = $region36
        $region35: #{rnn_forward.6} parent=31 // pred_region
          %p213 = scmp.lt.s32.totalorder %s13, 5
          %s214 = scalar_select %p213, %s13, 5
          %s215 = smul.addr %s214, 8
          %s216 = smul.addr %s215, 8
          %s217 = scalar_lea.vmem %s0, %s216
        $region36: #{rnn_forward.6} parent=31 // pred_fallthru
          _
      $region32: #{rnn_forward.6} parent=5 // pred_fallthru
        _
      %p218 = scmp.le.s32.totalorder 1, %s13
      %p219 = scmp.lt.s32.totalorder %s13, 7
      %p220 = pnand %p218, %p219
      %p221 = pneg %p220
      // Predicated region
      $region37: #{rnn_forward.6} parent=5 // pred_check
        _
      $region38: #{rnn_forward.6} parent=5 // pred_check_branch
        %223 = sbr.rel (%p220) target = $region40
      $region39: #{rnn_forward.6} parent=5 // pred_region
        %s224 = ssub.s32 %s13, 1
        // Predicated region
        $region41: #{rnn_forward.6} parent=39 // pred_check
          %p225 = pneg %p60
        $region42: #{rnn_forward.6} parent=39 // pred_check_branch
          %227 = sbr.rel (%p225) target = $region44
        $region43: #{rnn_forward.6} parent=39 // pred_region
          %228 = dma.done [#allocation3], 256
        $region44: #{rnn_forward.6} parent=39 // pred_fallthru
          _
        // Predicated region
        $region45: #{rnn_forward.6} parent=39 // pred_check
          %p229 = pneg %p102
        $region46: #{rnn_forward.6} parent=39 // pred_check_branch
          %231 = sbr.rel (%p229) target = $region48
        $region47: #{rnn_forward.6} parent=39 // pred_region
          %232 = dma.done [#allocation5], 1024
        $region48: #{rnn_forward.6} parent=39 // pred_fallthru
          _
        // Predicated region
        $region49: #{rnn_forward.6} parent=39 // pred_check
          %p233 = pneg %p123
        $region50: #{rnn_forward.6} parent=39 // pred_check_branch
          %235 = sbr.rel (%p233) target = $region52
        $region51: #{rnn_forward.6} parent=39 // pred_region
          %236 = dma.done [#allocation5], 1024
        $region52: #{rnn_forward.6} parent=39 // pred_fallthru
          _
        %p237 = scmp.lt.s32.totalorder %s18, 5
        %s238 = scalar_select %p237, %s18, 5
        %s239 = smul.addr %s238, 8
        %s240 = smul.addr %s239, 8
        %s241 = scalar_lea.vmem %s0, %s240
        %p242 = pneg %p39
        %p243 = pneg %p36
        %p244 = pneg %p60
        %p245 = pneg %p57
        %p246 = pneg %p81
        %p247 = pneg %p78
        %p248 = pneg %p102
        %p249 = pneg %p99
        %p250 = pneg %p123
        %p251 = pneg %p120
        %p252 = pneg %p149
        %p253 = pneg %p146
        %p254 = scmp.lt.s32.totalorder %s18, 5
        %s255 = scalar_select %p254, %s18, 5
        %s256 = smul.addr %s255, 8
        %s257 = smul.addr %s256, 8
        %s258 = scalar_lea.vmem %s5, %s257
        %p259 = scmp.lt.s32.totalorder %s18, 5
        %s260 = scalar_select %p259, %s18, 5
        %s261 = smul.addr %s260, 8
        %s262 = smul.addr %s261, 8
        %s263 = scalar_lea.vmem %s0, %s262
        %p264 = scmp.lt.s32.totalorder %s18, 5
        %s265 = scalar_select %p264, %s18, 5
        %s266 = smul.addr %s265, 8
        %s267 = smul.addr %s266, 8
        %s268 = scalar_lea.vmem %s5, %s267
        %v269 = vld [vmem:[#allocation2] sm:$0xff]
        %v270 = vld [vmem:[#allocation2 + $0x8] sm:$0xff]
        %v271 = vld [vmem:[%s263] sm:$0xff]
        %v272 = vld [vmem:[%s263 + $0x8] sm:$0xff]
        %v273 = vld [vmem:[%s263 + $0x10] sm:$0xff]
        %v274 = vld [vmem:[%s263 + $0x18] sm:$0xff]
        %v275 = vld [vmem:[%s263 + $0x20] sm:$0x1]
        %v276 = vld [vmem:[%s263 + $0x28] sm:$0x1]
        %v277 = vld [vmem:[%s263 + $0x30] sm:$0x1]
        %v278 = vld [vmem:[%s263 + $0x38] sm:$0x1]
        %v279 = vld [vmem:[%s2] sm:$0xff]
        %v280 = vld [vmem:[%s2 + $0x8] sm:$0xff]
        %282 = vset.pattern.permute.xlu0 0
        %283 = vperm.xlu0 %282, %v279
        %v284 = vpop.permute.xlu0 %283
        %287 = vset.pattern.permute.xlu0 0
        %288 = vperm.xlu0 %287, %v280
        %v289 = vpop.permute.xlu0 %288
        %vm291 = vcmask 72704
        %v293 = vsel %vm291, %v269, 0
        %v296 = vsel %vm291, %v270, 0
        %vm298 = vcmask 1040384
        %v300 = vsel %vm298, %v275, 0
        %v303 = vsel %vm298, %v276, 0
        %v306 = vsel %vm298, %v277, 0
        %v309 = vsel %vm298, %v278, 0
        %311 = vmatprep.subr.mxu0 %v272
        %312 = vmatpush1.msra.mxu0 %v271
        %313 = vmatprep.subr.mxu0 %v303
        %314 = vmatpush1.msra.mxu0 %v300
        %315 = vmatprep.subr.mxu0 0.0
        %316 = vmatpush1.msra.mxu0 0.0
        %317 = vmatprep.subr.mxu0 0.0
        %318 = vmatpush1.msra.mxu0 0.0
        %319 = vmatprep.subr.mxu0 0.0
        %320 = vmatpush1.msra.mxu0 0.0
        %321 = vmatprep.subr.mxu0 0.0
        %322 = vmatpush1.msra.mxu0 0.0
        %323 = vmatprep.subr.mxu0 0.0
        %324 = vmatpush1.msra.mxu0 0.0
        %325 = vmatprep.subr.mxu0 0.0
        %326 = vmatpush1.msra.mxu0 0.0
        %327 = vmatprep.subr.mxu0 0.0
        %328 = vmatpush1.msra.mxu0 0.0
        %329 = vmatprep.subr.mxu0 0.0
        %330 = vmatpush1.msra.mxu0 0.0
        %331 = vmatprep.subr.mxu0 0.0
        %332 = vmatpush1.msra.mxu0 0.0
        %333 = vmatprep.subr.mxu0 0.0
        %334 = vmatpush1.msra.mxu0 0.0
        %335 = vmatprep.subr.mxu0 0.0
        %336 = vmatpush1.msra.mxu0 0.0
        %337 = vmatprep.subr.mxu0 0.0
        %338 = vmatpush1.msra.mxu0 0.0
        %339 = vmatprep.subr.mxu0 0.0
        %340 = vmatpush1.msra.mxu0 0.0
        %341 = vmatprep.subr.mxu0 0.0
        %342 = vmatpush1.msra.mxu0 0.0
        %343 = vmatprep.subr.mxu0 0.0
        %344 = vmatpush1.msra.mxu0 0.0
        %345 = vmatprep.subr.mxu0 0.0
        %346 = vmatpush1.msra.mxu0 0.0
        %347 = vmatprep.subr.mxu0 0.0
        %348 = vmatpush1.msra.mxu0 0.0
        %349 = vmatprep.subr.mxu0 0.0
        %350 = vmatpush1.msra.mxu0 0.0
        %351 = vmatprep.subr.mxu0 0.0
        %352 = vmatpush1.msra.mxu0 0.0
        %353 = vmatprep.subr.mxu0 0.0
        %354 = vmatpush1.msra.mxu0 0.0
        %355 = vmatprep.subr.mxu0 0.0
        %356 = vmatpush1.msra.mxu0 0.0
        %357 = vmatprep.subr.mxu0 0.0
        %358 = vmatpush1.msra.mxu0 0.0
        %359 = vmatprep.subr.mxu0 0.0
        %360 = vmatpush1.msra.mxu0 0.0
        %361 = vmatprep.subr.mxu0 0.0
        %362 = vmatpush1.msra.mxu0 0.0
        %363 = vmatprep.subr.mxu0 0.0
        %364 = vmatpush1.msra.mxu0 0.0
        %365 = vmatprep.subr.mxu0 0.0
        %366 = vmatpush1.msra.mxu0 0.0
        %367 = vmatprep.subr.mxu0 0.0
        %368 = vmatpush1.msra.mxu0 0.0
        %369 = vmatprep.subr.mxu0 0.0
        %370 = vmatpush1.msra.mxu0 0.0
        %371 = vmatprep.subr.mxu0 0.0
        %372 = vmatpush1.msra.mxu0 0.0
        %373 = vmatprep.subr.mxu0 0.0
        %374 = vmatpush1.msra.mxu0 0.0
        %375 = vmatprep.mubr.f32.mxu0 0.0
        %376 = vmatmul.mubr.f32.gmra.mrb[0].mxu0 %v293
        %v377 = vpop.f32.mrb[0].mxu0
        %v378 = vadd.f32 %v284, %v377
        %v379 = vpop.f32.mrb[0].mxu0
        %v380 = vadd.f32 %v284, %v379
        %381 = vmatprep.mubr.f32.mxu0 0.0
        %382 = vmatmul.mubr.f32.gmra.mrb[0].mxu0 %v296
        %v383 = vpop.f32.mrb[0].mxu0
        %v384 = vadd.f32 %v289, %v383
        %v385 = vpop.f32.mrb[0].mxu0
        %v386 = vadd.f32 %v289, %v385
        %387 = vdwg.mxu0
        %388 = vmatprep.subr.mxu0 %v274
        %389 = vmatpush1.msra.mxu0 %v273
        %390 = vmatprep.subr.mxu0 %v309
        %391 = vmatpush1.msra.mxu0 %v306
        %392 = vmatprep.subr.mxu0 0.0
        %393 = vmatpush1.msra.mxu0 0.0
        %394 = vmatprep.subr.mxu0 0.0
        %395 = vmatpush1.msra.mxu0 0.0
        %396 = vmatprep.subr.mxu0 0.0
        %397 = vmatpush1.msra.mxu0 0.0
        %398 = vmatprep.subr.mxu0 0.0
        %399 = vmatpush1.msra.mxu0 0.0
        %400 = vmatprep.subr.mxu0 0.0
        %401 = vmatpush1.msra.mxu0 0.0
        %402 = vmatprep.subr.mxu0 0.0
        %403 = vmatpush1.msra.mxu0 0.0
        %404 = vmatprep.subr.mxu0 0.0
        %405 = vmatpush1.msra.mxu0 0.0
        %406 = vmatprep.subr.mxu0 0.0
        %407 = vmatpush1.msra.mxu0 0.0
        %408 = vmatprep.subr.mxu0 0.0
        %409 = vmatpush1.msra.mxu0 0.0
        %410 = vmatprep.subr.mxu0 0.0
        %411 = vmatpush1.msra.mxu0 0.0
        %412 = vmatprep.subr.mxu0 0.0
        %413 = vmatpush1.msra.mxu0 0.0
        %414 = vmatprep.subr.mxu0 0.0
        %415 = vmatpush1.msra.mxu0 0.0
        %416 = vmatprep.subr.mxu0 0.0
        %417 = vmatpush1.msra.mxu0 0.0
        %418 = vmatprep.subr.mxu0 0.0
        %419 = vmatpush1.msra.mxu0 0.0
        %420 = vmatprep.subr.mxu0 0.0
        %421 = vmatpush1.msra.mxu0 0.0
        %422 = vmatprep.subr.mxu0 0.0
        %423 = vmatpush1.msra.mxu0 0.0
        %424 = vmatprep.subr.mxu0 0.0
        %425 = vmatpush1.msra.mxu0 0.0
        %426 = vmatprep.subr.mxu0 0.0
        %427 = vmatpush1.msra.mxu0 0.0
        %428 = vmatprep.subr.mxu0 0.0
        %429 = vmatpush1.msra.mxu0 0.0
        %430 = vmatprep.subr.mxu0 0.0
        %431 = vmatpush1.msra.mxu0 0.0
        %432 = vmatprep.subr.mxu0 0.0
        %433 = vmatpush1.msra.mxu0 0.0
        %434 = vmatprep.subr.mxu0 0.0
        %435 = vmatpush1.msra.mxu0 0.0
        %436 = vmatprep.subr.mxu0 0.0
        %437 = vmatpush1.msra.mxu0 0.0
        %438 = vmatprep.subr.mxu0 0.0
        %439 = vmatpush1.msra.mxu0 0.0
        %440 = vmatprep.subr.mxu0 0.0
        %441 = vmatpush1.msra.mxu0 0.0
        %442 = vmatprep.subr.mxu0 0.0
        %443 = vmatpush1.msra.mxu0 0.0
        %444 = vmatprep.subr.mxu0 0.0
        %445 = vmatpush1.msra.mxu0 0.0
        %446 = vmatprep.subr.mxu0 0.0
        %447 = vmatpush1.msra.mxu0 0.0
        %448 = vmatprep.subr.mxu0 0.0
        %449 = vmatpush1.msra.mxu0 0.0
        %450 = vmatprep.subr.mxu0 0.0
        %451 = vmatpush1.msra.mxu0 0.0
        %452 = vmatprep.mubr.f32.mxu0 0.0
        %453 = vmatmul.mubr.f32.gmra.mrb[0].mxu0 %v293
        %v454 = vpop.f32.mrb[0].mxu0
        %v455 = vadd.f32 %v284, %v454
        %v456 = vpop.f32.mrb[0].mxu0
        %v457 = vadd.f32 %v284, %v456
        %458 = vmatprep.mubr.f32.mxu0 0.0
        %459 = vmatmul.mubr.f32.gmra.mrb[0].mxu0 %v296
        %v460 = vpop.f32.mrb[0].mxu0
        %v461 = vadd.f32 %v289, %v460
        %v462 = vpop.f32.mrb[0].mxu0
        %v463 = vadd.f32 %v289, %v462
        %464 = vdwg.mxu0
        %v465 = vadd.f32 %v378, %v380
        %v466 = vadd.f32 %v465, %v455
        %vm467 = vcmask 818176
        %v468 = vsel %vm467, %v457, 0.0
        %v469 = vadd.f32 %v466, %v468
        %470 = vadd.xlane.f32.xlu0 %v469
        %v471 = vpop.xlane.xlu0 %470
        %v472 = vadd.f32 %v384, %v386
        %v473 = vadd.f32 %v472, %v461
        %v474 = vsel %vm467, %v463, 0.0
        %v475 = vadd.f32 %v473, %v474
        %476 = vadd.xlane.f32.xlu0 %v475
        %v477 = vpop.xlane.xlu0 %476
        %v478 = vrcp.pop 484.0
        %v479 = vmul.f32 %v471, %v478
        %v480 = vmul.f32 %v477, %v478
        %v481 = vadd.f32 %v479, %v480
        %v482 = vrot.slane %v481, 4
        %v483 = vadd.f32 %v481, %v482
        %v484 = vrot.slane %v483, 2
        %v485 = vadd.f32 %v483, %v484
        %v486 = vrot.slane %v485, 1
        %v487 = vadd.f32 %v485, %v486
        %v488 = vrcp.pop 16.0
        %v489 = vmul.f32 %v487, %v488
        %v490 = vsub.f32 %v378, %v489
        %v491 = vsub.f32 %v380, %v489
        %v492 = vsub.f32 %v455, %v489
        %v493 = vsub.f32 %v457, %v489
        %v494 = vsub.f32 %v384, %v489
        %v495 = vsub.f32 %v386, %v489
        %v496 = vsub.f32 %v461, %v489
        %v497 = vsub.f32 %v463, %v489
        %v498 = vmul.f32 %v490, %v490
        %v499 = vmul.f32 %v491, %v491
        %v500 = vmul.f32 %v492, %v492
        %v501 = vmul.f32 %v493, %v493
        %v502 = vmul.f32 %v494, %v494
        %v503 = vmul.f32 %v495, %v495
        %v504 = vmul.f32 %v496, %v496
        %v505 = vmul.f32 %v497, %v497
        %v506 = vadd.f32 %v498, %v499
        %v507 = vadd.f32 %v506, %v500
        %v508 = vsel %vm467, %v501, 0.0
        %v509 = vadd.f32 %v507, %v508
        %510 = vadd.xlane.f32.xlu0 %v509
        %v511 = vpop.xlane.xlu0 %510
        %v512 = vadd.f32 %v502, %v503
        %v513 = vadd.f32 %v512, %v504
        %v514 = vsel %vm467, %v505, 0.0
        %v515 = vadd.f32 %v513, %v514
        %516 = vadd.xlane.f32.xlu0 %v515
        %v517 = vpop.xlane.xlu0 %516
        %v518 = vmul.f32 %v511, %v478
        %v519 = vmul.f32 %v517, %v478
        %v520 = vadd.f32 %v518, %v519
        %v521 = vrot.slane %v520, 4
        %v522 = vadd.f32 %v520, %v521
        %v523 = vrot.slane %v522, 2
        %v524 = vadd.f32 %v522, %v523
        %v525 = vrot.slane %v524, 1
        %v526 = vadd.f32 %v524, %v525
        %v527 = vmul.f32 %v526, %v488
        %v528 = vadd.f32 %v527, 1e-05
        %v529 = vrsqrt.pop %v528
        %v530 = vmul.f32 %v490, %v529
        %v531 = vmul.f32 %v491, %v529
        %v532 = vmul.f32 %v492, %v529
        %v533 = vmul.f32 %v493, %v529
        %v534 = vmul.f32 %v494, %v529
        %v535 = vmul.f32 %v495, %v529
        %v536 = vmul.f32 %v496, %v529
        %v537 = vmul.f32 %v497, %v529
        %v538 = vld [vmem:[#allocation4] sm:$0xff]
        %v539 = vld [vmem:[#allocation4 + $0x8] sm:$0xff]
        %v540 = vld [vmem:[#allocation4 + $0x10] sm:$0xff]
        %v541 = vld [vmem:[#allocation4 + $0x18] sm:$0xff]
        %v542 = vld [vmem:[#allocation4 + $0x20] sm:$0xff]
        %v543 = vld [vmem:[#allocation4 + $0x28] sm:$0xff]
        %v544 = vld [vmem:[#allocation4 + $0x30] sm:$0xff]
        %v545 = vld [vmem:[#allocation4 + $0x38] sm:$0xff]
        %v546 = vmul.f32 %v530, %v538
        %v547 = vmul.f32 %v531, %v539
        %v548 = vmul.f32 %v532, %v540
        %v549 = vmul.f32 %v533, %v541
        %v550 = vmul.f32 %v534, %v542
        %v551 = vmul.f32 %v535, %v543
        %v552 = vmul.f32 %v536, %v544
        %v553 = vmul.f32 %v537, %v545
        %v554 = vld [vmem:[#allocation6] sm:$0xff]
        %v555 = vld [vmem:[#allocation6 + $0x8] sm:$0xff]
        %v556 = vld [vmem:[#allocation6 + $0x10] sm:$0xff]
        %v557 = vld [vmem:[#allocation6 + $0x18] sm:$0xff]
        %v558 = vld [vmem:[#allocation6 + $0x20] sm:$0xff]
        %v559 = vld [vmem:[#allocation6 + $0x28] sm:$0xff]
        %v560 = vld [vmem:[#allocation6 + $0x30] sm:$0xff]
        %v561 = vld [vmem:[#allocation6 + $0x38] sm:$0xff]
        %v562 = vadd.f32 %v546, %v554
        %v563 = vadd.f32 %v547, %v555
        %v564 = vadd.f32 %v548, %v556
        %v565 = vadd.f32 %v549, %v557
        %v566 = vadd.f32 %v550, %v558
        %v567 = vadd.f32 %v551, %v559
        %v568 = vadd.f32 %v552, %v560
        %v569 = vadd.f32 %v553, %v561
        %v570 = vmax.f32 %v562, 0.0
        %v571 = vmax.f32 %v563, 0.0
        %v572 = vmax.f32 %v564, 0.0
        %v573 = vmax.f32 %v565, 0.0
        %v574 = vmax.f32 %v566, 0.0
        %v575 = vmax.f32 %v567, 0.0
        %v576 = vmax.f32 %v568, 0.0
        %v577 = vmax.f32 %v569, 0.0
        %578 = vst [vmem:[%s268] sm:$0xff] %v570
        %579 = vst [vmem:[%s268 + $0x8] sm:$0xff] %v571
        %580 = vst [vmem:[%s268 + $0x10] sm:$0xff] %v572
        %581 = vst.msk [vmem:[%s268 + $0x18] sm:$0xff] %vm467, %v573
        %582 = vst [vmem:[%s268 + $0x20] sm:$0xff] %v574
        %583 = vst [vmem:[%s268 + $0x28] sm:$0xff] %v575
        %584 = vst [vmem:[%s268 + $0x30] sm:$0xff] %v576
        %585 = vst.msk [vmem:[%s268 + $0x38] sm:$0xff] %vm467, %v577
        %p586 = scmp.lt.s32.totalorder %s18, 5
        %s587 = scalar_select %p586, %s18, 5
        %s588 = smul.addr %s587, 8
        %s589 = smul.addr %s588, 8
        %s590 = scalar_lea.vmem %s5, %s589
        // Predicated region
        $region53: #{rnn_forward.6} parent=39 // pred_check
          %p591 = pneg %p146
        $region54: #{rnn_forward.6} parent=39 // pred_check_branch
          %593 = sbr.rel (%p591) target = $region56
        $region55: #{rnn_forward.6} parent=39 // pred_region
          _
        $region56: #{rnn_forward.6} parent=39 // pred_fallthru
          _
      $region40: #{rnn_forward.6} parent=5 // pred_fallthru
        _
      %p594 = scmp.le.s32.totalorder 2, %s13
      // Predicated region
      $region57: #{rnn_forward.6} parent=5 // pred_check
        %p595 = pneg %p594
      $region58: #{rnn_forward.6} parent=5 // pred_check_branch
        %597 = sbr.rel (%p595) target = $region60
      $region59: #{rnn_forward.6} parent=5 // pred_region
        %s598 = ssub.s32 %s13, 2
        // Predicated region
        $region61: #{rnn_forward.6} parent=59 // pred_check
          %p599 = pneg %p152
        $region62: #{rnn_forward.6} parent=59 // pred_check_branch
          %601 = sbr.rel (%p599) target = $region64
        $region63: #{rnn_forward.6} parent=59 // pred_region
          %p602 = scmp.lt.s32.totalorder %s19, 5
          %s603 = scalar_select %p602, %s19, 5
          %s604 = smul.addr %s603, 8
          %s605 = smul.addr %s604, 8
          %s606 = scalar_lea.vmem %s5, %s605
        $region64: #{rnn_forward.6} parent=59 // pred_fallthru
          _
      $region60: #{rnn_forward.6} parent=5 // pred_fallthru
        _
    $region6: #{rnn_forward.6} parent=1 // loop_footer
      %s17 = sadd.s32 1, %s13
    $region7: #{rnn_forward.6} parent=1 // loop_footer_branch
      %12 = sbr.rel target = $region3
    $region8: #{rnn_forward.6} parent=1 // loop_exit
      _
    %607 = vsyncpa [#allocation3], 1
    %s608 = scalar_lea.sflag [#allocation3], 1
    %609 = vsyncpa %s608, 1
    %610 = vsyncpa [#allocation5], 1

// kernel: rnn_forward.7
$region0: #{rnn_forward.7}
  #allocation0 [shape = 'u32[]', space=smem, size = 0x4, offset = 0x4, fixed_abs, tag = 'smem constant byte address 0x4 - core index']
  #allocation1 [shape = 'u32[144,128]{1,0:T(1,128)}', space=vmem, size = 0x12000, scoped, tag = 'internal scratch']
  %s0 = inlined_call_operand.vmem [shape: f32[6,144,81], index: 0, kind: input, shape index: {}]
  %s1 = inlined_call_operand.vmem [shape: f32[16,144], index: 1, kind: input, shape index: {}]
  %s2 = inlined_call_operand.vmem [shape: f32[16,1], index: 2, kind: input, shape index: {}]
  %s3 = inlined_call_operand.vmem [shape: f32[16,81], index: 3, kind: input, shape index: {}]
  %s4 = inlined_call_operand.vmem [shape: f32[16,81], index: 4, kind: input, shape index: {}]
  %s5 = inlined_call_operand.vmem [shape: f32[6,16,81], index: 5, kind: output, shape index: {}]
  %s6 = sld [smem:[#allocation0]]
  $region53: #{rnn_forward.7} parent=0
    _
  %s8 = ssub.s32 1, %s6
  %s9 = scalar_select 0, %s8, %s6
  loop: start=0, step=1, limit=8
  $region2: #{rnn_forward.7} parent=0 // loop_pre_header
    _
  $region3: #{rnn_forward.7} parent=0 // loop_header
    %s11 = sphi 0, %s15
    %p12 = scmp.ge.s32.totalorder %s11, 8
    %s21 = sphi 0, %s23
    %s24 = sphi 0, %s21
    %s25 = sphi 0, %s24
    %s41 = sphi 0, %s25
    %s45 = sphi 0, %s45
    %s47 = sphi 0, %s45
    %s48 = sphi 0, %s47
    %s62 = sphi 0, %s48
    %s66 = sphi 0, %s66
    %s68 = sphi 0, %s66
    %s69 = sphi 0, %s68
    %s83 = sphi 0, %s69
    %s87 = sphi 0, %s87
    %s89 = sphi 0, %s87
    %s90 = sphi 0, %s89
    %s104 = sphi 0, %s90
    %s108 = sphi 0, %s108
    %s110 = sphi 0, %s108
    %s111 = sphi 0, %s110
    %s125 = sphi 0, %s111
    %s131 = sphi 0, %s133
    %s134 = sphi 0, %s131
    %s135 = sphi 0, %s134
    %s151 = sphi 0, %s135
  $region4: #{rnn_forward.7} parent=0 // loop_header_branch
    %14 = sbr.rel (%p12) target = $region8
  $region5: #{rnn_forward.7} parent=0 // loop_body
    %s16 = ssub.s32 %s11, 1
    %s17 = ssub.s32 %s11, 2
    %s18 = sadd.s32 %s11, 1
    %s19 = ssub.s32 %s11, %s18
    %p20 = scmp.eq.s32.totalorder %s19, 0
    %s22 = sadd.s32 %s21, 1
    %s23 = scalar_select %p20, %s21, %s22
    %p26 = pneg %p20
    %p27 = scmp.eq.s32.totalorder %s11, 5
    %p28 = por %p26, %p27
    %p29 = scmp.ne.s32.totalorder %s21, %s24
    %p30 = scmp.eq.s32.totalorder %s11, 0
    %p31 = por %p29, %p30
    %p32 = scmp.ne.s32.totalorder %s21, %s24
    %p33 = scmp.eq.s32.totalorder %s16, 5
    %p34 = por %p32, %p33
    %p35 = scmp.ne.s32.totalorder %s24, %s25
    %p36 = scmp.eq.s32.totalorder %s16, 0
    %p37 = por %p35, %p36
    %p38 = scmp.ne.s32.totalorder %s24, %s25
    %p39 = scmp.eq.s32.totalorder %s17, 5
    %p40 = por %p38, %p39
    %p42 = scmp.ne.s32.totalorder %s25, %s41
    %p43 = scmp.eq.s32.totalorder %s17, 0
    %p44 = por %p42, %p43
    %s46 = sadd.s32 %s45, 1
    %p49 = scmp.eq.s32.totalorder %s11, 5
    %p50 = scmp.ne.s32.totalorder %s45, %s47
    %p51 = scmp.eq.s32.totalorder %s11, 0
    %p52 = por %p50, %p51
    %p53 = scmp.ne.s32.totalorder %s45, %s47
    %p54 = scmp.eq.s32.totalorder %s16, 5
    %p55 = por %p53, %p54
    %p56 = scmp.ne.s32.totalorder %s47, %s48
    %p57 = scmp.eq.s32.totalorder %s16, 0
    %p58 = por %p56, %p57
    %p59 = scmp.ne.s32.totalorder %s47, %s48
    %p60 = scmp.eq.s32.totalorder %s17, 5
    %p61 = por %p59, %p60
    %p63 = scmp.ne.s32.totalorder %s48, %s62
    %p64 = scmp.eq.s32.totalorder %s17, 0
    %p65 = por %p63, %p64
    %s67 = sadd.s32 %s66, 1
    %p70 = scmp.eq.s32.totalorder %s11, 5
    %p71 = scmp.ne.s32.totalorder %s66, %s68
    %p72 = scmp.eq.s32.totalorder %s11, 0
    %p73 = por %p71, %p72
    %p74 = scmp.ne.s32.totalorder %s66, %s68
    %p75 = scmp.eq.s32.totalorder %s16, 5
    %p76 = por %p74, %p75
    %p77 = scmp.ne.s32.totalorder %s68, %s69
    %p78 = scmp.eq.s32.totalorder %s16, 0
    %p79 = por %p77, %p78
    %p80 = scmp.ne.s32.totalorder %s68, %s69
    %p81 = scmp.eq.s32.totalorder %s17, 5
    %p82 = por %p80, %p81
    %p84 = scmp.ne.s32.totalorder %s69, %s83
    %p85 = scmp.eq.s32.totalorder %s17, 0
    %p86 = por %p84, %p85
    %s88 = sadd.s32 %s87, 1
    %p91 = scmp.eq.s32.totalorder %s11, 5
    %p92 = scmp.ne.s32.totalorder %s87, %s89
    %p93 = scmp.eq.s32.totalorder %s11, 0
    %p94 = por %p92, %p93
    %p95 = scmp.ne.s32.totalorder %s87, %s89
    %p96 = scmp.eq.s32.totalorder %s16, 5
    %p97 = por %p95, %p96
    %p98 = scmp.ne.s32.totalorder %s89, %s90
    %p99 = scmp.eq.s32.totalorder %s16, 0
    %p100 = por %p98, %p99
    %p101 = scmp.ne.s32.totalorder %s89, %s90
    %p102 = scmp.eq.s32.totalorder %s17, 5
    %p103 = por %p101, %p102
    %p105 = scmp.ne.s32.totalorder %s90, %s104
    %p106 = scmp.eq.s32.totalorder %s17, 0
    %p107 = por %p105, %p106
    %s109 = sadd.s32 %s108, 1
    %p112 = scmp.eq.s32.totalorder %s11, 5
    %p113 = scmp.ne.s32.totalorder %s108, %s110
    %p114 = scmp.eq.s32.totalorder %s11, 0
    %p115 = por %p113, %p114
    %p116 = scmp.ne.s32.totalorder %s108, %s110
    %p117 = scmp.eq.s32.totalorder %s16, 5
    %p118 = por %p116, %p117
    %p119 = scmp.ne.s32.totalorder %s110, %s111
    %p120 = scmp.eq.s32.totalorder %s16, 0
    %p121 = por %p119, %p120
    %p122 = scmp.ne.s32.totalorder %s110, %s111
    %p123 = scmp.eq.s32.totalorder %s17, 5
    %p124 = por %p122, %p123
    %p126 = scmp.ne.s32.totalorder %s111, %s125
    %p127 = scmp.eq.s32.totalorder %s17, 0
    %p128 = por %p126, %p127
    %s129 = ssub.s32 %s11, %s18
    %p130 = scmp.eq.s32.totalorder %s129, 0
    %s132 = sadd.s32 %s131, 1
    %s133 = scalar_select %p130, %s131, %s132
    %p136 = pneg %p130
    %p137 = scmp.eq.s32.totalorder %s11, 5
    %p138 = por %p136, %p137
    %p139 = scmp.ne.s32.totalorder %s131, %s134
    %p140 = scmp.eq.s32.totalorder %s11, 0
    %p141 = por %p139, %p140
    %p142 = scmp.ne.s32.totalorder %s131, %s134
    %p143 = scmp.eq.s32.totalorder %s16, 5
    %p144 = por %p142, %p143
    %p145 = scmp.ne.s32.totalorder %s134, %s135
    %p146 = scmp.eq.s32.totalorder %s16, 0
    %p147 = por %p145, %p146
    %p148 = scmp.ne.s32.totalorder %s134, %s135
    %p149 = scmp.eq.s32.totalorder %s17, 5
    %p150 = por %p148, %p149
    %p152 = scmp.ne.s32.totalorder %s135, %s151
    %p153 = scmp.eq.s32.totalorder %s17, 0
    %p154 = por %p152, %p153
    %p155 = scmp.le.s32.totalorder 1, %s11
    %p156 = scmp.lt.s32.totalorder %s11, 7
    %p157 = pnand %p155, %p156
    %p158 = pneg %p157
    // Predicated region
    $region9: #{rnn_forward.7} parent=5 // pred_check
      _
    $region10: #{rnn_forward.7} parent=5 // pred_check_branch
      %160 = sbr.rel (%p157) target = $region12
    $region11: #{rnn_forward.7} parent=5 // pred_region
      %s161 = ssub.s32 %s11, 1
      // Predicated region
      $region13: #{rnn_forward.7} parent=11 // pred_check
        %p162 = pneg %p58
      $region14: #{rnn_forward.7} parent=11 // pred_check_branch
        %164 = sbr.rel (%p162) target = $region16
      $region15: #{rnn_forward.7} parent=11 // pred_region
        _
      $region16: #{rnn_forward.7} parent=11 // pred_fallthru
        _
      // Predicated region
      $region17: #{rnn_forward.7} parent=11 // pred_check
        %p165 = pneg %p79
      $region18: #{rnn_forward.7} parent=11 // pred_check_branch
        %167 = sbr.rel (%p165) target = $region20
      $region19: #{rnn_forward.7} parent=11 // pred_region
        _
      $region20: #{rnn_forward.7} parent=11 // pred_fallthru
        _
      // Predicated region
      $region21: #{rnn_forward.7} parent=11 // pred_check
        %p168 = pneg %p100
      $region22: #{rnn_forward.7} parent=11 // pred_check_branch
        %170 = sbr.rel (%p168) target = $region24
      $region23: #{rnn_forward.7} parent=11 // pred_region
        _
      $region24: #{rnn_forward.7} parent=11 // pred_fallthru
        _
      // Predicated region
      $region25: #{rnn_forward.7} parent=11 // pred_check
        %p171 = pneg %p121
      $region26: #{rnn_forward.7} parent=11 // pred_check_branch
        %173 = sbr.rel (%p171) target = $region28
      $region27: #{rnn_forward.7} parent=11 // pred_region
        _
      $region28: #{rnn_forward.7} parent=11 // pred_fallthru
        _
    $region12: #{rnn_forward.7} parent=5 // pred_fallthru
      _
    %p174 = scmp.lt.s32.totalorder %s11, 6
    // Predicated region
    $region29: #{rnn_forward.7} parent=5 // pred_check
      %p175 = pneg %p174
    $region30: #{rnn_forward.7} parent=5 // pred_check_branch
      %177 = sbr.rel (%p175) target = $region32
    $region31: #{rnn_forward.7} parent=5 // pred_region
      // Predicated region
      $region33: #{rnn_forward.7} parent=31 // pred_check
        %p178 = pneg %p31
      $region34: #{rnn_forward.7} parent=31 // pred_check_branch
        %180 = sbr.rel (%p178) target = $region36
      $region35: #{rnn_forward.7} parent=31 // pred_region
        %p181 = scmp.lt.s32.totalorder %s11, 5
        %s182 = scalar_select %p181, %s11, 5
        %s183 = smul.addr %s182, 18
        %s184 = smul.addr %s183, 8
        %s185 = scalar_lea.vmem %s0, %s184
      $region36: #{rnn_forward.7} parent=31 // pred_fallthru
        _
    $region32: #{rnn_forward.7} parent=5 // pred_fallthru
      _
    %p186 = scmp.le.s32.totalorder 1, %s11
    %p187 = scmp.lt.s32.totalorder %s11, 7
    %p188 = pnand %p186, %p187
    %p189 = pneg %p188
    // Predicated region
    $region37: #{rnn_forward.7} parent=5 // pred_check
      _
    $region38: #{rnn_forward.7} parent=5 // pred_check_branch
      %191 = sbr.rel (%p188) target = $region40
    $region39: #{rnn_forward.7} parent=5 // pred_region
      %s192 = ssub.s32 %s11, 1
      %p193 = scmp.lt.s32.totalorder %s16, 5
      %s194 = scalar_select %p193, %s16, 5
      %s195 = smul.addr %s194, 18
      %s196 = smul.addr %s195, 8
      %s197 = scalar_lea.vmem %s0, %s196
      %p198 = pneg %p37
      %p199 = pneg %p34
      %p200 = pneg %p58
      %p201 = pneg %p55
      %p202 = pneg %p79
      %p203 = pneg %p76
      %p204 = pneg %p100
      %p205 = pneg %p97
      %p206 = pneg %p121
      %p207 = pneg %p118
      %p208 = pneg %p147
      %p209 = pneg %p144
      %p210 = scmp.lt.s32.totalorder %s16, 5
      %s211 = scalar_select %p210, %s16, 5
      %s212 = smul.addr %s211, 2
      %s213 = smul.addr %s212, 8
      %s214 = scalar_lea.vmem %s5, %s213
      %p215 = scmp.lt.s32.totalorder %s16, 5
      %s216 = scalar_select %p215, %s16, 5
      %s217 = smul.addr %s216, 18
      %s218 = smul.addr %s217, 8
      %s219 = scalar_lea.vmem %s0, %s218
      %p220 = scmp.lt.s32.totalorder %s16, 5
      %s221 = scalar_select %p220, %s16, 5
      %s222 = smul.addr %s221, 2
      %s223 = smul.addr %s222, 8
      %s224 = scalar_lea.vmem %s5, %s223
      %v225 = vld [vmem:[%s1] sm:$0xff]
      %v226 = vld [vmem:[%s1 + $0x8] sm:$0xff]
      %v227 = vld [vmem:[%s1 + $0x10] sm:$0xff]
      %v228 = vld [vmem:[%s1 + $0x18] sm:$0xff]
      %v229 = vld [vmem:[%s219] sm:$0xff]
      %v230 = vld [vmem:[%s219 + $0x8] sm:$0xff]
      %v231 = vld [vmem:[%s219 + $0x10] sm:$0xff]
      %v232 = vld [vmem:[%s219 + $0x18] sm:$0xff]
      %v233 = vld [vmem:[%s219 + $0x20] sm:$0xff]
      %v234 = vld [vmem:[%s219 + $0x28] sm:$0xff]
      %v235 = vld [vmem:[%s219 + $0x30] sm:$0xff]
      %v236 = vld [vmem:[%s219 + $0x38] sm:$0xff]
      %v237 = vld [vmem:[%s219 + $0x40] sm:$0xff]
      %v238 = vld [vmem:[%s219 + $0x48] sm:$0xff]
      %v239 = vld [vmem:[%s219 + $0x50] sm:$0xff]
      %v240 = vld [vmem:[%s219 + $0x58] sm:$0xff]
      %v241 = vld [vmem:[%s219 + $0x60] sm:$0xff]
      %v242 = vld [vmem:[%s219 + $0x68] sm:$0xff]
      %v243 = vld [vmem:[%s219 + $0x70] sm:$0xff]
      %v244 = vld [vmem:[%s219 + $0x78] sm:$0xff]
      %v245 = vld [vmem:[%s219 + $0x80] sm:$0xff]
      %v246 = vld [vmem:[%s219 + $0x88] sm:$0xff]
      %v247 = vld [vmem:[%s2] sm:$0xff]
      %v248 = vld [vmem:[%s2 + $0x8] sm:$0xff]
      %250 = vset.pattern.permute.xlu0 0
      %251 = vperm.xlu0 %250, %v247
      %v252 = vpop.permute.xlu0 %251
      %255 = vset.pattern.permute.xlu0 0
      %256 = vperm.xlu0 %255, %v248
      %v257 = vpop.permute.xlu0 %256
      %vm259 = vcmask 130048
      %v261 = vsel %vm259, %v226, 0
      %v264 = vsel %vm259, %v228, 0
      %266 = vmatprep.subr.mxu0 0.0
      %267 = vmatpush1.msra.mxu0 %v229
      %268 = vmatprep.subr.mxu0 0.0
      %269 = vmatpush1.msra.mxu0 %v230
      %270 = vmatprep.subr.mxu0 0.0
      %271 = vmatpush1.msra.mxu0 %v231
      %272 = vmatprep.subr.mxu0 0.0
      %273 = vmatpush1.msra.mxu0 %v232
      %274 = vmatprep.subr.mxu0 0.0
      %275 = vmatpush1.msra.mxu0 %v233
      %276 = vmatprep.subr.mxu0 0.0
      %277 = vmatpush1.msra.mxu0 %v234
      %278 = vmatprep.subr.mxu0 0.0
      %279 = vmatpush1.msra.mxu0 %v235
      %280 = vmatprep.subr.mxu0 0.0
      %281 = vmatpush1.msra.mxu0 %v236
      %282 = vmatprep.subr.mxu0 0.0
      %283 = vmatpush1.msra.mxu0 %v237
      %284 = vmatprep.subr.mxu0 0.0
      %285 = vmatpush1.msra.mxu0 %v238
      %286 = vmatprep.subr.mxu0 0.0
      %287 = vmatpush1.msra.mxu0 %v239
      %288 = vmatprep.subr.mxu0 0.0
      %289 = vmatpush1.msra.mxu0 %v240
      %290 = vmatprep.subr.mxu0 0.0
      %291 = vmatpush1.msra.mxu0 %v241
      %292 = vmatprep.subr.mxu0 0.0
      %293 = vmatpush1.msra.mxu0 %v242
      %294 = vmatprep.subr.mxu0 0.0
      %295 = vmatpush1.msra.mxu0 %v243
      %296 = vmatprep.subr.mxu0 0.0
      %297 = vmatpush1.msra.mxu0 %v244
      %298 = vmatprep.subr.mxu0 0.0
      %299 = vmatpush1.msra.mxu0 %v245
      %300 = vmatprep.subr.mxu0 0.0
      %301 = vmatpush1.msra.mxu0 %v246
      %302 = vmatprep.subr.mxu0 0.0
      %303 = vmatpush1.msra.mxu0 0.0
      %304 = vmatprep.subr.mxu0 0.0
      %305 = vmatpush1.msra.mxu0 0.0
      %306 = vmatprep.subr.mxu0 0.0
      %307 = vmatpush1.msra.mxu0 0.0
      %308 = vmatprep.subr.mxu0 0.0
      %309 = vmatpush1.msra.mxu0 0.0
      %310 = vmatprep.subr.mxu0 0.0
      %311 = vmatpush1.msra.mxu0 0.0
      %312 = vmatprep.subr.mxu0 0.0
      %313 = vmatpush1.msra.mxu0 0.0
      %314 = vmatprep.subr.mxu0 0.0
      %315 = vmatpush1.msra.mxu0 0.0
      %316 = vmatprep.subr.mxu0 0.0
      %317 = vmatpush1.msra.mxu0 0.0
      %318 = vmatprep.subr.mxu0 0.0
      %319 = vmatpush1.msra.mxu0 0.0
      %320 = vmatprep.subr.mxu0 0.0
      %321 = vmatpush1.msra.mxu0 0.0
      %322 = vmatprep.subr.mxu0 0.0
      %323 = vmatpush1.msra.mxu0 0.0
      %324 = vmatprep.subr.mxu0 0.0
      %325 = vmatpush1.msra.mxu0 0.0
      %326 = vmatprep.subr.mxu0 0.0
      %327 = vmatpush1.msra.mxu0 0.0
      %328 = vmatprep.subr.mxu0 0.0
      %329 = vmatpush1.msra.mxu0 0.0
      %330 = vmatprep.mubr.f32.mxu0 %v261
      %331 = vmatmul.mubr.f32.gmra.mrb[0].mxu0 %v225
      %v332 = vpop.f32.mrb[0].mxu0
      %v333 = vadd.f32 %v252, %v332
      %v334 = vpop.f32.mrb[0].mxu0
      %335 = vmatprep.mubr.f32.mxu0 %v264
      %336 = vmatmul.mubr.f32.gmra.mrb[0].mxu0 %v227
      %v337 = vpop.f32.mrb[0].mxu0
      %v338 = vadd.f32 %v257, %v337
      %v339 = vpop.f32.mrb[0].mxu0
      %340 = vdwg.mxu0
      %vm341 = vcmask 662528
      %v342 = vsel %vm341, %v333, 0.0
      %343 = vadd.xlane.f32.xlu0 %v342
      %v344 = vpop.xlane.xlu0 %343
      %v345 = vsel %vm341, %v338, 0.0
      %346 = vadd.xlane.f32.xlu0 %v345
      %v347 = vpop.xlane.xlu0 %346
      %v348 = vrcp.pop 81.0
      %v349 = vmul.f32 %v344, %v348
      %v350 = vmul.f32 %v347, %v348
      %v351 = vadd.f32 %v349, %v350
      %v352 = vrot.slane %v351, 4
      %v353 = vadd.f32 %v351, %v352
      %v354 = vrot.slane %v353, 2
      %v355 = vadd.f32 %v353, %v354
      %v356 = vrot.slane %v355, 1
      %v357 = vadd.f32 %v355, %v356
      %v358 = vrcp.pop 16.0
      %v359 = vmul.f32 %v357, %v358
      %v360 = vsub.f32 %v333, %v359
      %v361 = vsub.f32 %v338, %v359
      %v362 = vmul.f32 %v360, %v360
      %v363 = vmul.f32 %v361, %v361
      %v364 = vsel %vm341, %v362, 0.0
      %365 = vadd.xlane.f32.xlu0 %v364
      %v366 = vpop.xlane.xlu0 %365
      %v367 = vsel %vm341, %v363, 0.0
      %368 = vadd.xlane.f32.xlu0 %v367
      %v369 = vpop.xlane.xlu0 %368
      %v370 = vmul.f32 %v366, %v348
      %v371 = vmul.f32 %v369, %v348
      %v372 = vadd.f32 %v370, %v371
      %v373 = vrot.slane %v372, 4
      %v374 = vadd.f32 %v372, %v373
      %v375 = vrot.slane %v374, 2
      %v376 = vadd.f32 %v374, %v375
      %v377 = vrot.slane %v376, 1
      %v378 = vadd.f32 %v376, %v377
      %v379 = vmul.f32 %v378, %v358
      %v380 = vadd.f32 %v379, 1e-05
      %v381 = vrsqrt.pop %v380
      %v382 = vmul.f32 %v360, %v381
      %v383 = vmul.f32 %v361, %v381
      %v384 = vld [vmem:[%s3] sm:$0xff]
      %v385 = vld [vmem:[%s3 + $0x8] sm:$0xff]
      %v386 = vmul.f32 %v382, %v384
      %v387 = vmul.f32 %v383, %v385
      %v388 = vld [vmem:[%s4] sm:$0xff]
      %v389 = vld [vmem:[%s4 + $0x8] sm:$0xff]
      %v390 = vadd.f32 %v386, %v388
      %v391 = vadd.f32 %v387, %v389
      %v392 = vmax.f32 %v390, 0.0
      %v393 = vmax.f32 %v391, 0.0
      %394 = vst.msk [vmem:[%s224] sm:$0xff] %vm341, %v392
      %395 = vst.msk [vmem:[%s224 + $0x8] sm:$0xff] %vm341, %v393
      %p396 = scmp.lt.s32.totalorder %s16, 5
      %s397 = scalar_select %p396, %s16, 5
      %s398 = smul.addr %s397, 2
      %s399 = smul.addr %s398, 8
      %s400 = scalar_lea.vmem %s5, %s399
      // Predicated region
      $region41: #{rnn_forward.7} parent=39 // pred_check
        %p401 = pneg %p144
      $region42: #{rnn_forward.7} parent=39 // pred_check_branch
        %403 = sbr.rel (%p401) target = $region44
      $region43: #{rnn_forward.7} parent=39 // pred_region
        _
      $region44: #{rnn_forward.7} parent=39 // pred_fallthru
        _
    $region40: #{rnn_forward.7} parent=5 // pred_fallthru
      _
    %p404 = scmp.le.s32.totalorder 2, %s11
    // Predicated region
    $region45: #{rnn_forward.7} parent=5 // pred_check
      %p405 = pneg %p404
    $region46: #{rnn_forward.7} parent=5 // pred_check_branch
      %407 = sbr.rel (%p405) target = $region48
    $region47: #{rnn_forward.7} parent=5 // pred_region
      %s408 = ssub.s32 %s11, 2
      // Predicated region
      $region49: #{rnn_forward.7} parent=47 // pred_check
        %p409 = pneg %p150
      $region50: #{rnn_forward.7} parent=47 // pred_check_branch
        %411 = sbr.rel (%p409) target = $region52
      $region51: #{rnn_forward.7} parent=47 // pred_region
        %p412 = scmp.lt.s32.totalorder %s17, 5
        %s413 = scalar_select %p412, %s17, 5
        %s414 = smul.addr %s413, 2
        %s415 = smul.addr %s414, 8
        %s416 = scalar_lea.vmem %s5, %s415
      $region52: #{rnn_forward.7} parent=47 // pred_fallthru
        _
    $region48: #{rnn_forward.7} parent=5 // pred_fallthru
      _
  $region6: #{rnn_forward.7} parent=0 // loop_footer
    %s15 = sadd.s32 1, %s11
  $region7: #{rnn_forward.7} parent=0 // loop_footer_branch
    %10 = sbr.rel target = $region3
  $region8: #{rnn_forward.7} parent=0 // loop_exit
    _

// kernel: rnn_forward.8
$region0: #{rnn_forward.8}
  #allocation0 [shape = 'u32[]', space=smem, size = 0x4, offset = 0x4, fixed_abs, tag = 'smem constant byte address 0x4 - core index']
  #allocation1 [shape = 'u32[144,128]{1,0:T(1,128)}', space=vmem, size = 0x12000, scoped, tag = 'internal scratch']
  #allocation2 [shape = 'f32[6,128]{1,0:T(8,128)}', space=vmem, size = 0x1000, scoped, tag = 'scratch operand']
  #allocation3 [shape = 'f32[6,32]{1,0:T(8,128)}', space=vmem, size = 0x1000, scoped, tag = 'scratch operand']
  %s0 = inlined_call_operand.vmem [shape: f32[6,256], index: 0, kind: input, shape index: {}]
  %s1 = inlined_call_operand.vmem [shape: f32[6,1], index: 1, kind: input, shape index: {}]
  %s2 = inlined_call_operand.vmem [shape: f32[256,128], index: 2, kind: input, shape index: {}]
  %s3 = inlined_call_operand.vmem [shape: f32[1,128], index: 3, kind: input, shape index: {}]
  %s4 = inlined_call_operand.vmem [shape: f32[1,128], index: 4, kind: input, shape index: {}]
  %s5 = inlined_call_operand.vmem [shape: f32[32,128], index: 5, kind: input, shape index: {}]
  %s6 = inlined_call_operand.vmem [shape: f32[32,288], index: 6, kind: input, shape index: {}]
  %s7 = inlined_call_operand.vmem [shape: f32[1,288], index: 7, kind: input, shape index: {}]
  %s8 = inlined_call_operand.vmem [shape: f32[6,288], index: 8, kind: output, shape index: {}]
  %s9 = sld [smem:[#allocation0]]
  $region42: #{rnn_forward.8} parent=0
    _
  %s11 = ssub.s32 1, %s9
  %s12 = scalar_select 0, %s11, %s9
  // Predicated region
  $region2: #{rnn_forward.8} parent=0 // pred_check
    _
  $region3: #{rnn_forward.8} parent=0 // pred_check_branch
    %14 = sbr.rel (0) target = $region5
  $region4: #{rnn_forward.8} parent=0 // pred_region
    _
  $region5: #{rnn_forward.8} parent=0 // pred_fallthru
    _
  // Predicated region
  $region6: #{rnn_forward.8} parent=0 // pred_check
    _
  $region7: #{rnn_forward.8} parent=0 // pred_check_branch
    %16 = sbr.rel (0) target = $region9
  $region8: #{rnn_forward.8} parent=0 // pred_region
    _
  $region9: #{rnn_forward.8} parent=0 // pred_fallthru
    _
  // Predicated region
  $region10: #{rnn_forward.8} parent=0 // pred_check
    _
  $region11: #{rnn_forward.8} parent=0 // pred_check_branch
    %18 = sbr.rel (0) target = $region13
  $region12: #{rnn_forward.8} parent=0 // pred_region
    _
  $region13: #{rnn_forward.8} parent=0 // pred_fallthru
    _
  // Predicated region
  $region14: #{rnn_forward.8} parent=0 // pred_check
    _
  $region15: #{rnn_forward.8} parent=0 // pred_check_branch
    %20 = sbr.rel (0) target = $region17
  $region16: #{rnn_forward.8} parent=0 // pred_region
    _
  $region17: #{rnn_forward.8} parent=0 // pred_fallthru
    _
  // Predicated region
  $region18: #{rnn_forward.8} parent=0 // pred_check
    _
  $region19: #{rnn_forward.8} parent=0 // pred_check_branch
    %22 = sbr.rel (0) target = $region21
  $region20: #{rnn_forward.8} parent=0 // pred_region
    _
  $region21: #{rnn_forward.8} parent=0 // pred_fallthru
    _
  // Predicated region
  $region22: #{rnn_forward.8} parent=0 // pred_check
    _
  $region23: #{rnn_forward.8} parent=0 // pred_check_branch
    %24 = sbr.rel (0) target = $region25
  $region24: #{rnn_forward.8} parent=0 // pred_region
    _
  $region25: #{rnn_forward.8} parent=0 // pred_fallthru
    _
  // Predicated region
  $region26: #{rnn_forward.8} parent=0 // pred_check
    _
  $region27: #{rnn_forward.8} parent=0 // pred_check_branch
    %26 = sbr.rel (0) target = $region29
  $region28: #{rnn_forward.8} parent=0 // pred_region
    _
  $region29: #{rnn_forward.8} parent=0 // pred_fallthru
    _
  // Predicated region
  $region30: #{rnn_forward.8} parent=0 // pred_check
    _
  $region31: #{rnn_forward.8} parent=0 // pred_check_branch
    %28 = sbr.rel (0) target = $region33
  $region32: #{rnn_forward.8} parent=0 // pred_region
    _
  $region33: #{rnn_forward.8} parent=0 // pred_fallthru
    _
  %v29 = vld [vmem:[%s0] sm:$0x3f]
  %v30 = vld [vmem:[%s0 + $0x8] sm:$0x3f]
  %v31 = vld [vmem:[%s2] sm:$0xff]
  %v32 = vld [vmem:[%s2 + $0x8] sm:$0xff]
  %v33 = vld [vmem:[%s2 + $0x10] sm:$0xff]
  %v34 = vld [vmem:[%s2 + $0x18] sm:$0xff]
  %v35 = vld [vmem:[%s2 + $0x20] sm:$0xff]
  %v36 = vld [vmem:[%s2 + $0x28] sm:$0xff]
  %v37 = vld [vmem:[%s2 + $0x30] sm:$0xff]
  %v38 = vld [vmem:[%s2 + $0x38] sm:$0xff]
  %v39 = vld [vmem:[%s2 + $0x40] sm:$0xff]
  %v40 = vld [vmem:[%s2 + $0x48] sm:$0xff]
  %v41 = vld [vmem:[%s2 + $0x50] sm:$0xff]
  %v42 = vld [vmem:[%s2 + $0x58] sm:$0xff]
  %v43 = vld [vmem:[%s2 + $0x60] sm:$0xff]
  %v44 = vld [vmem:[%s2 + $0x68] sm:$0xff]
  %v45 = vld [vmem:[%s2 + $0x70] sm:$0xff]
  %v46 = vld [vmem:[%s2 + $0x78] sm:$0xff]
  %v47 = vld [vmem:[%s2 + $0x80] sm:$0xff]
  %v48 = vld [vmem:[%s2 + $0x88] sm:$0xff]
  %v49 = vld [vmem:[%s2 + $0x90] sm:$0xff]
  %v50 = vld [vmem:[%s2 + $0x98] sm:$0xff]
  %v51 = vld [vmem:[%s2 + $0xa0] sm:$0xff]
  %v52 = vld [vmem:[%s2 + $0xa8] sm:$0xff]
  %v53 = vld [vmem:[%s2 + $0xb0] sm:$0xff]
  %v54 = vld [vmem:[%s2 + $0xb8] sm:$0xff]
  %v55 = vld [vmem:[%s2 + $0xc0] sm:$0xff]
  %v56 = vld [vmem:[%s2 + $0xc8] sm:$0xff]
  %v57 = vld [vmem:[%s2 + $0xd0] sm:$0xff]
  %v58 = vld [vmem:[%s2 + $0xd8] sm:$0xff]
  %v59 = vld [vmem:[%s2 + $0xe0] sm:$0xff]
  %v60 = vld [vmem:[%s2 + $0xe8] sm:$0xff]
  %v61 = vld [vmem:[%s2 + $0xf0] sm:$0xff]
  %v62 = vld [vmem:[%s2 + $0xf8] sm:$0xff]
  %v63 = vld [vmem:[%s1] sm:$0x3f]
  %v64 = vld [vmem:[%s3] sm:$0x1]
  %66 = vset.pattern.permute.xlu0 0
  %67 = vperm.xlu0 %66, %v63
  %v68 = vpop.permute.xlu0 %67
  %v71 = vlaneseq
  %v72 = vshrl.u32 %v71, 7
  %v73 = vsub.s32 0, %v72
  %v74 = vrot.slane %v64, %v73
  %v76 = vmul.f32 %v68, %v74
  %77 = vmatprep.subr.mxu0 0.0
  %78 = vmatpush1.msra.mxu0 %v31
  %79 = vmatprep.subr.mxu0 0.0
  %80 = vmatpush1.msra.mxu0 %v32
  %81 = vmatprep.subr.mxu0 0.0
  %82 = vmatpush1.msra.mxu0 %v33
  %83 = vmatprep.subr.mxu0 0.0
  %84 = vmatpush1.msra.mxu0 %v34
  %85 = vmatprep.subr.mxu0 0.0
  %86 = vmatpush1.msra.mxu0 %v35
  %87 = vmatprep.subr.mxu0 0.0
  %88 = vmatpush1.msra.mxu0 %v36
  %89 = vmatprep.subr.mxu0 0.0
  %90 = vmatpush1.msra.mxu0 %v37
  %91 = vmatprep.subr.mxu0 0.0
  %92 = vmatpush1.msra.mxu0 %v38
  %93 = vmatprep.subr.mxu0 0.0
  %94 = vmatpush1.msra.mxu0 %v39
  %95 = vmatprep.subr.mxu0 0.0
  %96 = vmatpush1.msra.mxu0 %v40
  %97 = vmatprep.subr.mxu0 0.0
  %98 = vmatpush1.msra.mxu0 %v41
  %99 = vmatprep.subr.mxu0 0.0
  %100 = vmatpush1.msra.mxu0 %v42
  %101 = vmatprep.subr.mxu0 0.0
  %102 = vmatpush1.msra.mxu0 %v43
  %103 = vmatprep.subr.mxu0 0.0
  %104 = vmatpush1.msra.mxu0 %v44
  %105 = vmatprep.subr.mxu0 0.0
  %106 = vmatpush1.msra.mxu0 %v45
  %107 = vmatprep.subr.mxu0 0.0
  %108 = vmatpush1.msra.mxu0 %v46
  %109 = vmatprep.subr.mxu0 0.0
  %110 = vmatpush1.msra.mxu0 %v47
  %111 = vmatprep.subr.mxu0 0.0
  %112 = vmatpush1.msra.mxu0 %v48
  %113 = vmatprep.subr.mxu0 0.0
  %114 = vmatpush1.msra.mxu0 %v49
  %115 = vmatprep.subr.mxu0 0.0
  %116 = vmatpush1.msra.mxu0 %v50
  %117 = vmatprep.subr.mxu0 0.0
  %118 = vmatpush1.msra.mxu0 %v51
  %119 = vmatprep.subr.mxu0 0.0
  %120 = vmatpush1.msra.mxu0 %v52
  %121 = vmatprep.subr.mxu0 0.0
  %122 = vmatpush1.msra.mxu0 %v53
  %123 = vmatprep.subr.mxu0 0.0
  %124 = vmatpush1.msra.mxu0 %v54
  %125 = vmatprep.subr.mxu0 0.0
  %126 = vmatpush1.msra.mxu0 %v55
  %127 = vmatprep.subr.mxu0 0.0
  %128 = vmatpush1.msra.mxu0 %v56
  %129 = vmatprep.subr.mxu0 0.0
  %130 = vmatpush1.msra.mxu0 %v57
  %131 = vmatprep.subr.mxu0 0.0
  %132 = vmatpush1.msra.mxu0 %v58
  %133 = vmatprep.subr.mxu0 0.0
  %134 = vmatpush1.msra.mxu0 %v59
  %135 = vmatprep.subr.mxu0 0.0
  %136 = vmatpush1.msra.mxu0 %v60
  %137 = vmatprep.subr.mxu0 0.0
  %138 = vmatpush1.msra.mxu0 %v61
  %139 = vmatprep.subr.mxu0 0.0
  %140 = vmatpush1.msra.mxu0 %v62
  %141 = vmatprep.mubr.f32.mxu0 %v30
  %142 = vmatmul.mubr.f32.gmra.mrb[0].mxu0 %v29
  %v143 = vpop.f32.mrb[0].mxu0
  %v144 = vadd.f32 %v76, %v143
  %v145 = vpop.f32.mrb[0].mxu0
  %146 = vdwg.mxu0
  %v147 = vld [vmem:[%s4] sm:$0x1]
  %v149 = vlaneseq
  %v150 = vshrl.u32 %v149, 7
  %v151 = vsub.s32 0, %v150
  %v152 = vrot.slane %v147, %v151
  %v154 = vadd.f32 %v144, %v152
  %155 = vst [vmem:[#allocation2] sm:$0x3f] %v154
  %v156 = vld [vmem:[%s5] sm:$0xff]
  %v157 = vld [vmem:[%s5 + $0x8] sm:$0xff]
  %v158 = vld [vmem:[%s5 + $0x10] sm:$0xff]
  %v159 = vld [vmem:[%s5 + $0x18] sm:$0xff]
  %v160 = vld [vmem:[#allocation2] sm:$0x3]
  %vm161 = vcmask 261120
  %v163 = vsel %vm161, 0.0, 0
  %165 = vmatprep.subr.mxu0 0.0
  %166 = vmatpush1.msra.mxu0 %v156
  %167 = vmatprep.subr.mxu0 0.0
  %168 = vmatpush1.msra.mxu0 %v157
  %169 = vmatprep.subr.mxu0 0.0
  %170 = vmatpush1.msra.mxu0 %v158
  %171 = vmatprep.subr.mxu0 0.0
  %172 = vmatpush1.msra.mxu0 %v159
  %173 = vmatprep.subr.mxu0 0.0
  %174 = vmatpush1.msra.mxu0 0.0
  %175 = vmatprep.subr.mxu0 0.0
  %176 = vmatpush1.msra.mxu0 0.0
  %177 = vmatprep.subr.mxu0 0.0
  %178 = vmatpush1.msra.mxu0 0.0
  %179 = vmatprep.subr.mxu0 0.0
  %180 = vmatpush1.msra.mxu0 0.0
  %181 = vmatprep.subr.mxu0 0.0
  %182 = vmatpush1.msra.mxu0 0.0
  %183 = vmatprep.subr.mxu0 0.0
  %184 = vmatpush1.msra.mxu0 0.0
  %185 = vmatprep.subr.mxu0 0.0
  %186 = vmatpush1.msra.mxu0 0.0
  %187 = vmatprep.subr.mxu0 0.0
  %188 = vmatpush1.msra.mxu0 0.0
  %189 = vmatprep.subr.mxu0 0.0
  %190 = vmatpush1.msra.mxu0 0.0
  %191 = vmatprep.subr.mxu0 0.0
  %192 = vmatpush1.msra.mxu0 0.0
  %193 = vmatprep.subr.mxu0 0.0
  %194 = vmatpush1.msra.mxu0 0.0
  %195 = vmatprep.subr.mxu0 0.0
  %196 = vmatpush1.msra.mxu0 0.0
  %197 = vmatprep.subr.mxu0 0.0
  %198 = vmatpush1.msra.mxu0 0.0
  %199 = vmatprep.subr.mxu0 0.0
  %200 = vmatpush1.msra.mxu0 0.0
  %201 = vmatprep.subr.mxu0 0.0
  %202 = vmatpush1.msra.mxu0 0.0
  %203 = vmatprep.subr.mxu0 0.0
  %204 = vmatpush1.msra.mxu0 0.0
  %205 = vmatprep.subr.mxu0 0.0
  %206 = vmatpush1.msra.mxu0 0.0
  %207 = vmatprep.subr.mxu0 0.0
  %208 = vmatpush1.msra.mxu0 0.0
  %209 = vmatprep.subr.mxu0 0.0
  %210 = vmatpush1.msra.mxu0 0.0
  %211 = vmatprep.subr.mxu0 0.0
  %212 = vmatpush1.msra.mxu0 0.0
  %213 = vmatprep.subr.mxu0 0.0
  %214 = vmatpush1.msra.mxu0 0.0
  %215 = vmatprep.subr.mxu0 0.0
  %216 = vmatpush1.msra.mxu0 0.0
  %217 = vmatprep.subr.mxu0 0.0
  %218 = vmatpush1.msra.mxu0 0.0
  %219 = vmatprep.subr.mxu0 0.0
  %220 = vmatpush1.msra.mxu0 0.0
  %221 = vmatprep.subr.mxu0 0.0
  %222 = vmatpush1.msra.mxu0 0.0
  %223 = vmatprep.subr.mxu0 0.0
  %224 = vmatpush1.msra.mxu0 0.0
  %225 = vmatprep.subr.mxu0 0.0
  %226 = vmatpush1.msra.mxu0 0.0
  %227 = vmatprep.subr.mxu0 0.0
  %228 = vmatpush1.msra.mxu0 0.0
  %229 = vmatprep.mubr.f32.mxu0 0.0
  %230 = vmatmul.mubr.f32.gmra.mrb[0].mxu0 %v163
  %v231 = vpop.f32.mrb[0].mxu0
  %v232 = vadd.f32 0.0, %v231
  %v233 = vpop.f32.mrb[0].mxu0
  %234 = vdwg.mxu0
  %v235 = vadd.f32 %v160, %v232
  %v236 = vxor.u32 %v235, 2147483648
  %v237 = vmul.f32 %v236, 1.442695
  %v238 = vpow.pop %v237
  %v239 = vadd.f32 %v238, 1.0
  %v240 = vrcp.pop %v239
  %v241 = vmul.f32 1.0, %v240
  %v242 = vtanh.pop %v235
  %v243 = vmul.f32 %v241, 0.0
  %245 = vrot.lane.b32.xlu0 %v242, 64
  %v246 = vpop.permute.xlu0 %245
  %v248 = vmul.f32 %v241, %v246
  %250 = vrot.lane.b32.xlu0 %v248, 32
  %v251 = vpop.permute.xlu0 %250
  %v253 = vadd.f32 %v243, %v251
  %v254 = vtanh.pop %v253
  %256 = vrot.lane.b32.xlu0 %v254, 64
  %v257 = vpop.permute.xlu0 %256
  %v259 = vmul.f32 %v241, %v257
  %261 = vrot.lane.b32.xlu0 %v259, 32
  %v262 = vpop.permute.xlu0 %261
  %vm264 = vcmask 254976
  %265 = vst.msk [vmem:[#allocation3] sm:$0x3] %vm264, %v262
  %v266 = vld [vmem:[#allocation2 + $0x2] sm:$0x3]
  %v267 = vsel %vm161, %v262, 0
  %269 = vmatprep.subr.mxu0 0.0
  %270 = vmatpush1.msra.mxu0 %v156
  %271 = vmatprep.subr.mxu0 0.0
  %272 = vmatpush1.msra.mxu0 %v157
  %273 = vmatprep.subr.mxu0 0.0
  %274 = vmatpush1.msra.mxu0 %v158
  %275 = vmatprep.subr.mxu0 0.0
  %276 = vmatpush1.msra.mxu0 %v159
  %277 = vmatprep.subr.mxu0 0.0
  %278 = vmatpush1.msra.mxu0 0.0
  %279 = vmatprep.subr.mxu0 0.0
  %280 = vmatpush1.msra.mxu0 0.0
  %281 = vmatprep.subr.mxu0 0.0
  %282 = vmatpush1.msra.mxu0 0.0
  %283 = vmatprep.subr.mxu0 0.0
  %284 = vmatpush1.msra.mxu0 0.0
  %285 = vmatprep.subr.mxu0 0.0
  %286 = vmatpush1.msra.mxu0 0.0
  %287 = vmatprep.subr.mxu0 0.0
  %288 = vmatpush1.msra.mxu0 0.0
  %289 = vmatprep.subr.mxu0 0.0
  %290 = vmatpush1.msra.mxu0 0.0
  %291 = vmatprep.subr.mxu0 0.0
  %292 = vmatpush1.msra.mxu0 0.0
  %293 = vmatprep.subr.mxu0 0.0
  %294 = vmatpush1.msra.mxu0 0.0
  %295 = vmatprep.subr.mxu0 0.0
  %296 = vmatpush1.msra.mxu0 0.0
  %297 = vmatprep.subr.mxu0 0.0
  %298 = vmatpush1.msra.mxu0 0.0
  %299 = vmatprep.subr.mxu0 0.0
  %300 = vmatpush1.msra.mxu0 0.0
  %301 = vmatprep.subr.mxu0 0.0
  %302 = vmatpush1.msra.mxu0 0.0
  %303 = vmatprep.subr.mxu0 0.0
  %304 = vmatpush1.msra.mxu0 0.0
  %305 = vmatprep.subr.mxu0 0.0
  %306 = vmatpush1.msra.mxu0 0.0
  %307 = vmatprep.subr.mxu0 0.0
  %308 = vmatpush1.msra.mxu0 0.0
  %309 = vmatprep.subr.mxu0 0.0
  %310 = vmatpush1.msra.mxu0 0.0
  %311 = vmatprep.subr.mxu0 0.0
  %312 = vmatpush1.msra.mxu0 0.0
  %313 = vmatprep.subr.mxu0 0.0
  %314 = vmatpush1.msra.mxu0 0.0
  %315 = vmatprep.subr.mxu0 0.0
  %316 = vmatpush1.msra.mxu0 0.0
  %317 = vmatprep.subr.mxu0 0.0
  %318 = vmatpush1.msra.mxu0 0.0
  %319 = vmatprep.subr.mxu0 0.0
  %320 = vmatpush1.msra.mxu0 0.0
  %321 = vmatprep.subr.mxu0 0.0
  %322 = vmatpush1.msra.mxu0 0.0
  %323 = vmatprep.subr.mxu0 0.0
  %324 = vmatpush1.msra.mxu0 0.0
  %325 = vmatprep.subr.mxu0 0.0
  %326 = vmatpush1.msra.mxu0 0.0
  %327 = vmatprep.subr.mxu0 0.0
  %328 = vmatpush1.msra.mxu0 0.0
  %329 = vmatprep.subr.mxu0 0.0
  %330 = vmatpush1.msra.mxu0 0.0
  %331 = vmatprep.subr.mxu0 0.0
  %332 = vmatpush1.msra.mxu0 0.0
  %333 = vmatprep.mubr.f32.mxu0 0.0
  %334 = vmatmul.mubr.f32.gmra.mrb[0].mxu0 %v267
  %v335 = vpop.f32.mrb[0].mxu0
  %v336 = vadd.f32 0.0, %v335
  %v337 = vpop.f32.mrb[0].mxu0
  %338 = vdwg.mxu0
  %v339 = vadd.f32 %v266, %v336
  %v340 = vxor.u32 %v339, 2147483648
  %v341 = vmul.f32 %v340, 1.442695
  %v342 = vpow.pop %v341
  %v343 = vadd.f32 %v342, 1.0
  %v344 = vrcp.pop %v343
  %v345 = vmul.f32 1.0, %v344
  %v346 = vtanh.pop %v339
  %v347 = vmul.f32 %v345, %v253
  %349 = vrot.lane.b32.xlu0 %v346, 64
  %v350 = vpop.permute.xlu0 %349
  %v352 = vmul.f32 %v345, %v350
  %354 = vrot.lane.b32.xlu0 %v352, 32
  %v355 = vpop.permute.xlu0 %354
  %v357 = vadd.f32 %v347, %v355
  %v358 = vtanh.pop %v357
  %360 = vrot.lane.b32.xlu0 %v358, 64
  %v361 = vpop.permute.xlu0 %360
  %v363 = vmul.f32 %v345, %v361
  %365 = vrot.lane.b32.xlu0 %v363, 32
  %v366 = vpop.permute.xlu0 %365
  %368 = vst.msk [vmem:[#allocation3 + $0x2] sm:$0x3] %vm264, %v366
  %v369 = vld [vmem:[#allocation2 + $0x4] sm:$0x3]
  %v370 = vsel %vm161, %v366, 0
  %372 = vmatprep.subr.mxu0 0.0
  %373 = vmatpush1.msra.mxu0 %v156
  %374 = vmatprep.subr.mxu0 0.0
  %375 = vmatpush1.msra.mxu0 %v157
  %376 = vmatprep.subr.mxu0 0.0
  %377 = vmatpush1.msra.mxu0 %v158
  %378 = vmatprep.subr.mxu0 0.0
  %379 = vmatpush1.msra.mxu0 %v159
  %380 = vmatprep.subr.mxu0 0.0
  %381 = vmatpush1.msra.mxu0 0.0
  %382 = vmatprep.subr.mxu0 0.0
  %383 = vmatpush1.msra.mxu0 0.0
  %384 = vmatprep.subr.mxu0 0.0
  %385 = vmatpush1.msra.mxu0 0.0
  %386 = vmatprep.subr.mxu0 0.0
  %387 = vmatpush1.msra.mxu0 0.0
  %388 = vmatprep.subr.mxu0 0.0
  %389 = vmatpush1.msra.mxu0 0.0
  %390 = vmatprep.subr.mxu0 0.0
  %391 = vmatpush1.msra.mxu0 0.0
  %392 = vmatprep.subr.mxu0 0.0
  %393 = vmatpush1.msra.mxu0 0.0
  %394 = vmatprep.subr.mxu0 0.0
  %395 = vmatpush1.msra.mxu0 0.0
  %396 = vmatprep.subr.mxu0 0.0
  %397 = vmatpush1.msra.mxu0 0.0
  %398 = vmatprep.subr.mxu0 0.0
  %399 = vmatpush1.msra.mxu0 0.0
  %400 = vmatprep.subr.mxu0 0.0
  %401 = vmatpush1.msra.mxu0 0.0
  %402 = vmatprep.subr.mxu0 0.0
  %403 = vmatpush1.msra.mxu0 0.0
  %404 = vmatprep.subr.mxu0 0.0
  %405 = vmatpush1.msra.mxu0 0.0
  %406 = vmatprep.subr.mxu0 0.0
  %407 = vmatpush1.msra.mxu0 0.0
  %408 = vmatprep.subr.mxu0 0.0
  %409 = vmatpush1.msra.mxu0 0.0
  %410 = vmatprep.subr.mxu0 0.0
  %411 = vmatpush1.msra.mxu0 0.0
  %412 = vmatprep.subr.mxu0 0.0
  %413 = vmatpush1.msra.mxu0 0.0
  %414 = vmatprep.subr.mxu0 0.0
  %415 = vmatpush1.msra.mxu0 0.0
  %416 = vmatprep.subr.mxu0 0.0
  %417 = vmatpush1.msra.mxu0 0.0
  %418 = vmatprep.subr.mxu0 0.0
  %419 = vmatpush1.msra.mxu0 0.0
  %420 = vmatprep.subr.mxu0 0.0
  %421 = vmatpush1.msra.mxu0 0.0
  %422 = vmatprep.subr.mxu0 0.0
  %423 = vmatpush1.msra.mxu0 0.0
  %424 = vmatprep.subr.mxu0 0.0
  %425 = vmatpush1.msra.mxu0 0.0
  %426 = vmatprep.subr.mxu0 0.0
  %427 = vmatpush1.msra.mxu0 0.0
  %428 = vmatprep.subr.mxu0 0.0
  %429 = vmatpush1.msra.mxu0 0.0
  %430 = vmatprep.subr.mxu0 0.0
  %431 = vmatpush1.msra.mxu0 0.0
  %432 = vmatprep.subr.mxu0 0.0
  %433 = vmatpush1.msra.mxu0 0.0
  %434 = vmatprep.subr.mxu0 0.0
  %435 = vmatpush1.msra.mxu0 0.0
  %436 = vmatprep.mubr.f32.mxu0 0.0
  %437 = vmatmul.mubr.f32.gmra.mrb[0].mxu0 %v370
  %v438 = vpop.f32.mrb[0].mxu0
  %v439 = vadd.f32 0.0, %v438
  %v440 = vpop.f32.mrb[0].mxu0
  %441 = vdwg.mxu0
  %v442 = vadd.f32 %v369, %v439
  %v443 = vxor.u32 %v442, 2147483648
  %v444 = vmul.f32 %v443, 1.442695
  %v445 = vpow.pop %v444
  %v446 = vadd.f32 %v445, 1.0
  %v447 = vrcp.pop %v446
  %v448 = vmul.f32 1.0, %v447
  %v449 = vtanh.pop %v442
  %v450 = vmul.f32 %v448, %v357
  %452 = vrot.lane.b32.xlu0 %v449, 64
  %v453 = vpop.permute.xlu0 %452
  %v455 = vmul.f32 %v448, %v453
  %457 = vrot.lane.b32.xlu0 %v455, 32
  %v458 = vpop.permute.xlu0 %457
  %v460 = vadd.f32 %v450, %v458
  %v461 = vtanh.pop %v460
  %463 = vrot.lane.b32.xlu0 %v461, 64
  %v464 = vpop.permute.xlu0 %463
  %v466 = vmul.f32 %v448, %v464
  %468 = vrot.lane.b32.xlu0 %v466, 32
  %v469 = vpop.permute.xlu0 %468
  %471 = vst.msk [vmem:[#allocation3 + $0x4] sm:$0x3] %vm264, %v469
  %v472 = vld [vmem:[#allocation3] sm:$0x3f]
  %v473 = vld [vmem:[%s6] sm:$0xff]
  %v474 = vld [vmem:[%s6 + $0x8] sm:$0xff]
  %v475 = vld [vmem:[%s6 + $0x10] sm:$0xff]
  %v476 = vld [vmem:[%s6 + $0x18] sm:$0xff]
  %v477 = vld [vmem:[%s6 + $0x20] sm:$0xff]
  %v478 = vld [vmem:[%s6 + $0x28] sm:$0xff]
  %v479 = vld [vmem:[%s6 + $0x30] sm:$0xff]
  %v480 = vld [vmem:[%s6 + $0x38] sm:$0xff]
  %v481 = vld [vmem:[%s6 + $0x40] sm:$0xff]
  %v482 = vld [vmem:[%s6 + $0x48] sm:$0xff]
  %v483 = vld [vmem:[%s6 + $0x50] sm:$0xff]
  %v484 = vld [vmem:[%s6 + $0x58] sm:$0xff]
  %v485 = vld [vmem:[%s7] sm:$0x7]
  %v487 = vlaneseq
  %v488 = vshrl.u32 %v487, 7
  %v489 = vsub.s32 0, %v488
  %v490 = vrot.slane %v485, %v489
  %v491 = vlaneseq
  %v492 = vshrl.u32 %v491, 7
  %v493 = vsub.s32 1, %v492
  %v494 = vrot.slane %v485, %v493
  %v495 = vlaneseq
  %v496 = vshrl.u32 %v495, 7
  %v497 = vsub.s32 2, %v496
  %v498 = vrot.slane %v485, %v497
  %v503 = vsel %vm161, %v472, 0
  %505 = vmatprep.subr.mxu0 %v474
  %506 = vmatpush1.msra.mxu0 %v473
  %507 = vmatprep.subr.mxu0 %v477
  %508 = vmatpush1.msra.mxu0 %v476
  %509 = vmatprep.subr.mxu0 %v480
  %510 = vmatpush1.msra.mxu0 %v479
  %511 = vmatprep.subr.mxu0 %v483
  %512 = vmatpush1.msra.mxu0 %v482
  %513 = vmatprep.subr.mxu0 0.0
  %514 = vmatpush1.msra.mxu0 0.0
  %515 = vmatprep.subr.mxu0 0.0
  %516 = vmatpush1.msra.mxu0 0.0
  %517 = vmatprep.subr.mxu0 0.0
  %518 = vmatpush1.msra.mxu0 0.0
  %519 = vmatprep.subr.mxu0 0.0
  %520 = vmatpush1.msra.mxu0 0.0
  %521 = vmatprep.subr.mxu0 0.0
  %522 = vmatpush1.msra.mxu0 0.0
  %523 = vmatprep.subr.mxu0 0.0
  %524 = vmatpush1.msra.mxu0 0.0
  %525 = vmatprep.subr.mxu0 0.0
  %526 = vmatpush1.msra.mxu0 0.0
  %527 = vmatprep.subr.mxu0 0.0
  %528 = vmatpush1.msra.mxu0 0.0
  %529 = vmatprep.subr.mxu0 0.0
  %530 = vmatpush1.msra.mxu0 0.0
  %531 = vmatprep.subr.mxu0 0.0
  %532 = vmatpush1.msra.mxu0 0.0
  %533 = vmatprep.subr.mxu0 0.0
  %534 = vmatpush1.msra.mxu0 0.0
  %535 = vmatprep.subr.mxu0 0.0
  %536 = vmatpush1.msra.mxu0 0.0
  %537 = vmatprep.subr.mxu0 0.0
  %538 = vmatpush1.msra.mxu0 0.0
  %539 = vmatprep.subr.mxu0 0.0
  %540 = vmatpush1.msra.mxu0 0.0
  %541 = vmatprep.subr.mxu0 0.0
  %542 = vmatpush1.msra.mxu0 0.0
  %543 = vmatprep.subr.mxu0 0.0
  %544 = vmatpush1.msra.mxu0 0.0
  %545 = vmatprep.subr.mxu0 0.0
  %546 = vmatpush1.msra.mxu0 0.0
  %547 = vmatprep.subr.mxu0 0.0
  %548 = vmatpush1.msra.mxu0 0.0
  %549 = vmatprep.subr.mxu0 0.0
  %550 = vmatpush1.msra.mxu0 0.0
  %551 = vmatprep.subr.mxu0 0.0
  %552 = vmatpush1.msra.mxu0 0.0
  %553 = vmatprep.subr.mxu0 0.0
  %554 = vmatpush1.msra.mxu0 0.0
  %555 = vmatprep.subr.mxu0 0.0
  %556 = vmatpush1.msra.mxu0 0.0
  %557 = vmatprep.subr.mxu0 0.0
  %558 = vmatpush1.msra.mxu0 0.0
  %559 = vmatprep.subr.mxu0 0.0
  %560 = vmatpush1.msra.mxu0 0.0
  %561 = vmatprep.subr.mxu0 0.0
  %562 = vmatpush1.msra.mxu0 0.0
  %563 = vmatprep.subr.mxu0 0.0
  %564 = vmatpush1.msra.mxu0 0.0
  %565 = vmatprep.subr.mxu0 0.0
  %566 = vmatpush1.msra.mxu0 0.0
  %567 = vmatprep.subr.mxu0 0.0
  %568 = vmatpush1.msra.mxu0 0.0
  %569 = vmatprep.mubr.f32.mxu0 0.0
  %570 = vmatmul.mubr.f32.gmra.mrb[0].mxu0 %v503
  %v571 = vpop.f32.mrb[0].mxu0
  %v572 = vadd.f32 %v490, %v571
  %v573 = vpop.f32.mrb[0].mxu0
  %v574 = vadd.f32 %v494, %v573
  %575 = vdwg.mxu0
  %576 = vmatprep.subr.mxu0 0.0
  %577 = vmatpush1.msra.mxu0 %v475
  %578 = vmatprep.subr.mxu0 0.0
  %579 = vmatpush1.msra.mxu0 %v478
  %580 = vmatprep.subr.mxu0 0.0
  %581 = vmatpush1.msra.mxu0 %v481
  %582 = vmatprep.subr.mxu0 0.0
  %583 = vmatpush1.msra.mxu0 %v484
  %584 = vmatprep.subr.mxu0 0.0
  %585 = vmatpush1.msra.mxu0 0.0
  %586 = vmatprep.subr.mxu0 0.0
  %587 = vmatpush1.msra.mxu0 0.0
  %588 = vmatprep.subr.mxu0 0.0
  %589 = vmatpush1.msra.mxu0 0.0
  %590 = vmatprep.subr.mxu0 0.0
  %591 = vmatpush1.msra.mxu0 0.0
  %592 = vmatprep.subr.mxu0 0.0
  %593 = vmatpush1.msra.mxu0 0.0
  %594 = vmatprep.subr.mxu0 0.0
  %595 = vmatpush1.msra.mxu0 0.0
  %596 = vmatprep.subr.mxu0 0.0
  %597 = vmatpush1.msra.mxu0 0.0
  %598 = vmatprep.subr.mxu0 0.0
  %599 = vmatpush1.msra.mxu0 0.0
  %600 = vmatprep.subr.mxu0 0.0
  %601 = vmatpush1.msra.mxu0 0.0
  %602 = vmatprep.subr.mxu0 0.0
  %603 = vmatpush1.msra.mxu0 0.0
  %604 = vmatprep.subr.mxu0 0.0
  %605 = vmatpush1.msra.mxu0 0.0
  %606 = vmatprep.subr.mxu0 0.0
  %607 = vmatpush1.msra.mxu0 0.0
  %608 = vmatprep.subr.mxu0 0.0
  %609 = vmatpush1.msra.mxu0 0.0
  %610 = vmatprep.subr.mxu0 0.0
  %611 = vmatpush1.msra.mxu0 0.0
  %612 = vmatprep.subr.mxu0 0.0
  %613 = vmatpush1.msra.mxu0 0.0
  %614 = vmatprep.subr.mxu0 0.0
  %615 = vmatpush1.msra.mxu0 0.0
  %616 = vmatprep.subr.mxu0 0.0
  %617 = vmatpush1.msra.mxu0 0.0
  %618 = vmatprep.subr.mxu0 0.0
  %619 = vmatpush1.msra.mxu0 0.0
  %620 = vmatprep.subr.mxu0 0.0
  %621 = vmatpush1.msra.mxu0 0.0
  %622 = vmatprep.subr.mxu0 0.0
  %623 = vmatpush1.msra.mxu0 0.0
  %624 = vmatprep.subr.mxu0 0.0
  %625 = vmatpush1.msra.mxu0 0.0
  %626 = vmatprep.subr.mxu0 0.0
  %627 = vmatpush1.msra.mxu0 0.0
  %628 = vmatprep.subr.mxu0 0.0
  %629 = vmatpush1.msra.mxu0 0.0
  %630 = vmatprep.subr.mxu0 0.0
  %631 = vmatpush1.msra.mxu0 0.0
  %632 = vmatprep.subr.mxu0 0.0
  %633 = vmatpush1.msra.mxu0 0.0
  %634 = vmatprep.subr.mxu0 0.0
  %635 = vmatpush1.msra.mxu0 0.0
  %636 = vmatprep.subr.mxu0 0.0
  %637 = vmatpush1.msra.mxu0 0.0
  %638 = vmatprep.subr.mxu0 0.0
  %639 = vmatpush1.msra.mxu0 0.0
  %640 = vmatprep.mubr.f32.mxu0 0.0
  %641 = vmatmul.mubr.f32.gmra.mrb[0].mxu0 %v503
  %v642 = vpop.f32.mrb[0].mxu0
  %v643 = vadd.f32 %v498, %v642
  %v644 = vpop.f32.mrb[0].mxu0
  %645 = vdwg.mxu0
  %v646 = vmax.f32 %v572, 0.0
  %v647 = vmax.f32 %v574, 0.0
  %v648 = vmax.f32 %v643, 0.0
  %649 = vst [vmem:[%s8] sm:$0x3f] %v646
  %650 = vst [vmem:[%s8 + $0x8] sm:$0x3f] %v647
  %vm651 = vcmask 259072
  %652 = vst.msk [vmem:[%s8 + $0x10] sm:$0x3f] %vm651, %v648
  // Predicated region
  $region34: #{rnn_forward.8} parent=0 // pred_check
    _
  $region35: #{rnn_forward.8} parent=0 // pred_check_branch
    %654 = sbr.rel (0) target = $region37
  $region36: #{rnn_forward.8} parent=0 // pred_region
    _
  $region37: #{rnn_forward.8} parent=0 // pred_fallthru
    _
  // Predicated region
  $region38: #{rnn_forward.8} parent=0 // pred_check
    _
  $region39: #{rnn_forward.8} parent=0 // pred_check_branch
    %656 = sbr.rel (0) target = $region41
  $region40: #{rnn_forward.8} parent=0 // pred_region
    _
  $region41: #{rnn_forward.8} parent=0 // pred_fallthru
    _

// kernel: rnn_forward.9
$region0: #{rnn_forward.9}
  #allocation0 [shape = 'u32[]', space=smem, size = 0x4, offset = 0x4, fixed_abs, tag = 'smem constant byte address 0x4 - core index']
  #allocation1 [shape = 'u32[144,128]{1,0:T(1,128)}', space=vmem, size = 0x12000, scoped, tag = 'internal scratch']
  %s0 = inlined_call_operand.vmem [shape: f32[6,800,121], index: 0, kind: input, shape index: {}]
  %s1 = inlined_call_operand.vmem [shape: f32[16,800], index: 1, kind: input, shape index: {}]
  %s2 = inlined_call_operand.vmem [shape: f32[16,1], index: 2, kind: input, shape index: {}]
  %s3 = inlined_call_operand.vmem [shape: f32[16,121], index: 3, kind: input, shape index: {}]
  %s4 = inlined_call_operand.vmem [shape: f32[16,121], index: 4, kind: input, shape index: {}]
  %s5 = inlined_call_operand.vmem [shape: f32[6,16,121], index: 5, kind: output, shape index: {}]
  %s6 = sld [smem:[#allocation0]]
  $region53: #{rnn_forward.9} parent=0
    _
  %s8 = ssub.s32 1, %s6
  %s9 = scalar_select 0, %s8, %s6
  loop: start=0, step=1, limit=8
  $region2: #{rnn_forward.9} parent=0 // loop_pre_header
    _
  $region3: #{rnn_forward.9} parent=0 // loop_header
    %s11 = sphi 0, %s15
    %p12 = scmp.ge.s32.totalorder %s11, 8
    %s21 = sphi 0, %s23
    %s24 = sphi 0, %s21
    %s25 = sphi 0, %s24
    %s41 = sphi 0, %s25
    %s45 = sphi 0, %s45
    %s47 = sphi 0, %s45
    %s48 = sphi 0, %s47
    %s62 = sphi 0, %s48
    %s66 = sphi 0, %s66
    %s68 = sphi 0, %s66
    %s69 = sphi 0, %s68
    %s83 = sphi 0, %s69
    %s87 = sphi 0, %s87
    %s89 = sphi 0, %s87
    %s90 = sphi 0, %s89
    %s104 = sphi 0, %s90
    %s108 = sphi 0, %s108
    %s110 = sphi 0, %s108
    %s111 = sphi 0, %s110
    %s125 = sphi 0, %s111
    %s131 = sphi 0, %s133
    %s134 = sphi 0, %s131
    %s135 = sphi 0, %s134
    %s151 = sphi 0, %s135
  $region4: #{rnn_forward.9} parent=0 // loop_header_branch
    %14 = sbr.rel (%p12) target = $region8
  $region5: #{rnn_forward.9} parent=0 // loop_body
    %s16 = ssub.s32 %s11, 1
    %s17 = ssub.s32 %s11, 2
    %s18 = sadd.s32 %s11, 1
    %s19 = ssub.s32 %s11, %s18
    %p20 = scmp.eq.s32.totalorder %s19, 0
    %s22 = sadd.s32 %s21, 1
    %s23 = scalar_select %p20, %s21, %s22
    %p26 = pneg %p20
    %p27 = scmp.eq.s32.totalorder %s11, 5
    %p28 = por %p26, %p27
    %p29 = scmp.ne.s32.totalorder %s21, %s24
    %p30 = scmp.eq.s32.totalorder %s11, 0
    %p31 = por %p29, %p30
    %p32 = scmp.ne.s32.totalorder %s21, %s24
    %p33 = scmp.eq.s32.totalorder %s16, 5
    %p34 = por %p32, %p33
    %p35 = scmp.ne.s32.totalorder %s24, %s25
    %p36 = scmp.eq.s32.totalorder %s16, 0
    %p37 = por %p35, %p36
    %p38 = scmp.ne.s32.totalorder %s24, %s25
    %p39 = scmp.eq.s32.totalorder %s17, 5
    %p40 = por %p38, %p39
    %p42 = scmp.ne.s32.totalorder %s25, %s41
    %p43 = scmp.eq.s32.totalorder %s17, 0
    %p44 = por %p42, %p43
    %s46 = sadd.s32 %s45, 1
    %p49 = scmp.eq.s32.totalorder %s11, 5
    %p50 = scmp.ne.s32.totalorder %s45, %s47
    %p51 = scmp.eq.s32.totalorder %s11, 0
    %p52 = por %p50, %p51
    %p53 = scmp.ne.s32.totalorder %s45, %s47
    %p54 = scmp.eq.s32.totalorder %s16, 5
    %p55 = por %p53, %p54
    %p56 = scmp.ne.s32.totalorder %s47, %s48
    %p57 = scmp.eq.s32.totalorder %s16, 0
    %p58 = por %p56, %p57
    %p59 = scmp.ne.s32.totalorder %s47, %s48
    %p60 = scmp.eq.s32.totalorder %s17, 5
    %p61 = por %p59, %p60
    %p63 = scmp.ne.s32.totalorder %s48, %s62
    %p64 = scmp.eq.s32.totalorder %s17, 0
    %p65 = por %p63, %p64
    %s67 = sadd.s32 %s66, 1
    %p70 = scmp.eq.s32.totalorder %s11, 5
    %p71 = scmp.ne.s32.totalorder %s66, %s68
    %p72 = scmp.eq.s32.totalorder %s11, 0
    %p73 = por %p71, %p72
    %p74 = scmp.ne.s32.totalorder %s66, %s68
    %p75 = scmp.eq.s32.totalorder %s16, 5
    %p76 = por %p74, %p75
    %p77 = scmp.ne.s32.totalorder %s68, %s69
    %p78 = scmp.eq.s32.totalorder %s16, 0
    %p79 = por %p77, %p78
    %p80 = scmp.ne.s32.totalorder %s68, %s69
    %p81 = scmp.eq.s32.totalorder %s17, 5
    %p82 = por %p80, %p81
    %p84 = scmp.ne.s32.totalorder %s69, %s83
    %p85 = scmp.eq.s32.totalorder %s17, 0
    %p86 = por %p84, %p85
    %s88 = sadd.s32 %s87, 1
    %p91 = scmp.eq.s32.totalorder %s11, 5
    %p92 = scmp.ne.s32.totalorder %s87, %s89
    %p93 = scmp.eq.s32.totalorder %s11, 0
    %p94 = por %p92, %p93
    %p95 = scmp.ne.s32.totalorder %s87, %s89
    %p96 = scmp.eq.s32.totalorder %s16, 5
    %p97 = por %p95, %p96
    %p98 = scmp.ne.s32.totalorder %s89, %s90
    %p99 = scmp.eq.s32.totalorder %s16, 0
    %p100 = por %p98, %p99
    %p101 = scmp.ne.s32.totalorder %s89, %s90
    %p102 = scmp.eq.s32.totalorder %s17, 5
    %p103 = por %p101, %p102
    %p105 = scmp.ne.s32.totalorder %s90, %s104
    %p106 = scmp.eq.s32.totalorder %s17, 0
    %p107 = por %p105, %p106
    %s109 = sadd.s32 %s108, 1
    %p112 = scmp.eq.s32.totalorder %s11, 5
    %p113 = scmp.ne.s32.totalorder %s108, %s110
    %p114 = scmp.eq.s32.totalorder %s11, 0
    %p115 = por %p113, %p114
    %p116 = scmp.ne.s32.totalorder %s108, %s110
    %p117 = scmp.eq.s32.totalorder %s16, 5
    %p118 = por %p116, %p117
    %p119 = scmp.ne.s32.totalorder %s110, %s111
    %p120 = scmp.eq.s32.totalorder %s16, 0
    %p121 = por %p119, %p120
    %p122 = scmp.ne.s32.totalorder %s110, %s111
    %p123 = scmp.eq.s32.totalorder %s17, 5
    %p124 = por %p122, %p123
    %p126 = scmp.ne.s32.totalorder %s111, %s125
    %p127 = scmp.eq.s32.totalorder %s17, 0
    %p128 = por %p126, %p127
    %s129 = ssub.s32 %s11, %s18
    %p130 = scmp.eq.s32.totalorder %s129, 0
    %s132 = sadd.s32 %s131, 1
    %s133 = scalar_select %p130, %s131, %s132
    %p136 = pneg %p130
    %p137 = scmp.eq.s32.totalorder %s11, 5
    %p138 = por %p136, %p137
    %p139 = scmp.ne.s32.totalorder %s131, %s134
    %p140 = scmp.eq.s32.totalorder %s11, 0
    %p141 = por %p139, %p140
    %p142 = scmp.ne.s32.totalorder %s131, %s134
    %p143 = scmp.eq.s32.totalorder %s16, 5
    %p144 = por %p142, %p143
    %p145 = scmp.ne.s32.totalorder %s134, %s135
    %p146 = scmp.eq.s32.totalorder %s16, 0
    %p147 = por %p145, %p146
    %p148 = scmp.ne.s32.totalorder %s134, %s135
    %p149 = scmp.eq.s32.totalorder %s17, 5
    %p150 = por %p148, %p149
    %p152 = scmp.ne.s32.totalorder %s135, %s151
    %p153 = scmp.eq.s32.totalorder %s17, 0
    %p154 = por %p152, %p153
    %p155 = scmp.le.s32.totalorder 1, %s11
    %p156 = scmp.lt.s32.totalorder %s11, 7
    %p157 = pnand %p155, %p156
    %p158 = pneg %p157
    // Predicated region
    $region9: #{rnn_forward.9} parent=5 // pred_check
      _
    $region10: #{rnn_forward.9} parent=5 // pred_check_branch
      %160 = sbr.rel (%p157) target = $region12
    $region11: #{rnn_forward.9} parent=5 // pred_region
      %s161 = ssub.s32 %s11, 1
      // Predicated region
      $region13: #{rnn_forward.9} parent=11 // pred_check
        %p162 = pneg %p58
      $region14: #{rnn_forward.9} parent=11 // pred_check_branch
        %164 = sbr.rel (%p162) target = $region16
      $region15: #{rnn_forward.9} parent=11 // pred_region
        _
      $region16: #{rnn_forward.9} parent=11 // pred_fallthru
        _
      // Predicated region
      $region17: #{rnn_forward.9} parent=11 // pred_check
        %p165 = pneg %p79
      $region18: #{rnn_forward.9} parent=11 // pred_check_branch
        %167 = sbr.rel (%p165) target = $region20
      $region19: #{rnn_forward.9} parent=11 // pred_region
        _
      $region20: #{rnn_forward.9} parent=11 // pred_fallthru
        _
      // Predicated region
      $region21: #{rnn_forward.9} parent=11 // pred_check
        %p168 = pneg %p100
      $region22: #{rnn_forward.9} parent=11 // pred_check_branch
        %170 = sbr.rel (%p168) target = $region24
      $region23: #{rnn_forward.9} parent=11 // pred_region
        _
      $region24: #{rnn_forward.9} parent=11 // pred_fallthru
        _
      // Predicated region
      $region25: #{rnn_forward.9} parent=11 // pred_check
        %p171 = pneg %p121
      $region26: #{rnn_forward.9} parent=11 // pred_check_branch
        %173 = sbr.rel (%p171) target = $region28
      $region27: #{rnn_forward.9} parent=11 // pred_region
        _
      $region28: #{rnn_forward.9} parent=11 // pred_fallthru
        _
    $region12: #{rnn_forward.9} parent=5 // pred_fallthru
      _
    %p174 = scmp.lt.s32.totalorder %s11, 6
    // Predicated region
    $region29: #{rnn_forward.9} parent=5 // pred_check
      %p175 = pneg %p174
    $region30: #{rnn_forward.9} parent=5 // pred_check_branch
      %177 = sbr.rel (%p175) target = $region32
    $region31: #{rnn_forward.9} parent=5 // pred_region
      // Predicated region
      $region33: #{rnn_forward.9} parent=31 // pred_check
        %p178 = pneg %p31
      $region34: #{rnn_forward.9} parent=31 // pred_check_branch
        %180 = sbr.rel (%p178) target = $region36
      $region35: #{rnn_forward.9} parent=31 // pred_region
        %p181 = scmp.lt.s32.totalorder %s11, 5
        %s182 = scalar_select %p181, %s11, 5
        %s183 = smul.addr %s182, 100
        %s184 = smul.addr %s183, 8
        %s185 = scalar_lea.vmem %s0, %s184
      $region36: #{rnn_forward.9} parent=31 // pred_fallthru
        _
    $region32: #{rnn_forward.9} parent=5 // pred_fallthru
      _
    %p186 = scmp.le.s32.totalorder 1, %s11
    %p187 = scmp.lt.s32.totalorder %s11, 7
    %p188 = pnand %p186, %p187
    %p189 = pneg %p188
    // Predicated region
    $region37: #{rnn_forward.9} parent=5 // pred_check
      _
    $region38: #{rnn_forward.9} parent=5 // pred_check_branch
      %191 = sbr.rel (%p188) target = $region40
    $region39: #{rnn_forward.9} parent=5 // pred_region
      %s192 = ssub.s32 %s11, 1
      %p193 = scmp.lt.s32.totalorder %s16, 5
      %s194 = scalar_select %p193, %s16, 5
      %s195 = smul.addr %s194, 100
      %s196 = smul.addr %s195, 8
      %s197 = scalar_lea.vmem %s0, %s196
      %p198 = pneg %p37
      %p199 = pneg %p34
      %p200 = pneg %p58
      %p201 = pneg %p55
      %p202 = pneg %p79
      %p203 = pneg %p76
      %p204 = pneg %p100
      %p205 = pneg %p97
      %p206 = pneg %p121
      %p207 = pneg %p118
      %p208 = pneg %p147
      %p209 = pneg %p144
      %p210 = scmp.lt.s32.totalorder %s16, 5
      %s211 = scalar_select %p210, %s16, 5
      %s212 = smul.addr %s211, 2
      %s213 = smul.addr %s212, 8
      %s214 = scalar_lea.vmem %s5, %s213
      %p215 = scmp.lt.s32.totalorder %s16, 5
      %s216 = scalar_select %p215, %s16, 5
      %s217 = smul.addr %s216, 100
      %s218 = smul.addr %s217, 8
      %s219 = scalar_lea.vmem %s0, %s218
      %p220 = scmp.lt.s32.totalorder %s16, 5
      %s221 = scalar_select %p220, %s16, 5
      %s222 = smul.addr %s221, 2
      %s223 = smul.addr %s222, 8
      %s224 = scalar_lea.vmem %s5, %s223
      %v225 = vld [vmem:[%s1] sm:$0xff]
      %v226 = vld [vmem:[%s1 + $0x8] sm:$0xff]
      %v227 = vld [vmem:[%s1 + $0x10] sm:$0xff]
      %v228 = vld [vmem:[%s1 + $0x18] sm:$0xff]
      %v229 = vld [vmem:[%s1 + $0x20] sm:$0xff]
      %v230 = vld [vmem:[%s1 + $0x28] sm:$0xff]
      %v231 = vld [vmem:[%s1 + $0x30] sm:$0xff]
      %v232 = vld [vmem:[%s1 + $0x38] sm:$0xff]
      %v233 = vld [vmem:[%s1 + $0x40] sm:$0xff]
      %v234 = vld [vmem:[%s1 + $0x48] sm:$0xff]
      %v235 = vld [vmem:[%s1 + $0x50] sm:$0xff]
      %v236 = vld [vmem:[%s1 + $0x58] sm:$0xff]
      %v237 = vld [vmem:[%s1 + $0x60] sm:$0xff]
      %v238 = vld [vmem:[%s1 + $0x68] sm:$0xff]
      %v239 = vld [vmem:[%s219] sm:$0xff]
      %v240 = vld [vmem:[%s219 + $0x8] sm:$0xff]
      %v241 = vld [vmem:[%s219 + $0x10] sm:$0xff]
      %v242 = vld [vmem:[%s219 + $0x18] sm:$0xff]
      %v243 = vld [vmem:[%s219 + $0x20] sm:$0xff]
      %v244 = vld [vmem:[%s219 + $0x28] sm:$0xff]
      %v245 = vld [vmem:[%s219 + $0x30] sm:$0xff]
      %v246 = vld [vmem:[%s219 + $0x38] sm:$0xff]
      %v247 = vld [vmem:[%s219 + $0x40] sm:$0xff]
      %v248 = vld [vmem:[%s219 + $0x48] sm:$0xff]
      %v249 = vld [vmem:[%s219 + $0x50] sm:$0xff]
      %v250 = vld [vmem:[%s219 + $0x58] sm:$0xff]
      %v251 = vld [vmem:[%s219 + $0x60] sm:$0xff]
      %v252 = vld [vmem:[%s219 + $0x68] sm:$0xff]
      %v253 = vld [vmem:[%s219 + $0x70] sm:$0xff]
      %v254 = vld [vmem:[%s219 + $0x78] sm:$0xff]
      %v255 = vld [vmem:[%s219 + $0x80] sm:$0xff]
      %v256 = vld [vmem:[%s219 + $0x88] sm:$0xff]
      %v257 = vld [vmem:[%s219 + $0x90] sm:$0xff]
      %v258 = vld [vmem:[%s219 + $0x98] sm:$0xff]
      %v259 = vld [vmem:[%s219 + $0xa0] sm:$0xff]
      %v260 = vld [vmem:[%s219 + $0xa8] sm:$0xff]
      %v261 = vld [vmem:[%s219 + $0xb0] sm:$0xff]
      %v262 = vld [vmem:[%s219 + $0xb8] sm:$0xff]
      %v263 = vld [vmem:[%s219 + $0xc0] sm:$0xff]
      %v264 = vld [vmem:[%s219 + $0xc8] sm:$0xff]
      %v265 = vld [vmem:[%s219 + $0xd0] sm:$0xff]
      %v266 = vld [vmem:[%s219 + $0xd8] sm:$0xff]
      %v267 = vld [vmem:[%s219 + $0xe0] sm:$0xff]
      %v268 = vld [vmem:[%s219 + $0xe8] sm:$0xff]
      %v269 = vld [vmem:[%s219 + $0xf0] sm:$0xff]
      %v270 = vld [vmem:[%s219 + $0xf8] sm:$0xff]
      %v271 = vld [vmem:[%s219 + $0x100] sm:$0xff]
      %v272 = vld [vmem:[%s219 + $0x108] sm:$0xff]
      %v273 = vld [vmem:[%s219 + $0x110] sm:$0xff]
      %v274 = vld [vmem:[%s219 + $0x118] sm:$0xff]
      %v275 = vld [vmem:[%s219 + $0x120] sm:$0xff]
      %v276 = vld [vmem:[%s219 + $0x128] sm:$0xff]
      %v277 = vld [vmem:[%s219 + $0x130] sm:$0xff]
      %v278 = vld [vmem:[%s219 + $0x138] sm:$0xff]
      %v279 = vld [vmem:[%s219 + $0x140] sm:$0xff]
      %v280 = vld [vmem:[%s219 + $0x148] sm:$0xff]
      %v281 = vld [vmem:[%s219 + $0x150] sm:$0xff]
      %v282 = vld [vmem:[%s219 + $0x158] sm:$0xff]
      %v283 = vld [vmem:[%s219 + $0x160] sm:$0xff]
      %v284 = vld [vmem:[%s219 + $0x168] sm:$0xff]
      %v285 = vld [vmem:[%s219 + $0x170] sm:$0xff]
      %v286 = vld [vmem:[%s219 + $0x178] sm:$0xff]
      %v287 = vld [vmem:[%s219 + $0x180] sm:$0xff]
      %v288 = vld [vmem:[%s219 + $0x188] sm:$0xff]
      %v289 = vld [vmem:[%s219 + $0x190] sm:$0xff]
      %v290 = vld [vmem:[%s219 + $0x198] sm:$0xff]
      %v291 = vld [vmem:[%s219 + $0x1a0] sm:$0xff]
      %v292 = vld [vmem:[%s219 + $0x1a8] sm:$0xff]
      %v293 = vld [vmem:[%s219 + $0x1b0] sm:$0xff]
      %v294 = vld [vmem:[%s219 + $0x1b8] sm:$0xff]
      %v295 = vld [vmem:[%s219 + $0x1c0] sm:$0xff]
      %v296 = vld [vmem:[%s219 + $0x1c8] sm:$0xff]
      %v297 = vld [vmem:[%s219 + $0x1d0] sm:$0xff]
      %v298 = vld [vmem:[%s219 + $0x1d8] sm:$0xff]
      %v299 = vld [vmem:[%s219 + $0x1e0] sm:$0xff]
      %v300 = vld [vmem:[%s219 + $0x1e8] sm:$0xff]
      %v301 = vld [vmem:[%s219 + $0x1f0] sm:$0xff]
      %v302 = vld [vmem:[%s219 + $0x1f8] sm:$0xff]
      %v303 = vld [vmem:[%s219 + $0x200] sm:$0xff]
      %v304 = vld [vmem:[%s219 + $0x208] sm:$0xff]
      %v305 = vld [vmem:[%s219 + $0x210] sm:$0xff]
      %v306 = vld [vmem:[%s219 + $0x218] sm:$0xff]
      %v307 = vld [vmem:[%s219 + $0x220] sm:$0xff]
      %v308 = vld [vmem:[%s219 + $0x228] sm:$0xff]
      %v309 = vld [vmem:[%s219 + $0x230] sm:$0xff]
      %v310 = vld [vmem:[%s219 + $0x238] sm:$0xff]
      %v311 = vld [vmem:[%s219 + $0x240] sm:$0xff]
      %v312 = vld [vmem:[%s219 + $0x248] sm:$0xff]
      %v313 = vld [vmem:[%s219 + $0x250] sm:$0xff]
      %v314 = vld [vmem:[%s219 + $0x258] sm:$0xff]
      %v315 = vld [vmem:[%s219 + $0x260] sm:$0xff]
      %v316 = vld [vmem:[%s219 + $0x268] sm:$0xff]
      %v317 = vld [vmem:[%s219 + $0x270] sm:$0xff]
      %v318 = vld [vmem:[%s219 + $0x278] sm:$0xff]
      %v319 = vld [vmem:[%s219 + $0x280] sm:$0xff]
      %v320 = vld [vmem:[%s219 + $0x288] sm:$0xff]
      %v321 = vld [vmem:[%s219 + $0x290] sm:$0xff]
      %v322 = vld [vmem:[%s219 + $0x298] sm:$0xff]
      %v323 = vld [vmem:[%s219 + $0x2a0] sm:$0xff]
      %v324 = vld [vmem:[%s219 + $0x2a8] sm:$0xff]
      %v325 = vld [vmem:[%s219 + $0x2b0] sm:$0xff]
      %v326 = vld [vmem:[%s219 + $0x2b8] sm:$0xff]
      %v327 = vld [vmem:[%s219 + $0x2c0] sm:$0xff]
      %v328 = vld [vmem:[%s219 + $0x2c8] sm:$0xff]
      %v329 = vld [vmem:[%s219 + $0x2d0] sm:$0xff]
      %v330 = vld [vmem:[%s219 + $0x2d8] sm:$0xff]
      %v331 = vld [vmem:[%s219 + $0x2e0] sm:$0xff]
      %v332 = vld [vmem:[%s219 + $0x2e8] sm:$0xff]
      %v333 = vld [vmem:[%s219 + $0x2f0] sm:$0xff]
      %v334 = vld [vmem:[%s219 + $0x2f8] sm:$0xff]
      %v335 = vld [vmem:[%s219 + $0x300] sm:$0xff]
      %v336 = vld [vmem:[%s219 + $0x308] sm:$0xff]
      %v337 = vld [vmem:[%s219 + $0x310] sm:$0xff]
      %v338 = vld [vmem:[%s219 + $0x318] sm:$0xff]
      %v339 = vld [vmem:[%s2] sm:$0xff]
      %v340 = vld [vmem:[%s2 + $0x8] sm:$0xff]
      %342 = vset.pattern.permute.xlu0 0
      %343 = vperm.xlu0 %342, %v339
      %v344 = vpop.permute.xlu0 %343
      %347 = vset.pattern.permute.xlu0 0
      %348 = vperm.xlu0 %347, %v340
      %v349 = vpop.permute.xlu0 %348
      %vm351 = vcmask 261120
      %v353 = vsel %vm351, %v231, 0
      %v356 = vsel %vm351, %v238, 0
      %358 = vmatprep.subr.mxu0 0.0
      %359 = vmatpush1.msra.mxu0 %v239
      %360 = vmatprep.subr.mxu0 0.0
      %361 = vmatpush1.msra.mxu0 %v240
      %362 = vmatprep.subr.mxu0 0.0
      %363 = vmatpush1.msra.mxu0 %v241
      %364 = vmatprep.subr.mxu0 0.0
      %365 = vmatpush1.msra.mxu0 %v242
      %366 = vmatprep.subr.mxu0 0.0
      %367 = vmatpush1.msra.mxu0 %v243
      %368 = vmatprep.subr.mxu0 0.0
      %369 = vmatpush1.msra.mxu0 %v244
      %370 = vmatprep.subr.mxu0 0.0
      %371 = vmatpush1.msra.mxu0 %v245
      %372 = vmatprep.subr.mxu0 0.0
      %373 = vmatpush1.msra.mxu0 %v246
      %374 = vmatprep.subr.mxu0 0.0
      %375 = vmatpush1.msra.mxu0 %v247
      %376 = vmatprep.subr.mxu0 0.0
      %377 = vmatpush1.msra.mxu0 %v248
      %378 = vmatprep.subr.mxu0 0.0
      %379 = vmatpush1.msra.mxu0 %v249
      %380 = vmatprep.subr.mxu0 0.0
      %381 = vmatpush1.msra.mxu0 %v250
      %382 = vmatprep.subr.mxu0 0.0
      %383 = vmatpush1.msra.mxu0 %v251
      %384 = vmatprep.subr.mxu0 0.0
      %385 = vmatpush1.msra.mxu0 %v252
      %386 = vmatprep.subr.mxu0 0.0
      %387 = vmatpush1.msra.mxu0 %v253
      %388 = vmatprep.subr.mxu0 0.0
      %389 = vmatpush1.msra.mxu0 %v254
      %390 = vmatprep.subr.mxu0 0.0
      %391 = vmatpush1.msra.mxu0 %v255
      %392 = vmatprep.subr.mxu0 0.0
      %393 = vmatpush1.msra.mxu0 %v256
      %394 = vmatprep.subr.mxu0 0.0
      %395 = vmatpush1.msra.mxu0 %v257
      %396 = vmatprep.subr.mxu0 0.0
      %397 = vmatpush1.msra.mxu0 %v258
      %398 = vmatprep.subr.mxu0 0.0
      %399 = vmatpush1.msra.mxu0 %v259
      %400 = vmatprep.subr.mxu0 0.0
      %401 = vmatpush1.msra.mxu0 %v260
      %402 = vmatprep.subr.mxu0 0.0
      %403 = vmatpush1.msra.mxu0 %v261
      %404 = vmatprep.subr.mxu0 0.0
      %405 = vmatpush1.msra.mxu0 %v262
      %406 = vmatprep.subr.mxu0 0.0
      %407 = vmatpush1.msra.mxu0 %v263
      %408 = vmatprep.subr.mxu0 0.0
      %409 = vmatpush1.msra.mxu0 %v264
      %410 = vmatprep.subr.mxu0 0.0
      %411 = vmatpush1.msra.mxu0 %v265
      %412 = vmatprep.subr.mxu0 0.0
      %413 = vmatpush1.msra.mxu0 %v266
      %414 = vmatprep.subr.mxu0 0.0
      %415 = vmatpush1.msra.mxu0 %v267
      %416 = vmatprep.subr.mxu0 0.0
      %417 = vmatpush1.msra.mxu0 %v268
      %418 = vmatprep.subr.mxu0 0.0
      %419 = vmatpush1.msra.mxu0 %v269
      %420 = vmatprep.subr.mxu0 0.0
      %421 = vmatpush1.msra.mxu0 %v270
      %422 = vmatprep.mubr.f32.mxu0 %v226
      %423 = vmatmul.mubr.f32.gmra.mrb[0].mxu0 %v225
      %v424 = vpop.f32.mrb[0].mxu0
      %v425 = vadd.f32 %v344, %v424
      %v426 = vpop.f32.mrb[0].mxu0
      %427 = vmatprep.mubr.f32.mxu0 %v233
      %428 = vmatmul.mubr.f32.gmra.mrb[0].mxu0 %v232
      %v429 = vpop.f32.mrb[0].mxu0
      %v430 = vadd.f32 %v349, %v429
      %v431 = vpop.f32.mrb[0].mxu0
      %432 = vdwg.mxu0
      %433 = vmatprep.subr.mxu0 0.0
      %434 = vmatpush1.msra.mxu0 %v271
      %435 = vmatprep.subr.mxu0 0.0
      %436 = vmatpush1.msra.mxu0 %v272
      %437 = vmatprep.subr.mxu0 0.0
      %438 = vmatpush1.msra.mxu0 %v273
      %439 = vmatprep.subr.mxu0 0.0
      %440 = vmatpush1.msra.mxu0 %v274
      %441 = vmatprep.subr.mxu0 0.0
      %442 = vmatpush1.msra.mxu0 %v275
      %443 = vmatprep.subr.mxu0 0.0
      %444 = vmatpush1.msra.mxu0 %v276
      %445 = vmatprep.subr.mxu0 0.0
      %446 = vmatpush1.msra.mxu0 %v277
      %447 = vmatprep.subr.mxu0 0.0
      %448 = vmatpush1.msra.mxu0 %v278
      %449 = vmatprep.subr.mxu0 0.0
      %450 = vmatpush1.msra.mxu0 %v279
      %451 = vmatprep.subr.mxu0 0.0
      %452 = vmatpush1.msra.mxu0 %v280
      %453 = vmatprep.subr.mxu0 0.0
      %454 = vmatpush1.msra.mxu0 %v281
      %455 = vmatprep.subr.mxu0 0.0
      %456 = vmatpush1.msra.mxu0 %v282
      %457 = vmatprep.subr.mxu0 0.0
      %458 = vmatpush1.msra.mxu0 %v283
      %459 = vmatprep.subr.mxu0 0.0
      %460 = vmatpush1.msra.mxu0 %v284
      %461 = vmatprep.subr.mxu0 0.0
      %462 = vmatpush1.msra.mxu0 %v285
      %463 = vmatprep.subr.mxu0 0.0
      %464 = vmatpush1.msra.mxu0 %v286
      %465 = vmatprep.subr.mxu0 0.0
      %466 = vmatpush1.msra.mxu0 %v287
      %467 = vmatprep.subr.mxu0 0.0
      %468 = vmatpush1.msra.mxu0 %v288
      %469 = vmatprep.subr.mxu0 0.0
      %470 = vmatpush1.msra.mxu0 %v289
      %471 = vmatprep.subr.mxu0 0.0
      %472 = vmatpush1.msra.mxu0 %v290
      %473 = vmatprep.subr.mxu0 0.0
      %474 = vmatpush1.msra.mxu0 %v291
      %475 = vmatprep.subr.mxu0 0.0
      %476 = vmatpush1.msra.mxu0 %v292
      %477 = vmatprep.subr.mxu0 0.0
      %478 = vmatpush1.msra.mxu0 %v293
      %479 = vmatprep.subr.mxu0 0.0
      %480 = vmatpush1.msra.mxu0 %v294
      %481 = vmatprep.subr.mxu0 0.0
      %482 = vmatpush1.msra.mxu0 %v295
      %483 = vmatprep.subr.mxu0 0.0
      %484 = vmatpush1.msra.mxu0 %v296
      %485 = vmatprep.subr.mxu0 0.0
      %486 = vmatpush1.msra.mxu0 %v297
      %487 = vmatprep.subr.mxu0 0.0
      %488 = vmatpush1.msra.mxu0 %v298
      %489 = vmatprep.subr.mxu0 0.0
      %490 = vmatpush1.msra.mxu0 %v299
      %491 = vmatprep.subr.mxu0 0.0
      %492 = vmatpush1.msra.mxu0 %v300
      %493 = vmatprep.subr.mxu0 0.0
      %494 = vmatpush1.msra.mxu0 %v301
      %495 = vmatprep.subr.mxu0 0.0
      %496 = vmatpush1.msra.mxu0 %v302
      %497 = vmatprep.mubr.f32.mxu0 %v228
      %498 = vmatmul.mubr.f32.gmra.mrb[0].mxu0 %v227
      %v499 = vpop.f32.mrb[0].mxu0
      %v500 = vadd.f32 %v425, %v499
      %v501 = vpop.f32.mrb[0].mxu0
      %502 = vmatprep.mubr.f32.mxu0 %v235
      %503 = vmatmul.mubr.f32.gmra.mrb[0].mxu0 %v234
      %v504 = vpop.f32.mrb[0].mxu0
      %v505 = vadd.f32 %v430, %v504
      %v506 = vpop.f32.mrb[0].mxu0
      %507 = vdwg.mxu0
      %508 = vmatprep.subr.mxu0 0.0
      %509 = vmatpush1.msra.mxu0 %v303
      %510 = vmatprep.subr.mxu0 0.0
      %511 = vmatpush1.msra.mxu0 %v304
      %512 = vmatprep.subr.mxu0 0.0
      %513 = vmatpush1.msra.mxu0 %v305
      %514 = vmatprep.subr.mxu0 0.0
      %515 = vmatpush1.msra.mxu0 %v306
      %516 = vmatprep.subr.mxu0 0.0
      %517 = vmatpush1.msra.mxu0 %v307
      %518 = vmatprep.subr.mxu0 0.0
      %519 = vmatpush1.msra.mxu0 %v308
      %520 = vmatprep.subr.mxu0 0.0
      %521 = vmatpush1.msra.mxu0 %v309
      %522 = vmatprep.subr.mxu0 0.0
      %523 = vmatpush1.msra.mxu0 %v310
      %524 = vmatprep.subr.mxu0 0.0
      %525 = vmatpush1.msra.mxu0 %v311
      %526 = vmatprep.subr.mxu0 0.0
      %527 = vmatpush1.msra.mxu0 %v312
      %528 = vmatprep.subr.mxu0 0.0
      %529 = vmatpush1.msra.mxu0 %v313
      %530 = vmatprep.subr.mxu0 0.0
      %531 = vmatpush1.msra.mxu0 %v314
      %532 = vmatprep.subr.mxu0 0.0
      %533 = vmatpush1.msra.mxu0 %v315
      %534 = vmatprep.subr.mxu0 0.0
      %535 = vmatpush1.msra.mxu0 %v316
      %536 = vmatprep.subr.mxu0 0.0
      %537 = vmatpush1.msra.mxu0 %v317
      %538 = vmatprep.subr.mxu0 0.0
      %539 = vmatpush1.msra.mxu0 %v318
      %540 = vmatprep.subr.mxu0 0.0
      %541 = vmatpush1.msra.mxu0 %v319
      %542 = vmatprep.subr.mxu0 0.0
      %543 = vmatpush1.msra.mxu0 %v320
      %544 = vmatprep.subr.mxu0 0.0
      %545 = vmatpush1.msra.mxu0 %v321
      %546 = vmatprep.subr.mxu0 0.0
      %547 = vmatpush1.msra.mxu0 %v322
      %548 = vmatprep.subr.mxu0 0.0
      %549 = vmatpush1.msra.mxu0 %v323
      %550 = vmatprep.subr.mxu0 0.0
      %551 = vmatpush1.msra.mxu0 %v324
      %552 = vmatprep.subr.mxu0 0.0
      %553 = vmatpush1.msra.mxu0 %v325
      %554 = vmatprep.subr.mxu0 0.0
      %555 = vmatpush1.msra.mxu0 %v326
      %556 = vmatprep.subr.mxu0 0.0
      %557 = vmatpush1.msra.mxu0 %v327
      %558 = vmatprep.subr.mxu0 0.0
      %559 = vmatpush1.msra.mxu0 %v328
      %560 = vmatprep.subr.mxu0 0.0
      %561 = vmatpush1.msra.mxu0 %v329
      %562 = vmatprep.subr.mxu0 0.0
      %563 = vmatpush1.msra.mxu0 %v330
      %564 = vmatprep.subr.mxu0 0.0
      %565 = vmatpush1.msra.mxu0 %v331
      %566 = vmatprep.subr.mxu0 0.0
      %567 = vmatpush1.msra.mxu0 %v332
      %568 = vmatprep.subr.mxu0 0.0
      %569 = vmatpush1.msra.mxu0 %v333
      %570 = vmatprep.subr.mxu0 0.0
      %571 = vmatpush1.msra.mxu0 %v334
      %572 = vmatprep.mubr.f32.mxu0 %v230
      %573 = vmatmul.mubr.f32.gmra.mrb[0].mxu0 %v229
      %v574 = vpop.f32.mrb[0].mxu0
      %v575 = vadd.f32 %v500, %v574
      %v576 = vpop.f32.mrb[0].mxu0
      %577 = vmatprep.mubr.f32.mxu0 %v237
      %578 = vmatmul.mubr.f32.gmra.mrb[0].mxu0 %v236
      %v579 = vpop.f32.mrb[0].mxu0
      %v580 = vadd.f32 %v505, %v579
      %v581 = vpop.f32.mrb[0].mxu0
      %582 = vdwg.mxu0
      %583 = vmatprep.subr.mxu0 0.0
      %584 = vmatpush1.msra.mxu0 %v335
      %585 = vmatprep.subr.mxu0 0.0
      %586 = vmatpush1.msra.mxu0 %v336
      %587 = vmatprep.subr.mxu0 0.0
      %588 = vmatpush1.msra.mxu0 %v337
      %589 = vmatprep.subr.mxu0 0.0
      %590 = vmatpush1.msra.mxu0 %v338
      %591 = vmatprep.subr.mxu0 0.0
      %592 = vmatpush1.msra.mxu0 0.0
      %593 = vmatprep.subr.mxu0 0.0
      %594 = vmatpush1.msra.mxu0 0.0
      %595 = vmatprep.subr.mxu0 0.0
      %596 = vmatpush1.msra.mxu0 0.0
      %597 = vmatprep.subr.mxu0 0.0
      %598 = vmatpush1.msra.mxu0 0.0
      %599 = vmatprep.subr.mxu0 0.0
      %600 = vmatpush1.msra.mxu0 0.0
      %601 = vmatprep.subr.mxu0 0.0
      %602 = vmatpush1.msra.mxu0 0.0
      %603 = vmatprep.subr.mxu0 0.0
      %604 = vmatpush1.msra.mxu0 0.0
      %605 = vmatprep.subr.mxu0 0.0
      %606 = vmatpush1.msra.mxu0 0.0
      %607 = vmatprep.subr.mxu0 0.0
      %608 = vmatpush1.msra.mxu0 0.0
      %609 = vmatprep.subr.mxu0 0.0
      %610 = vmatpush1.msra.mxu0 0.0
      %611 = vmatprep.subr.mxu0 0.0
      %612 = vmatpush1.msra.mxu0 0.0
      %613 = vmatprep.subr.mxu0 0.0
      %614 = vmatpush1.msra.mxu0 0.0
      %615 = vmatprep.subr.mxu0 0.0
      %616 = vmatpush1.msra.mxu0 0.0
      %617 = vmatprep.subr.mxu0 0.0
      %618 = vmatpush1.msra.mxu0 0.0
      %619 = vmatprep.subr.mxu0 0.0
      %620 = vmatpush1.msra.mxu0 0.0
      %621 = vmatprep.subr.mxu0 0.0
      %622 = vmatpush1.msra.mxu0 0.0
      %623 = vmatprep.subr.mxu0 0.0
      %624 = vmatpush1.msra.mxu0 0.0
      %625 = vmatprep.subr.mxu0 0.0
      %626 = vmatpush1.msra.mxu0 0.0
      %627 = vmatprep.subr.mxu0 0.0
      %628 = vmatpush1.msra.mxu0 0.0
      %629 = vmatprep.subr.mxu0 0.0
      %630 = vmatpush1.msra.mxu0 0.0
      %631 = vmatprep.subr.mxu0 0.0
      %632 = vmatpush1.msra.mxu0 0.0
      %633 = vmatprep.subr.mxu0 0.0
      %634 = vmatpush1.msra.mxu0 0.0
      %635 = vmatprep.subr.mxu0 0.0
      %636 = vmatpush1.msra.mxu0 0.0
      %637 = vmatprep.subr.mxu0 0.0
      %638 = vmatpush1.msra.mxu0 0.0
      %639 = vmatprep.subr.mxu0 0.0
      %640 = vmatpush1.msra.mxu0 0.0
      %641 = vmatprep.subr.mxu0 0.0
      %642 = vmatpush1.msra.mxu0 0.0
      %643 = vmatprep.subr.mxu0 0.0
      %644 = vmatpush1.msra.mxu0 0.0
      %645 = vmatprep.subr.mxu0 0.0
      %646 = vmatpush1.msra.mxu0 0.0
      %647 = vmatprep.mubr.f32.mxu0 0.0
      %648 = vmatmul.mubr.f32.gmra.mrb[0].mxu0 %v353
      %v649 = vpop.f32.mrb[0].mxu0
      %v650 = vadd.f32 %v575, %v649
      %v651 = vpop.f32.mrb[0].mxu0
      %652 = vmatprep.mubr.f32.mxu0 0.0
      %653 = vmatmul.mubr.f32.gmra.mrb[0].mxu0 %v356
      %v654 = vpop.f32.mrb[0].mxu0
      %v655 = vadd.f32 %v580, %v654
      %v656 = vpop.f32.mrb[0].mxu0
      %657 = vdwg.mxu0
      %vm658 = vcmask 990208
      %v659 = vsel %vm658, %v650, 0.0
      %660 = vadd.xlane.f32.xlu0 %v659
      %v661 = vpop.xlane.xlu0 %660
      %v662 = vsel %vm658, %v655, 0.0
      %663 = vadd.xlane.f32.xlu0 %v662
      %v664 = vpop.xlane.xlu0 %663
      %v665 = vrcp.pop 121.0
      %v666 = vmul.f32 %v661, %v665
      %v667 = vmul.f32 %v664, %v665
      %v668 = vadd.f32 %v666, %v667
      %v669 = vrot.slane %v668, 4
      %v670 = vadd.f32 %v668, %v669
      %v671 = vrot.slane %v670, 2
      %v672 = vadd.f32 %v670, %v671
      %v673 = vrot.slane %v672, 1
      %v674 = vadd.f32 %v672, %v673
      %v675 = vrcp.pop 16.0
      %v676 = vmul.f32 %v674, %v675
      %v677 = vsub.f32 %v650, %v676
      %v678 = vsub.f32 %v655, %v676
      %v679 = vmul.f32 %v677, %v677
      %v680 = vmul.f32 %v678, %v678
      %v681 = vsel %vm658, %v679, 0.0
      %682 = vadd.xlane.f32.xlu0 %v681
      %v683 = vpop.xlane.xlu0 %682
      %v684 = vsel %vm658, %v680, 0.0
      %685 = vadd.xlane.f32.xlu0 %v684
      %v686 = vpop.xlane.xlu0 %685
      %v687 = vmul.f32 %v683, %v665
      %v688 = vmul.f32 %v686, %v665
      %v689 = vadd.f32 %v687, %v688
      %v690 = vrot.slane %v689, 4
      %v691 = vadd.f32 %v689, %v690
      %v692 = vrot.slane %v691, 2
      %v693 = vadd.f32 %v691, %v692
      %v694 = vrot.slane %v693, 1
      %v695 = vadd.f32 %v693, %v694
      %v696 = vmul.f32 %v695, %v675
      %v697 = vadd.f32 %v696, 1e-05
      %v698 = vrsqrt.pop %v697
      %v699 = vmul.f32 %v677, %v698
      %v700 = vmul.f32 %v678, %v698
      %v701 = vld [vmem:[%s3] sm:$0xff]
      %v702 = vld [vmem:[%s3 + $0x8] sm:$0xff]
      %v703 = vmul.f32 %v699, %v701
      %v704 = vmul.f32 %v700, %v702
      %v705 = vld [vmem:[%s4] sm:$0xff]
      %v706 = vld [vmem:[%s4 + $0x8] sm:$0xff]
      %v707 = vadd.f32 %v703, %v705
      %v708 = vadd.f32 %v704, %v706
      %v709 = vmax.f32 %v707, 0.0
      %v710 = vmax.f32 %v708, 0.0
      %711 = vst.msk [vmem:[%s224] sm:$0xff] %vm658, %v709
      %712 = vst.msk [vmem:[%s224 + $0x8] sm:$0xff] %vm658, %v710
      %p713 = scmp.lt.s32.totalorder %s16, 5
      %s714 = scalar_select %p713, %s16, 5
      %s715 = smul.addr %s714, 2
      %s716 = smul.addr %s715, 8
      %s717 = scalar_lea.vmem %s5, %s716
      // Predicated region
      $region41: #{rnn_forward.9} parent=39 // pred_check
        %p718 = pneg %p144
      $region42: #{rnn_forward.9} parent=39 // pred_check_branch
        %720 = sbr.rel (%p718) target = $region44
      $region43: #{rnn_forward.9} parent=39 // pred_region
        _
      $region44: #{rnn_forward.9} parent=39 // pred_fallthru
        _
    $region40: #{rnn_forward.9} parent=5 // pred_fallthru
      _
    %p721 = scmp.le.s32.totalorder 2, %s11
    // Predicated region
    $region45: #{rnn_forward.9} parent=5 // pred_check
      %p722 = pneg %p721
    $region46: #{rnn_forward.9} parent=5 // pred_check_branch
      %724 = sbr.rel (%p722) target = $region48
    $region47: #{rnn_forward.9} parent=5 // pred_region
      %s725 = ssub.s32 %s11, 2
      // Predicated region
      $region49: #{rnn_forward.9} parent=47 // pred_check
        %p726 = pneg %p150
      $region50: #{rnn_forward.9} parent=47 // pred_check_branch
        %728 = sbr.rel (%p726) target = $region52
      $region51: #{rnn_forward.9} parent=47 // pred_region
        %p729 = scmp.lt.s32.totalorder %s17, 5
        %s730 = scalar_select %p729, %s17, 5
        %s731 = smul.addr %s730, 2
        %s732 = smul.addr %s731, 8
        %s733 = scalar_lea.vmem %s5, %s732
      $region52: #{rnn_forward.9} parent=47 // pred_fallthru
        _
    $region48: #{rnn_forward.9} parent=5 // pred_fallthru
      _
  $region6: #{rnn_forward.9} parent=0 // loop_footer
    %s15 = sadd.s32 1, %s11
  $region7: #{rnn_forward.9} parent=0 // loop_footer_branch
    %10 = sbr.rel target = $region3
  $region8: #{rnn_forward.9} parent=0 // loop_exit
    _

// kernel: rnn_forward.10
$region0: #{rnn_forward.10}
  #allocation0 [shape = 'u32[]', space=smem, size = 0x4, offset = 0x4, fixed_abs, tag = 'smem constant byte address 0x4 - core index']
  #allocation1 [shape = 'u32[144,128]{1,0:T(1,128)}', space=vmem, size = 0x12000, scoped, tag = 'internal scratch']
  %s0 = inlined_call_operand.vmem [shape: f32[6,144,529], index: 0, kind: input, shape index: {}]
  %s1 = inlined_call_operand.vmem [shape: f32[12,144], index: 1, kind: input, shape index: {}]
  %s2 = inlined_call_operand.vmem [shape: f32[12,1], index: 2, kind: input, shape index: {}]
  %s3 = inlined_call_operand.vmem [shape: f32[12,529], index: 3, kind: input, shape index: {}]
  %s4 = inlined_call_operand.vmem [shape: f32[12,529], index: 4, kind: input, shape index: {}]
  %s5 = inlined_call_operand.vmem [shape: f32[6,12,529], index: 5, kind: output, shape index: {}]
  %s6 = sld [smem:[#allocation0]]
  $region53: #{rnn_forward.10} parent=0
    _
  %s8 = ssub.s32 1, %s6
  %s9 = scalar_select 0, %s8, %s6
  loop: start=0, step=1, limit=8
  $region2: #{rnn_forward.10} parent=0 // loop_pre_header
    _
  $region3: #{rnn_forward.10} parent=0 // loop_header
    %s11 = sphi 0, %s15
    %p12 = scmp.ge.s32.totalorder %s11, 8
    %s21 = sphi 0, %s23
    %s24 = sphi 0, %s21
    %s25 = sphi 0, %s24
    %s41 = sphi 0, %s25
    %s45 = sphi 0, %s45
    %s47 = sphi 0, %s45
    %s48 = sphi 0, %s47
    %s62 = sphi 0, %s48
    %s66 = sphi 0, %s66
    %s68 = sphi 0, %s66
    %s69 = sphi 0, %s68
    %s83 = sphi 0, %s69
    %s87 = sphi 0, %s87
    %s89 = sphi 0, %s87
    %s90 = sphi 0, %s89
    %s104 = sphi 0, %s90
    %s108 = sphi 0, %s108
    %s110 = sphi 0, %s108
    %s111 = sphi 0, %s110
    %s125 = sphi 0, %s111
    %s131 = sphi 0, %s133
    %s134 = sphi 0, %s131
    %s135 = sphi 0, %s134
    %s151 = sphi 0, %s135
  $region4: #{rnn_forward.10} parent=0 // loop_header_branch
    %14 = sbr.rel (%p12) target = $region8
  $region5: #{rnn_forward.10} parent=0 // loop_body
    %s16 = ssub.s32 %s11, 1
    %s17 = ssub.s32 %s11, 2
    %s18 = sadd.s32 %s11, 1
    %s19 = ssub.s32 %s11, %s18
    %p20 = scmp.eq.s32.totalorder %s19, 0
    %s22 = sadd.s32 %s21, 1
    %s23 = scalar_select %p20, %s21, %s22
    %p26 = pneg %p20
    %p27 = scmp.eq.s32.totalorder %s11, 5
    %p28 = por %p26, %p27
    %p29 = scmp.ne.s32.totalorder %s21, %s24
    %p30 = scmp.eq.s32.totalorder %s11, 0
    %p31 = por %p29, %p30
    %p32 = scmp.ne.s32.totalorder %s21, %s24
    %p33 = scmp.eq.s32.totalorder %s16, 5
    %p34 = por %p32, %p33
    %p35 = scmp.ne.s32.totalorder %s24, %s25
    %p36 = scmp.eq.s32.totalorder %s16, 0
    %p37 = por %p35, %p36
    %p38 = scmp.ne.s32.totalorder %s24, %s25
    %p39 = scmp.eq.s32.totalorder %s17, 5
    %p40 = por %p38, %p39
    %p42 = scmp.ne.s32.totalorder %s25, %s41
    %p43 = scmp.eq.s32.totalorder %s17, 0
    %p44 = por %p42, %p43
    %s46 = sadd.s32 %s45, 1
    %p49 = scmp.eq.s32.totalorder %s11, 5
    %p50 = scmp.ne.s32.totalorder %s45, %s47
    %p51 = scmp.eq.s32.totalorder %s11, 0
    %p52 = por %p50, %p51
    %p53 = scmp.ne.s32.totalorder %s45, %s47
    %p54 = scmp.eq.s32.totalorder %s16, 5
    %p55 = por %p53, %p54
    %p56 = scmp.ne.s32.totalorder %s47, %s48
    %p57 = scmp.eq.s32.totalorder %s16, 0
    %p58 = por %p56, %p57
    %p59 = scmp.ne.s32.totalorder %s47, %s48
    %p60 = scmp.eq.s32.totalorder %s17, 5
    %p61 = por %p59, %p60
    %p63 = scmp.ne.s32.totalorder %s48, %s62
    %p64 = scmp.eq.s32.totalorder %s17, 0
    %p65 = por %p63, %p64
    %s67 = sadd.s32 %s66, 1
    %p70 = scmp.eq.s32.totalorder %s11, 5
    %p71 = scmp.ne.s32.totalorder %s66, %s68
    %p72 = scmp.eq.s32.totalorder %s11, 0
    %p73 = por %p71, %p72
    %p74 = scmp.ne.s32.totalorder %s66, %s68
    %p75 = scmp.eq.s32.totalorder %s16, 5
    %p76 = por %p74, %p75
    %p77 = scmp.ne.s32.totalorder %s68, %s69
    %p78 = scmp.eq.s32.totalorder %s16, 0
    %p79 = por %p77, %p78
    %p80 = scmp.ne.s32.totalorder %s68, %s69
    %p81 = scmp.eq.s32.totalorder %s17, 5
    %p82 = por %p80, %p81
    %p84 = scmp.ne.s32.totalorder %s69, %s83
    %p85 = scmp.eq.s32.totalorder %s17, 0
    %p86 = por %p84, %p85
    %s88 = sadd.s32 %s87, 1
    %p91 = scmp.eq.s32.totalorder %s11, 5
    %p92 = scmp.ne.s32.totalorder %s87, %s89
    %p93 = scmp.eq.s32.totalorder %s11, 0
    %p94 = por %p92, %p93
    %p95 = scmp.ne.s32.totalorder %s87, %s89
    %p96 = scmp.eq.s32.totalorder %s16, 5
    %p97 = por %p95, %p96
    %p98 = scmp.ne.s32.totalorder %s89, %s90
    %p99 = scmp.eq.s32.totalorder %s16, 0
    %p100 = por %p98, %p99
    %p101 = scmp.ne.s32.totalorder %s89, %s90
    %p102 = scmp.eq.s32.totalorder %s17, 5
    %p103 = por %p101, %p102
    %p105 = scmp.ne.s32.totalorder %s90, %s104
    %p106 = scmp.eq.s32.totalorder %s17, 0
    %p107 = por %p105, %p106
    %s109 = sadd.s32 %s108, 1
    %p112 = scmp.eq.s32.totalorder %s11, 5
    %p113 = scmp.ne.s32.totalorder %s108, %s110
    %p114 = scmp.eq.s32.totalorder %s11, 0
    %p115 = por %p113, %p114
    %p116 = scmp.ne.s32.totalorder %s108, %s110
    %p117 = scmp.eq.s32.totalorder %s16, 5
    %p118 = por %p116, %p117
    %p119 = scmp.ne.s32.totalorder %s110, %s111
    %p120 = scmp.eq.s32.totalorder %s16, 0
    %p121 = por %p119, %p120
    %p122 = scmp.ne.s32.totalorder %s110, %s111
    %p123 = scmp.eq.s32.totalorder %s17, 5
    %p124 = por %p122, %p123
    %p126 = scmp.ne.s32.totalorder %s111, %s125
    %p127 = scmp.eq.s32.totalorder %s17, 0
    %p128 = por %p126, %p127
    %s129 = ssub.s32 %s11, %s18
    %p130 = scmp.eq.s32.totalorder %s129, 0
    %s132 = sadd.s32 %s131, 1
    %s133 = scalar_select %p130, %s131, %s132
    %p136 = pneg %p130
    %p137 = scmp.eq.s32.totalorder %s11, 5
    %p138 = por %p136, %p137
    %p139 = scmp.ne.s32.totalorder %s131, %s134
    %p140 = scmp.eq.s32.totalorder %s11, 0
    %p141 = por %p139, %p140
    %p142 = scmp.ne.s32.totalorder %s131, %s134
    %p143 = scmp.eq.s32.totalorder %s16, 5
    %p144 = por %p142, %p143
    %p145 = scmp.ne.s32.totalorder %s134, %s135
    %p146 = scmp.eq.s32.totalorder %s16, 0
    %p147 = por %p145, %p146
    %p148 = scmp.ne.s32.totalorder %s134, %s135
    %p149 = scmp.eq.s32.totalorder %s17, 5
    %p150 = por %p148, %p149
    %p152 = scmp.ne.s32.totalorder %s135, %s151
    %p153 = scmp.eq.s32.totalorder %s17, 0
    %p154 = por %p152, %p153
    %p155 = scmp.le.s32.totalorder 1, %s11
    %p156 = scmp.lt.s32.totalorder %s11, 7
    %p157 = pnand %p155, %p156
    %p158 = pneg %p157
    // Predicated region
    $region9: #{rnn_forward.10} parent=5 // pred_check
      _
    $region10: #{rnn_forward.10} parent=5 // pred_check_branch
      %160 = sbr.rel (%p157) target = $region12
    $region11: #{rnn_forward.10} parent=5 // pred_region
      %s161 = ssub.s32 %s11, 1
      // Predicated region
      $region13: #{rnn_forward.10} parent=11 // pred_check
        %p162 = pneg %p58
      $region14: #{rnn_forward.10} parent=11 // pred_check_branch
        %164 = sbr.rel (%p162) target = $region16
      $region15: #{rnn_forward.10} parent=11 // pred_region
        _
      $region16: #{rnn_forward.10} parent=11 // pred_fallthru
        _
      // Predicated region
      $region17: #{rnn_forward.10} parent=11 // pred_check
        %p165 = pneg %p79
      $region18: #{rnn_forward.10} parent=11 // pred_check_branch
        %167 = sbr.rel (%p165) target = $region20
      $region19: #{rnn_forward.10} parent=11 // pred_region
        _
      $region20: #{rnn_forward.10} parent=11 // pred_fallthru
        _
      // Predicated region
      $region21: #{rnn_forward.10} parent=11 // pred_check
        %p168 = pneg %p100
      $region22: #{rnn_forward.10} parent=11 // pred_check_branch
        %170 = sbr.rel (%p168) target = $region24
      $region23: #{rnn_forward.10} parent=11 // pred_region
        _
      $region24: #{rnn_forward.10} parent=11 // pred_fallthru
        _
      // Predicated region
      $region25: #{rnn_forward.10} parent=11 // pred_check
        %p171 = pneg %p121
      $region26: #{rnn_forward.10} parent=11 // pred_check_branch
        %173 = sbr.rel (%p171) target = $region28
      $region27: #{rnn_forward.10} parent=11 // pred_region
        _
      $region28: #{rnn_forward.10} parent=11 // pred_fallthru
        _
    $region12: #{rnn_forward.10} parent=5 // pred_fallthru
      _
    %p174 = scmp.lt.s32.totalorder %s11, 6
    // Predicated region
    $region29: #{rnn_forward.10} parent=5 // pred_check
      %p175 = pneg %p174
    $region30: #{rnn_forward.10} parent=5 // pred_check_branch
      %177 = sbr.rel (%p175) target = $region32
    $region31: #{rnn_forward.10} parent=5 // pred_region
      // Predicated region
      $region33: #{rnn_forward.10} parent=31 // pred_check
        %p178 = pneg %p31
      $region34: #{rnn_forward.10} parent=31 // pred_check_branch
        %180 = sbr.rel (%p178) target = $region36
      $region35: #{rnn_forward.10} parent=31 // pred_region
        %p181 = scmp.lt.s32.totalorder %s11, 5
        %s182 = scalar_select %p181, %s11, 5
        %s183 = smul.addr %s182, 90
        %s184 = smul.addr %s183, 8
        %s185 = scalar_lea.vmem %s0, %s184
      $region36: #{rnn_forward.10} parent=31 // pred_fallthru
        _
    $region32: #{rnn_forward.10} parent=5 // pred_fallthru
      _
    %p186 = scmp.le.s32.totalorder 1, %s11
    %p187 = scmp.lt.s32.totalorder %s11, 7
    %p188 = pnand %p186, %p187
    %p189 = pneg %p188
    // Predicated region
    $region37: #{rnn_forward.10} parent=5 // pred_check
      _
    $region38: #{rnn_forward.10} parent=5 // pred_check_branch
      %191 = sbr.rel (%p188) target = $region40
    $region39: #{rnn_forward.10} parent=5 // pred_region
      %s192 = ssub.s32 %s11, 1
      %p193 = scmp.lt.s32.totalorder %s16, 5
      %s194 = scalar_select %p193, %s16, 5
      %s195 = smul.addr %s194, 90
      %s196 = smul.addr %s195, 8
      %s197 = scalar_lea.vmem %s0, %s196
      %p198 = pneg %p37
      %p199 = pneg %p34
      %p200 = pneg %p58
      %p201 = pneg %p55
      %p202 = pneg %p79
      %p203 = pneg %p76
      %p204 = pneg %p100
      %p205 = pneg %p97
      %p206 = pneg %p121
      %p207 = pneg %p118
      %p208 = pneg %p147
      %p209 = pneg %p144
      %p210 = scmp.lt.s32.totalorder %s16, 5
      %s211 = scalar_select %p210, %s16, 5
      %s212 = smul.addr %s211, 10
      %s213 = smul.addr %s212, 8
      %s214 = scalar_lea.vmem %s5, %s213
      %p215 = scmp.lt.s32.totalorder %s16, 5
      %s216 = scalar_select %p215, %s16, 5
      %s217 = smul.addr %s216, 90
      %s218 = smul.addr %s217, 8
      %s219 = scalar_lea.vmem %s0, %s218
      %p220 = scmp.lt.s32.totalorder %s16, 5
      %s221 = scalar_select %p220, %s16, 5
      %s222 = smul.addr %s221, 10
      %s223 = smul.addr %s222, 8
      %s224 = scalar_lea.vmem %s5, %s223
      %v225 = vld [vmem:[%s1] sm:$0xff]
      %v226 = vld [vmem:[%s1 + $0x8] sm:$0xff]
      %v227 = vld [vmem:[%s1 + $0x10] sm:$0xf]
      %v228 = vld [vmem:[%s1 + $0x18] sm:$0xf]
      %v229 = vld [vmem:[%s219] sm:$0xff]
      %v230 = vld [vmem:[%s219 + $0x8] sm:$0xff]
      %v231 = vld [vmem:[%s219 + $0x10] sm:$0xff]
      %v232 = vld [vmem:[%s219 + $0x18] sm:$0xff]
      %v233 = vld [vmem:[%s219 + $0x20] sm:$0xff]
      %v234 = vld [vmem:[%s219 + $0x28] sm:$0xff]
      %v235 = vld [vmem:[%s219 + $0x30] sm:$0xff]
      %v236 = vld [vmem:[%s219 + $0x38] sm:$0xff]
      %v237 = vld [vmem:[%s219 + $0x40] sm:$0xff]
      %v238 = vld [vmem:[%s219 + $0x48] sm:$0xff]
      %v239 = vld [vmem:[%s219 + $0x50] sm:$0xff]
      %v240 = vld [vmem:[%s219 + $0x58] sm:$0xff]
      %v241 = vld [vmem:[%s219 + $0x60] sm:$0xff]
      %v242 = vld [vmem:[%s219 + $0x68] sm:$0xff]
      %v243 = vld [vmem:[%s219 + $0x70] sm:$0xff]
      %v244 = vld [vmem:[%s219 + $0x78] sm:$0xff]
      %v245 = vld [vmem:[%s219 + $0x80] sm:$0xff]
      %v246 = vld [vmem:[%s219 + $0x88] sm:$0xff]
      %v247 = vld [vmem:[%s219 + $0x90] sm:$0xff]
      %v248 = vld [vmem:[%s219 + $0x98] sm:$0xff]
      %v249 = vld [vmem:[%s219 + $0xa0] sm:$0xff]
      %v250 = vld [vmem:[%s219 + $0xa8] sm:$0xff]
      %v251 = vld [vmem:[%s219 + $0xb0] sm:$0xff]
      %v252 = vld [vmem:[%s219 + $0xb8] sm:$0xff]
      %v253 = vld [vmem:[%s219 + $0xc0] sm:$0xff]
      %v254 = vld [vmem:[%s219 + $0xc8] sm:$0xff]
      %v255 = vld [vmem:[%s219 + $0xd0] sm:$0xff]
      %v256 = vld [vmem:[%s219 + $0xd8] sm:$0xff]
      %v257 = vld [vmem:[%s219 + $0xe0] sm:$0xff]
      %v258 = vld [vmem:[%s219 + $0xe8] sm:$0xff]
      %v259 = vld [vmem:[%s219 + $0xf0] sm:$0xff]
      %v260 = vld [vmem:[%s219 + $0xf8] sm:$0xff]
      %v261 = vld [vmem:[%s219 + $0x100] sm:$0xff]
      %v262 = vld [vmem:[%s219 + $0x108] sm:$0xff]
      %v263 = vld [vmem:[%s219 + $0x110] sm:$0xff]
      %v264 = vld [vmem:[%s219 + $0x118] sm:$0xff]
      %v265 = vld [vmem:[%s219 + $0x120] sm:$0xff]
      %v266 = vld [vmem:[%s219 + $0x128] sm:$0xff]
      %v267 = vld [vmem:[%s219 + $0x130] sm:$0xff]
      %v268 = vld [vmem:[%s219 + $0x138] sm:$0xff]
      %v269 = vld [vmem:[%s219 + $0x140] sm:$0xff]
      %v270 = vld [vmem:[%s219 + $0x148] sm:$0xff]
      %v271 = vld [vmem:[%s219 + $0x150] sm:$0xff]
      %v272 = vld [vmem:[%s219 + $0x158] sm:$0xff]
      %v273 = vld [vmem:[%s219 + $0x160] sm:$0xff]
      %v274 = vld [vmem:[%s219 + $0x168] sm:$0xff]
      %v275 = vld [vmem:[%s219 + $0x170] sm:$0xff]
      %v276 = vld [vmem:[%s219 + $0x178] sm:$0xff]
      %v277 = vld [vmem:[%s219 + $0x180] sm:$0xff]
      %v278 = vld [vmem:[%s219 + $0x188] sm:$0xff]
      %v279 = vld [vmem:[%s219 + $0x190] sm:$0xff]
      %v280 = vld [vmem:[%s219 + $0x198] sm:$0xff]
      %v281 = vld [vmem:[%s219 + $0x1a0] sm:$0xff]
      %v282 = vld [vmem:[%s219 + $0x1a8] sm:$0xff]
      %v283 = vld [vmem:[%s219 + $0x1b0] sm:$0xff]
      %v284 = vld [vmem:[%s219 + $0x1b8] sm:$0xff]
      %v285 = vld [vmem:[%s219 + $0x1c0] sm:$0xff]
      %v286 = vld [vmem:[%s219 + $0x1c8] sm:$0xff]
      %v287 = vld [vmem:[%s219 + $0x1d0] sm:$0xff]
      %v288 = vld [vmem:[%s219 + $0x1d8] sm:$0xff]
      %v289 = vld [vmem:[%s219 + $0x1e0] sm:$0xff]
      %v290 = vld [vmem:[%s219 + $0x1e8] sm:$0xff]
      %v291 = vld [vmem:[%s219 + $0x1f0] sm:$0xff]
      %v292 = vld [vmem:[%s219 + $0x1f8] sm:$0xff]
      %v293 = vld [vmem:[%s219 + $0x200] sm:$0xff]
      %v294 = vld [vmem:[%s219 + $0x208] sm:$0xff]
      %v295 = vld [vmem:[%s219 + $0x210] sm:$0xff]
      %v296 = vld [vmem:[%s219 + $0x218] sm:$0xff]
      %v297 = vld [vmem:[%s219 + $0x220] sm:$0xff]
      %v298 = vld [vmem:[%s219 + $0x228] sm:$0xff]
      %v299 = vld [vmem:[%s219 + $0x230] sm:$0xff]
      %v300 = vld [vmem:[%s219 + $0x238] sm:$0xff]
      %v301 = vld [vmem:[%s219 + $0x240] sm:$0xff]
      %v302 = vld [vmem:[%s219 + $0x248] sm:$0xff]
      %v303 = vld [vmem:[%s219 + $0x250] sm:$0xff]
      %v304 = vld [vmem:[%s219 + $0x258] sm:$0xff]
      %v305 = vld [vmem:[%s219 + $0x260] sm:$0xff]
      %v306 = vld [vmem:[%s219 + $0x268] sm:$0xff]
      %v307 = vld [vmem:[%s219 + $0x270] sm:$0xff]
      %v308 = vld [vmem:[%s219 + $0x278] sm:$0xff]
      %v309 = vld [vmem:[%s219 + $0x280] sm:$0xff]
      %v310 = vld [vmem:[%s219 + $0x288] sm:$0xff]
      %v311 = vld [vmem:[%s219 + $0x290] sm:$0xff]
      %v312 = vld [vmem:[%s219 + $0x298] sm:$0xff]
      %v313 = vld [vmem:[%s219 + $0x2a0] sm:$0xff]
      %v314 = vld [vmem:[%s219 + $0x2a8] sm:$0xff]
      %v315 = vld [vmem:[%s219 + $0x2b0] sm:$0xff]
      %v316 = vld [vmem:[%s219 + $0x2b8] sm:$0xff]
      %v317 = vld [vmem:[%s219 + $0x2c0] sm:$0xff]
      %v318 = vld [vmem:[%s219 + $0x2c8] sm:$0xff]
      %v319 = vld [vmem:[%s2] sm:$0xff]
      %v320 = vld [vmem:[%s2 + $0x8] sm:$0xf]
      %322 = vset.pattern.permute.xlu0 0
      %323 = vperm.xlu0 %322, %v319
      %v324 = vpop.permute.xlu0 %323
      %327 = vset.pattern.permute.xlu0 0
      %328 = vperm.xlu0 %327, %v320
      %v329 = vpop.permute.xlu0 %328
      %vm331 = vcmask 130048
      %v333 = vsel %vm331, %v226, 0
      %v336 = vsel %vm331, %v228, 0
      %338 = vmatprep.subr.mxu0 %v230
      %339 = vmatpush1.msra.mxu0 %v229
      %340 = vmatprep.subr.mxu0 %v235
      %341 = vmatpush1.msra.mxu0 %v234
      %342 = vmatprep.subr.mxu0 %v240
      %343 = vmatpush1.msra.mxu0 %v239
      %344 = vmatprep.subr.mxu0 %v245
      %345 = vmatpush1.msra.mxu0 %v244
      %346 = vmatprep.subr.mxu0 %v250
      %347 = vmatpush1.msra.mxu0 %v249
      %348 = vmatprep.subr.mxu0 %v255
      %349 = vmatpush1.msra.mxu0 %v254
      %350 = vmatprep.subr.mxu0 %v260
      %351 = vmatpush1.msra.mxu0 %v259
      %352 = vmatprep.subr.mxu0 %v265
      %353 = vmatpush1.msra.mxu0 %v264
      %354 = vmatprep.subr.mxu0 %v270
      %355 = vmatpush1.msra.mxu0 %v269
      %356 = vmatprep.subr.mxu0 %v275
      %357 = vmatpush1.msra.mxu0 %v274
      %358 = vmatprep.subr.mxu0 %v280
      %359 = vmatpush1.msra.mxu0 %v279
      %360 = vmatprep.subr.mxu0 %v285
      %361 = vmatpush1.msra.mxu0 %v284
      %362 = vmatprep.subr.mxu0 %v290
      %363 = vmatpush1.msra.mxu0 %v289
      %364 = vmatprep.subr.mxu0 %v295
      %365 = vmatpush1.msra.mxu0 %v294
      %366 = vmatprep.subr.mxu0 %v300
      %367 = vmatpush1.msra.mxu0 %v299
      %368 = vmatprep.subr.mxu0 %v305
      %369 = vmatpush1.msra.mxu0 %v304
      %370 = vmatprep.subr.mxu0 %v310
      %371 = vmatpush1.msra.mxu0 %v309
      %372 = vmatprep.subr.mxu0 %v315
      %373 = vmatpush1.msra.mxu0 %v314
      %374 = vmatprep.subr.mxu0 0.0
      %375 = vmatpush1.msra.mxu0 0.0
      %376 = vmatprep.subr.mxu0 0.0
      %377 = vmatpush1.msra.mxu0 0.0
      %378 = vmatprep.subr.mxu0 0.0
      %379 = vmatpush1.msra.mxu0 0.0
      %380 = vmatprep.subr.mxu0 0.0
      %381 = vmatpush1.msra.mxu0 0.0
      %382 = vmatprep.subr.mxu0 0.0
      %383 = vmatpush1.msra.mxu0 0.0
      %384 = vmatprep.subr.mxu0 0.0
      %385 = vmatpush1.msra.mxu0 0.0
      %386 = vmatprep.subr.mxu0 0.0
      %387 = vmatpush1.msra.mxu0 0.0
      %388 = vmatprep.subr.mxu0 0.0
      %389 = vmatpush1.msra.mxu0 0.0
      %390 = vmatprep.subr.mxu0 0.0
      %391 = vmatpush1.msra.mxu0 0.0
      %392 = vmatprep.subr.mxu0 0.0
      %393 = vmatpush1.msra.mxu0 0.0
      %394 = vmatprep.subr.mxu0 0.0
      %395 = vmatpush1.msra.mxu0 0.0
      %396 = vmatprep.subr.mxu0 0.0
      %397 = vmatpush1.msra.mxu0 0.0
      %398 = vmatprep.subr.mxu0 0.0
      %399 = vmatpush1.msra.mxu0 0.0
      %400 = vmatprep.subr.mxu0 0.0
      %401 = vmatpush1.msra.mxu0 0.0
      %402 = vmatprep.mubr.f32.mxu0 %v333
      %403 = vmatmul.mubr.f32.gmra.mrb[0].mxu0 %v225
      %v404 = vpop.f32.mrb[0].mxu0
      %v405 = vadd.f32 %v324, %v404
      %v406 = vpop.f32.mrb[0].mxu0
      %v407 = vadd.f32 %v324, %v406
      %408 = vmatprep.mubr.f32.mxu0 %v336
      %409 = vmatmul.mubr.f32.gmra.mrb[0].mxu0 %v227
      %v410 = vpop.f32.mrb[0].mxu0
      %v411 = vadd.f32 %v329, %v410
      %v412 = vpop.f32.mrb[0].mxu0
      %v413 = vadd.f32 %v329, %v412
      %414 = vdwg.mxu0
      %415 = vmatprep.subr.mxu0 %v232
      %416 = vmatpush1.msra.mxu0 %v231
      %417 = vmatprep.subr.mxu0 %v237
      %418 = vmatpush1.msra.mxu0 %v236
      %419 = vmatprep.subr.mxu0 %v242
      %420 = vmatpush1.msra.mxu0 %v241
      %421 = vmatprep.subr.mxu0 %v247
      %422 = vmatpush1.msra.mxu0 %v246
      %423 = vmatprep.subr.mxu0 %v252
      %424 = vmatpush1.msra.mxu0 %v251
      %425 = vmatprep.subr.mxu0 %v257
      %426 = vmatpush1.msra.mxu0 %v256
      %427 = vmatprep.subr.mxu0 %v262
      %428 = vmatpush1.msra.mxu0 %v261
      %429 = vmatprep.subr.mxu0 %v267
      %430 = vmatpush1.msra.mxu0 %v266
      %431 = vmatprep.subr.mxu0 %v272
      %432 = vmatpush1.msra.mxu0 %v271
      %433 = vmatprep.subr.mxu0 %v277
      %434 = vmatpush1.msra.mxu0 %v276
      %435 = vmatprep.subr.mxu0 %v282
      %436 = vmatpush1.msra.mxu0 %v281
      %437 = vmatprep.subr.mxu0 %v287
      %438 = vmatpush1.msra.mxu0 %v286
      %439 = vmatprep.subr.mxu0 %v292
      %440 = vmatpush1.msra.mxu0 %v291
      %441 = vmatprep.subr.mxu0 %v297
      %442 = vmatpush1.msra.mxu0 %v296
      %443 = vmatprep.subr.mxu0 %v302
      %444 = vmatpush1.msra.mxu0 %v301
      %445 = vmatprep.subr.mxu0 %v307
      %446 = vmatpush1.msra.mxu0 %v306
      %447 = vmatprep.subr.mxu0 %v312
      %448 = vmatpush1.msra.mxu0 %v311
      %449 = vmatprep.subr.mxu0 %v317
      %450 = vmatpush1.msra.mxu0 %v316
      %451 = vmatprep.subr.mxu0 0.0
      %452 = vmatpush1.msra.mxu0 0.0
      %453 = vmatprep.subr.mxu0 0.0
      %454 = vmatpush1.msra.mxu0 0.0
      %455 = vmatprep.subr.mxu0 0.0
      %456 = vmatpush1.msra.mxu0 0.0
      %457 = vmatprep.subr.mxu0 0.0
      %458 = vmatpush1.msra.mxu0 0.0
      %459 = vmatprep.subr.mxu0 0.0
      %460 = vmatpush1.msra.mxu0 0.0
      %461 = vmatprep.subr.mxu0 0.0
      %462 = vmatpush1.msra.mxu0 0.0
      %463 = vmatprep.subr.mxu0 0.0
      %464 = vmatpush1.msra.mxu0 0.0
      %465 = vmatprep.subr.mxu0 0.0
      %466 = vmatpush1.msra.mxu0 0.0
      %467 = vmatprep.subr.mxu0 0.0
      %468 = vmatpush1.msra.mxu0 0.0
      %469 = vmatprep.subr.mxu0 0.0
      %470 = vmatpush1.msra.mxu0 0.0
      %471 = vmatprep.subr.mxu0 0.0
      %472 = vmatpush1.msra.mxu0 0.0
      %473 = vmatprep.subr.mxu0 0.0
      %474 = vmatpush1.msra.mxu0 0.0
      %475 = vmatprep.subr.mxu0 0.0
      %476 = vmatpush1.msra.mxu0 0.0
      %477 = vmatprep.subr.mxu0 0.0
      %478 = vmatpush1.msra.mxu0 0.0
      %479 = vmatprep.mubr.f32.mxu0 %v333
      %480 = vmatmul.mubr.f32.gmra.mrb[0].mxu0 %v225
      %v481 = vpop.f32.mrb[0].mxu0
      %v482 = vadd.f32 %v324, %v481
      %v483 = vpop.f32.mrb[0].mxu0
      %v484 = vadd.f32 %v324, %v483
      %485 = vmatprep.mubr.f32.mxu0 %v336
      %486 = vmatmul.mubr.f32.gmra.mrb[0].mxu0 %v227
      %v487 = vpop.f32.mrb[0].mxu0
      %v488 = vadd.f32 %v329, %v487
      %v489 = vpop.f32.mrb[0].mxu0
      %v490 = vadd.f32 %v329, %v489
      %491 = vdwg.mxu0
      %492 = vmatprep.subr.mxu0 0.0
      %493 = vmatpush1.msra.mxu0 %v233
      %494 = vmatprep.subr.mxu0 0.0
      %495 = vmatpush1.msra.mxu0 %v238
      %496 = vmatprep.subr.mxu0 0.0
      %497 = vmatpush1.msra.mxu0 %v243
      %498 = vmatprep.subr.mxu0 0.0
      %499 = vmatpush1.msra.mxu0 %v248
      %500 = vmatprep.subr.mxu0 0.0
      %501 = vmatpush1.msra.mxu0 %v253
      %502 = vmatprep.subr.mxu0 0.0
      %503 = vmatpush1.msra.mxu0 %v258
      %504 = vmatprep.subr.mxu0 0.0
      %505 = vmatpush1.msra.mxu0 %v263
      %506 = vmatprep.subr.mxu0 0.0
      %507 = vmatpush1.msra.mxu0 %v268
      %508 = vmatprep.subr.mxu0 0.0
      %509 = vmatpush1.msra.mxu0 %v273
      %510 = vmatprep.subr.mxu0 0.0
      %511 = vmatpush1.msra.mxu0 %v278
      %512 = vmatprep.subr.mxu0 0.0
      %513 = vmatpush1.msra.mxu0 %v283
      %514 = vmatprep.subr.mxu0 0.0
      %515 = vmatpush1.msra.mxu0 %v288
      %516 = vmatprep.subr.mxu0 0.0
      %517 = vmatpush1.msra.mxu0 %v293
      %518 = vmatprep.subr.mxu0 0.0
      %519 = vmatpush1.msra.mxu0 %v298
      %520 = vmatprep.subr.mxu0 0.0
      %521 = vmatpush1.msra.mxu0 %v303
      %522 = vmatprep.subr.mxu0 0.0
      %523 = vmatpush1.msra.mxu0 %v308
      %524 = vmatprep.subr.mxu0 0.0
      %525 = vmatpush1.msra.mxu0 %v313
      %526 = vmatprep.subr.mxu0 0.0
      %527 = vmatpush1.msra.mxu0 %v318
      %528 = vmatprep.subr.mxu0 0.0
      %529 = vmatpush1.msra.mxu0 0.0
      %530 = vmatprep.subr.mxu0 0.0
      %531 = vmatpush1.msra.mxu0 0.0
      %532 = vmatprep.subr.mxu0 0.0
      %533 = vmatpush1.msra.mxu0 0.0
      %534 = vmatprep.subr.mxu0 0.0
      %535 = vmatpush1.msra.mxu0 0.0
      %536 = vmatprep.subr.mxu0 0.0
      %537 = vmatpush1.msra.mxu0 0.0
      %538 = vmatprep.subr.mxu0 0.0
      %539 = vmatpush1.msra.mxu0 0.0
      %540 = vmatprep.subr.mxu0 0.0
      %541 = vmatpush1.msra.mxu0 0.0
      %542 = vmatprep.subr.mxu0 0.0
      %543 = vmatpush1.msra.mxu0 0.0
      %544 = vmatprep.subr.mxu0 0.0
      %545 = vmatpush1.msra.mxu0 0.0
      %546 = vmatprep.subr.mxu0 0.0
      %547 = vmatpush1.msra.mxu0 0.0
      %548 = vmatprep.subr.mxu0 0.0
      %549 = vmatpush1.msra.mxu0 0.0
      %550 = vmatprep.subr.mxu0 0.0
      %551 = vmatpush1.msra.mxu0 0.0
      %552 = vmatprep.subr.mxu0 0.0
      %553 = vmatpush1.msra.mxu0 0.0
      %554 = vmatprep.subr.mxu0 0.0
      %555 = vmatpush1.msra.mxu0 0.0
      %556 = vmatprep.mubr.f32.mxu0 %v333
      %557 = vmatmul.mubr.f32.gmra.mrb[0].mxu0 %v225
      %v558 = vpop.f32.mrb[0].mxu0
      %v559 = vadd.f32 %v324, %v558
      %v560 = vpop.f32.mrb[0].mxu0
      %561 = vmatprep.mubr.f32.mxu0 %v336
      %562 = vmatmul.mubr.f32.gmra.mrb[0].mxu0 %v227
      %v563 = vpop.f32.mrb[0].mxu0
      %v564 = vadd.f32 %v329, %v563
      %v565 = vpop.f32.mrb[0].mxu0
      %566 = vdwg.mxu0
      %v567 = vadd.f32 %v405, %v407
      %v568 = vadd.f32 %v567, %v482
      %v569 = vadd.f32 %v568, %v484
      %vm570 = vcmask 138240
      %v571 = vsel %vm570, %v559, 0.0
      %v572 = vadd.f32 %v569, %v571
      %573 = vadd.xlane.f32.xlu0 %v572
      %v574 = vpop.xlane.xlu0 %573
      %vm575 = vcmask 1043456
      %v576 = vsel %vm575, %v411, 0.0
      %v577 = vsel %vm575, %v413, 0.0
      %v578 = vadd.f32 %v576, %v577
      %v579 = vsel %vm575, %v488, 0.0
      %v580 = vadd.f32 %v578, %v579
      %v581 = vsel %vm575, %v490, 0.0
      %v582 = vadd.f32 %v580, %v581
      %vm583 = vcmask 134144
      %v584 = vsel %vm583, %v564, 0.0
      %v585 = vadd.f32 %v582, %v584
      %586 = vadd.xlane.f32.xlu0 %v585
      %v587 = vpop.xlane.xlu0 %586
      %v588 = vrcp.pop 529.0
      %v589 = vmul.f32 %v574, %v588
      %v590 = vmul.f32 %v587, %v588
      %v591 = vsel %vm575, %v590, 0.0
      %v592 = vadd.f32 %v589, %v591
      %v593 = vrot.slane %v592, 4
      %v594 = vadd.f32 %v592, %v593
      %v595 = vrot.slane %v594, 2
      %v596 = vadd.f32 %v594, %v595
      %v597 = vrot.slane %v596, 1
      %v598 = vadd.f32 %v596, %v597
      %v599 = vrcp.pop 12.0
      %v600 = vmul.f32 %v598, %v599
      %v601 = vsub.f32 %v405, %v600
      %v602 = vsub.f32 %v407, %v600
      %v603 = vsub.f32 %v482, %v600
      %v604 = vsub.f32 %v484, %v600
      %v605 = vsub.f32 %v559, %v600
      %v606 = vsub.f32 %v411, %v600
      %v607 = vsub.f32 %v413, %v600
      %v608 = vsub.f32 %v488, %v600
      %v609 = vsub.f32 %v490, %v600
      %v610 = vsub.f32 %v564, %v600
      %v611 = vmul.f32 %v601, %v601
      %v612 = vmul.f32 %v602, %v602
      %v613 = vmul.f32 %v603, %v603
      %v614 = vmul.f32 %v604, %v604
      %v615 = vmul.f32 %v605, %v605
      %v616 = vmul.f32 %v606, %v606
      %v617 = vmul.f32 %v607, %v607
      %v618 = vmul.f32 %v608, %v608
      %v619 = vmul.f32 %v609, %v609
      %v620 = vmul.f32 %v610, %v610
      %v621 = vadd.f32 %v611, %v612
      %v622 = vadd.f32 %v621, %v613
      %v623 = vadd.f32 %v622, %v614
      %v624 = vsel %vm570, %v615, 0.0
      %v625 = vadd.f32 %v623, %v624
      %626 = vadd.xlane.f32.xlu0 %v625
      %v627 = vpop.xlane.xlu0 %626
      %v628 = vsel %vm575, %v616, 0.0
      %v629 = vsel %vm575, %v617, 0.0
      %v630 = vadd.f32 %v628, %v629
      %v631 = vsel %vm575, %v618, 0.0
      %v632 = vadd.f32 %v630, %v631
      %v633 = vsel %vm575, %v619, 0.0
      %v634 = vadd.f32 %v632, %v633
      %v635 = vsel %vm583, %v620, 0.0
      %v636 = vadd.f32 %v634, %v635
      %637 = vadd.xlane.f32.xlu0 %v636
      %v638 = vpop.xlane.xlu0 %637
      %v639 = vmul.f32 %v627, %v588
      %v640 = vmul.f32 %v638, %v588
      %v641 = vsel %vm575, %v640, 0.0
      %v642 = vadd.f32 %v639, %v641
      %v643 = vrot.slane %v642, 4
      %v644 = vadd.f32 %v642, %v643
      %v645 = vrot.slane %v644, 2
      %v646 = vadd.f32 %v644, %v645
      %v647 = vrot.slane %v646, 1
      %v648 = vadd.f32 %v646, %v647
      %v649 = vmul.f32 %v648, %v599
      %v650 = vadd.f32 %v649, 1e-05
      %v651 = vrsqrt.pop %v650
      %v652 = vmul.f32 %v601, %v651
      %v653 = vmul.f32 %v602, %v651
      %v654 = vmul.f32 %v603, %v651
      %v655 = vmul.f32 %v604, %v651
      %v656 = vmul.f32 %v605, %v651
      %v657 = vmul.f32 %v606, %v651
      %v658 = vmul.f32 %v607, %v651
      %v659 = vmul.f32 %v608, %v651
      %v660 = vmul.f32 %v609, %v651
      %v661 = vmul.f32 %v610, %v651
      %v662 = vld [vmem:[%s3] sm:$0xff]
      %v663 = vld [vmem:[%s3 + $0x8] sm:$0xff]
      %v664 = vld [vmem:[%s3 + $0x10] sm:$0xff]
      %v665 = vld [vmem:[%s3 + $0x18] sm:$0xff]
      %v666 = vld [vmem:[%s3 + $0x20] sm:$0xff]
      %v667 = vld [vmem:[%s3 + $0x28] sm:$0xf]
      %v668 = vld [vmem:[%s3 + $0x30] sm:$0xf]
      %v669 = vld [vmem:[%s3 + $0x38] sm:$0xf]
      %v670 = vld [vmem:[%s3 + $0x40] sm:$0xf]
      %v671 = vld [vmem:[%s3 + $0x48] sm:$0xf]
      %v672 = vmul.f32 %v652, %v662
      %v673 = vmul.f32 %v653, %v663
      %v674 = vmul.f32 %v654, %v664
      %v675 = vmul.f32 %v655, %v665
      %v676 = vmul.f32 %v656, %v666
      %v677 = vmul.f32 %v657, %v667
      %v678 = vmul.f32 %v658, %v668
      %v679 = vmul.f32 %v659, %v669
      %v680 = vmul.f32 %v660, %v670
      %v681 = vmul.f32 %v661, %v671
      %v682 = vld [vmem:[%s4] sm:$0xff]
      %v683 = vld [vmem:[%s4 + $0x8] sm:$0xff]
      %v684 = vld [vmem:[%s4 + $0x10] sm:$0xff]
      %v685 = vld [vmem:[%s4 + $0x18] sm:$0xff]
      %v686 = vld [vmem:[%s4 + $0x20] sm:$0xff]
      %v687 = vld [vmem:[%s4 + $0x28] sm:$0xf]
      %v688 = vld [vmem:[%s4 + $0x30] sm:$0xf]
      %v689 = vld [vmem:[%s4 + $0x38] sm:$0xf]
      %v690 = vld [vmem:[%s4 + $0x40] sm:$0xf]
      %v691 = vld [vmem:[%s4 + $0x48] sm:$0xf]
      %v692 = vadd.f32 %v672, %v682
      %v693 = vadd.f32 %v673, %v683
      %v694 = vadd.f32 %v674, %v684
      %v695 = vadd.f32 %v675, %v685
      %v696 = vadd.f32 %v676, %v686
      %v697 = vadd.f32 %v677, %v687
      %v698 = vadd.f32 %v678, %v688
      %v699 = vadd.f32 %v679, %v689
      %v700 = vadd.f32 %v680, %v690
      %v701 = vadd.f32 %v681, %v691
      %v702 = vmax.f32 %v692, 0.0
      %v703 = vmax.f32 %v693, 0.0
      %v704 = vmax.f32 %v694, 0.0
      %v705 = vmax.f32 %v695, 0.0
      %v706 = vmax.f32 %v696, 0.0
      %v707 = vmax.f32 %v697, 0.0
      %v708 = vmax.f32 %v698, 0.0
      %v709 = vmax.f32 %v699, 0.0
      %v710 = vmax.f32 %v700, 0.0
      %v711 = vmax.f32 %v701, 0.0
      %712 = vst [vmem:[%s224] sm:$0xff] %v702
      %713 = vst [vmem:[%s224 + $0x8] sm:$0xff] %v703
      %714 = vst [vmem:[%s224 + $0x10] sm:$0xff] %v704
      %715 = vst [vmem:[%s224 + $0x18] sm:$0xff] %v705
      %716 = vst.msk [vmem:[%s224 + $0x20] sm:$0xff] %vm570, %v706
      %717 = vst [vmem:[%s224 + $0x28] sm:$0xf] %v707
      %718 = vst [vmem:[%s224 + $0x30] sm:$0xf] %v708
      %719 = vst [vmem:[%s224 + $0x38] sm:$0xf] %v709
      %720 = vst [vmem:[%s224 + $0x40] sm:$0xf] %v710
      %721 = vst.msk [vmem:[%s224 + $0x48] sm:$0xf] %vm583, %v711
      %p722 = scmp.lt.s32.totalorder %s16, 5
      %s723 = scalar_select %p722, %s16, 5
      %s724 = smul.addr %s723, 10
      %s725 = smul.addr %s724, 8
      %s726 = scalar_lea.vmem %s5, %s725
      // Predicated region
      $region41: #{rnn_forward.10} parent=39 // pred_check
        %p727 = pneg %p144
      $region42: #{rnn_forward.10} parent=39 // pred_check_branch
        %729 = sbr.rel (%p727) target = $region44
      $region43: #{rnn_forward.10} parent=39 // pred_region
        _
      $region44: #{rnn_forward.10} parent=39 // pred_fallthru
        _
    $region40: #{rnn_forward.10} parent=5 // pred_fallthru
      _
    %p730 = scmp.le.s32.totalorder 2, %s11
    // Predicated region
    $region45: #{rnn_forward.10} parent=5 // pred_check
      %p731 = pneg %p730
    $region46: #{rnn_forward.10} parent=5 // pred_check_branch
      %733 = sbr.rel (%p731) target = $region48
    $region47: #{rnn_forward.10} parent=5 // pred_region
      %s734 = ssub.s32 %s11, 2
      // Predicated region
      $region49: #{rnn_forward.10} parent=47 // pred_check
        %p735 = pneg %p150
      $region50: #{rnn_forward.10} parent=47 // pred_check_branch
        %737 = sbr.rel (%p735) target = $region52
      $region51: #{rnn_forward.10} parent=47 // pred_region
        %p738 = scmp.lt.s32.totalorder %s17, 5
        %s739 = scalar_select %p738, %s17, 5
        %s740 = smul.addr %s739, 10
        %s741 = smul.addr %s740, 8
        %s742 = scalar_lea.vmem %s5, %s741
      $region52: #{rnn_forward.10} parent=47 // pred_fallthru
        _
    $region48: #{rnn_forward.10} parent=5 // pred_fallthru
      _
  $region6: #{rnn_forward.10} parent=0 // loop_footer
    %s15 = sadd.s32 1, %s11
  $region7: #{rnn_forward.10} parent=0 // loop_footer_branch
    %10 = sbr.rel target = $region3
  $region8: #{rnn_forward.10} parent=0 // loop_exit
    _

// kernel: rnn_forward.11
$region0: #{rnn_forward.11}
  #allocation0 [shape = 'u32[]', space=smem, size = 0x4, offset = 0x4, fixed_abs, tag = 'smem constant byte address 0x4 - core index']
  #allocation1 [shape = 'u32[144,128]{1,0:T(1,128)}', space=vmem, size = 0x12000, scoped, tag = 'internal scratch']
  #allocation2 [shape = 'f32[1,1]{1,0:T(1,128)S(1)}', space=vmem, size = 0x200, scoped, tag = 'scoped memory for rnn_forward.11']
  %s0 = inlined_call_operand.vmem [shape: f32[6,48,576], index: 0, kind: input, shape index: {}]
  %s1 = inlined_call_operand.vmem [shape: f32[1,48], index: 1, kind: input, shape index: {}]
  %s2 = inlined_call_operand.<no memory space> [shape: f32[1,1], index: 2, kind: input, shape index: {}]
  %s3 = inlined_call_operand.vmem [shape: f32[6,1,576], index: 3, kind: output, shape index: {}]
  %s4 = sld [smem:[#allocation0]]
  $region45: #{rnn_forward.11} parent=0
    _
  %s6 = ssub.s32 1, %s4
  %s7 = scalar_select 0, %s6, %s4
  %v8 = vstv %s2
  %9 = vst [vmem:[#allocation2] sm:$0x1] %v8
  loop: start=0, step=1, limit=8
  $region2: #{rnn_forward.11} parent=0 // loop_pre_header
    _
  $region3: #{rnn_forward.11} parent=0 // loop_header
    %s11 = sphi 0, %s15
    %p12 = scmp.ge.s32.totalorder %s11, 8
    %s21 = sphi 0, %s23
    %s24 = sphi 0, %s21
    %s25 = sphi 0, %s24
    %s41 = sphi 0, %s25
    %s45 = sphi 0, %s45
    %s47 = sphi 0, %s45
    %s48 = sphi 0, %s47
    %s62 = sphi 0, %s48
    %s66 = sphi 0, %s66
    %s68 = sphi 0, %s66
    %s69 = sphi 0, %s68
    %s83 = sphi 0, %s69
    %s89 = sphi 0, %s91
    %s92 = sphi 0, %s89
    %s93 = sphi 0, %s92
    %s109 = sphi 0, %s93
  $region4: #{rnn_forward.11} parent=0 // loop_header_branch
    %14 = sbr.rel (%p12) target = $region8
  $region5: #{rnn_forward.11} parent=0 // loop_body
    %s16 = ssub.s32 %s11, 1
    %s17 = ssub.s32 %s11, 2
    %s18 = sadd.s32 %s11, 1
    %s19 = ssub.s32 %s11, %s18
    %p20 = scmp.eq.s32.totalorder %s19, 0
    %s22 = sadd.s32 %s21, 1
    %s23 = scalar_select %p20, %s21, %s22
    %p26 = pneg %p20
    %p27 = scmp.eq.s32.totalorder %s11, 5
    %p28 = por %p26, %p27
    %p29 = scmp.ne.s32.totalorder %s21, %s24
    %p30 = scmp.eq.s32.totalorder %s11, 0
    %p31 = por %p29, %p30
    %p32 = scmp.ne.s32.totalorder %s21, %s24
    %p33 = scmp.eq.s32.totalorder %s16, 5
    %p34 = por %p32, %p33
    %p35 = scmp.ne.s32.totalorder %s24, %s25
    %p36 = scmp.eq.s32.totalorder %s16, 0
    %p37 = por %p35, %p36
    %p38 = scmp.ne.s32.totalorder %s24, %s25
    %p39 = scmp.eq.s32.totalorder %s17, 5
    %p40 = por %p38, %p39
    %p42 = scmp.ne.s32.totalorder %s25, %s41
    %p43 = scmp.eq.s32.totalorder %s17, 0
    %p44 = por %p42, %p43
    %s46 = sadd.s32 %s45, 1
    %p49 = scmp.eq.s32.totalorder %s11, 5
    %p50 = scmp.ne.s32.totalorder %s45, %s47
    %p51 = scmp.eq.s32.totalorder %s11, 0
    %p52 = por %p50, %p51
    %p53 = scmp.ne.s32.totalorder %s45, %s47
    %p54 = scmp.eq.s32.totalorder %s16, 5
    %p55 = por %p53, %p54
    %p56 = scmp.ne.s32.totalorder %s47, %s48
    %p57 = scmp.eq.s32.totalorder %s16, 0
    %p58 = por %p56, %p57
    %p59 = scmp.ne.s32.totalorder %s47, %s48
    %p60 = scmp.eq.s32.totalorder %s17, 5
    %p61 = por %p59, %p60
    %p63 = scmp.ne.s32.totalorder %s48, %s62
    %p64 = scmp.eq.s32.totalorder %s17, 0
    %p65 = por %p63, %p64
    %s67 = sadd.s32 %s66, 1
    %p70 = scmp.eq.s32.totalorder %s11, 5
    %p71 = scmp.ne.s32.totalorder %s66, %s68
    %p72 = scmp.eq.s32.totalorder %s11, 0
    %p73 = por %p71, %p72
    %p74 = scmp.ne.s32.totalorder %s66, %s68
    %p75 = scmp.eq.s32.totalorder %s16, 5
    %p76 = por %p74, %p75
    %p77 = scmp.ne.s32.totalorder %s68, %s69
    %p78 = scmp.eq.s32.totalorder %s16, 0
    %p79 = por %p77, %p78
    %p80 = scmp.ne.s32.totalorder %s68, %s69
    %p81 = scmp.eq.s32.totalorder %s17, 5
    %p82 = por %p80, %p81
    %p84 = scmp.ne.s32.totalorder %s69, %s83
    %p85 = scmp.eq.s32.totalorder %s17, 0
    %p86 = por %p84, %p85
    %s87 = ssub.s32 %s11, %s18
    %p88 = scmp.eq.s32.totalorder %s87, 0
    %s90 = sadd.s32 %s89, 1
    %s91 = scalar_select %p88, %s89, %s90
    %p94 = pneg %p88
    %p95 = scmp.eq.s32.totalorder %s11, 5
    %p96 = por %p94, %p95
    %p97 = scmp.ne.s32.totalorder %s89, %s92
    %p98 = scmp.eq.s32.totalorder %s11, 0
    %p99 = por %p97, %p98
    %p100 = scmp.ne.s32.totalorder %s89, %s92
    %p101 = scmp.eq.s32.totalorder %s16, 5
    %p102 = por %p100, %p101
    %p103 = scmp.ne.s32.totalorder %s92, %s93
    %p104 = scmp.eq.s32.totalorder %s16, 0
    %p105 = por %p103, %p104
    %p106 = scmp.ne.s32.totalorder %s92, %s93
    %p107 = scmp.eq.s32.totalorder %s17, 5
    %p108 = por %p106, %p107
    %p110 = scmp.ne.s32.totalorder %s93, %s109
    %p111 = scmp.eq.s32.totalorder %s17, 0
    %p112 = por %p110, %p111
    %p113 = scmp.le.s32.totalorder 1, %s11
    %p114 = scmp.lt.s32.totalorder %s11, 7
    %p115 = pnand %p113, %p114
    %p116 = pneg %p115
    // Predicated region
    $region9: #{rnn_forward.11} parent=5 // pred_check
      _
    $region10: #{rnn_forward.11} parent=5 // pred_check_branch
      %118 = sbr.rel (%p115) target = $region12
    $region11: #{rnn_forward.11} parent=5 // pred_region
      %s119 = ssub.s32 %s11, 1
      // Predicated region
      $region13: #{rnn_forward.11} parent=11 // pred_check
        %p120 = pneg %p58
      $region14: #{rnn_forward.11} parent=11 // pred_check_branch
        %122 = sbr.rel (%p120) target = $region16
      $region15: #{rnn_forward.11} parent=11 // pred_region
        _
      $region16: #{rnn_forward.11} parent=11 // pred_fallthru
        _
      // Predicated region
      $region17: #{rnn_forward.11} parent=11 // pred_check
        %p123 = pneg %p79
      $region18: #{rnn_forward.11} parent=11 // pred_check_branch
        %125 = sbr.rel (%p123) target = $region20
      $region19: #{rnn_forward.11} parent=11 // pred_region
        _
      $region20: #{rnn_forward.11} parent=11 // pred_fallthru
        _
    $region12: #{rnn_forward.11} parent=5 // pred_fallthru
      _
    %p126 = scmp.lt.s32.totalorder %s11, 6
    // Predicated region
    $region21: #{rnn_forward.11} parent=5 // pred_check
      %p127 = pneg %p126
    $region22: #{rnn_forward.11} parent=5 // pred_check_branch
      %129 = sbr.rel (%p127) target = $region24
    $region23: #{rnn_forward.11} parent=5 // pred_region
      // Predicated region
      $region25: #{rnn_forward.11} parent=23 // pred_check
        %p130 = pneg %p31
      $region26: #{rnn_forward.11} parent=23 // pred_check_branch
        %132 = sbr.rel (%p130) target = $region28
      $region27: #{rnn_forward.11} parent=23 // pred_region
        %p133 = scmp.lt.s32.totalorder %s11, 5
        %s134 = scalar_select %p133, %s11, 5
        %s135 = smul.addr %s134, 30
        %s136 = smul.addr %s135, 8
        %s137 = scalar_lea.vmem %s0, %s136
      $region28: #{rnn_forward.11} parent=23 // pred_fallthru
        _
    $region24: #{rnn_forward.11} parent=5 // pred_fallthru
      _
    %p138 = scmp.le.s32.totalorder 1, %s11
    %p139 = scmp.lt.s32.totalorder %s11, 7
    %p140 = pnand %p138, %p139
    %p141 = pneg %p140
    // Predicated region
    $region29: #{rnn_forward.11} parent=5 // pred_check
      _
    $region30: #{rnn_forward.11} parent=5 // pred_check_branch
      %143 = sbr.rel (%p140) target = $region32
    $region31: #{rnn_forward.11} parent=5 // pred_region
      %s144 = ssub.s32 %s11, 1
      %p145 = scmp.lt.s32.totalorder %s16, 5
      %s146 = scalar_select %p145, %s16, 5
      %s147 = smul.addr %s146, 30
      %s148 = smul.addr %s147, 8
      %s149 = scalar_lea.vmem %s0, %s148
      %p150 = pneg %p37
      %p151 = pneg %p34
      %p152 = pneg %p58
      %p153 = pneg %p55
      %p154 = pneg %p79
      %p155 = pneg %p76
      %p156 = pneg %p105
      %p157 = pneg %p102
      %p158 = scmp.lt.s32.totalorder %s16, 5
      %s159 = scalar_select %p158, %s16, 5
      %s160 = smul.addr %s159, 5
      %s161 = scalar_lea.vmem %s3, %s160
      %p162 = scmp.lt.s32.totalorder %s16, 5
      %s163 = scalar_select %p162, %s16, 5
      %s164 = smul.addr %s163, 30
      %s165 = smul.addr %s164, 8
      %s166 = scalar_lea.vmem %s0, %s165
      %p167 = scmp.lt.s32.totalorder %s16, 5
      %s168 = scalar_select %p167, %s16, 5
      %s169 = smul.addr %s168, 5
      %s170 = scalar_lea.vmem %s3, %s169
      %v171 = vld [vmem:[%s1] sm:$0x1]
      %v172 = vld [vmem:[%s166] sm:$0xff]
      %v173 = vld [vmem:[%s166 + $0x8] sm:$0xff]
      %v174 = vld [vmem:[%s166 + $0x10] sm:$0xff]
      %v175 = vld [vmem:[%s166 + $0x18] sm:$0xff]
      %v176 = vld [vmem:[%s166 + $0x20] sm:$0xff]
      %v177 = vld [vmem:[%s166 + $0x28] sm:$0xff]
      %v178 = vld [vmem:[%s166 + $0x30] sm:$0xff]
      %v179 = vld [vmem:[%s166 + $0x38] sm:$0xff]
      %v180 = vld [vmem:[%s166 + $0x40] sm:$0xff]
      %v181 = vld [vmem:[%s166 + $0x48] sm:$0xff]
      %v182 = vld [vmem:[%s166 + $0x50] sm:$0xff]
      %v183 = vld [vmem:[%s166 + $0x58] sm:$0xff]
      %v184 = vld [vmem:[%s166 + $0x60] sm:$0xff]
      %v185 = vld [vmem:[%s166 + $0x68] sm:$0xff]
      %v186 = vld [vmem:[%s166 + $0x70] sm:$0xff]
      %v187 = vld [vmem:[%s166 + $0x78] sm:$0xff]
      %v188 = vld [vmem:[%s166 + $0x80] sm:$0xff]
      %v189 = vld [vmem:[%s166 + $0x88] sm:$0xff]
      %v190 = vld [vmem:[%s166 + $0x90] sm:$0xff]
      %v191 = vld [vmem:[%s166 + $0x98] sm:$0xff]
      %v192 = vld [vmem:[%s166 + $0xa0] sm:$0xff]
      %v193 = vld [vmem:[%s166 + $0xa8] sm:$0xff]
      %v194 = vld [vmem:[%s166 + $0xb0] sm:$0xff]
      %v195 = vld [vmem:[%s166 + $0xb8] sm:$0xff]
      %v196 = vld [vmem:[%s166 + $0xc0] sm:$0xff]
      %v197 = vld [vmem:[%s166 + $0xc8] sm:$0xff]
      %v198 = vld [vmem:[%s166 + $0xd0] sm:$0xff]
      %v199 = vld [vmem:[%s166 + $0xd8] sm:$0xff]
      %v200 = vld [vmem:[%s166 + $0xe0] sm:$0xff]
      %v201 = vld [vmem:[%s166 + $0xe8] sm:$0xff]
      %v202 = vld [vmem:[#allocation2] sm:$0x1]
      %204 = vset.pattern.permute.xlu0 0
      %205 = vperm.xlu0 %204, %v202
      %v206 = vpop.permute.xlu0 %205
      %v208 = vlaneseq
      %v209 = vshrl.u32 %v208, 7
      %v210 = vsub.s32 0, %v209
      %v211 = vrot.slane %v206, %v210
      %vm212 = vcmask 392192
      %v214 = vsel %vm212, %v171, 0
      %216 = vmatprep.subr.mxu0 %v173
      %217 = vmatpush1.msra.mxu0 %v172
      %218 = vmatprep.subr.mxu0 %v178
      %219 = vmatpush1.msra.mxu0 %v177
      %220 = vmatprep.subr.mxu0 %v183
      %221 = vmatpush1.msra.mxu0 %v182
      %222 = vmatprep.subr.mxu0 %v188
      %223 = vmatpush1.msra.mxu0 %v187
      %224 = vmatprep.subr.mxu0 %v193
      %225 = vmatpush1.msra.mxu0 %v192
      %226 = vmatprep.subr.mxu0 %v198
      %227 = vmatpush1.msra.mxu0 %v197
      %228 = vmatprep.subr.mxu0 0.0
      %229 = vmatpush1.msra.mxu0 0.0
      %230 = vmatprep.subr.mxu0 0.0
      %231 = vmatpush1.msra.mxu0 0.0
      %232 = vmatprep.subr.mxu0 0.0
      %233 = vmatpush1.msra.mxu0 0.0
      %234 = vmatprep.subr.mxu0 0.0
      %235 = vmatpush1.msra.mxu0 0.0
      %236 = vmatprep.subr.mxu0 0.0
      %237 = vmatpush1.msra.mxu0 0.0
      %238 = vmatprep.subr.mxu0 0.0
      %239 = vmatpush1.msra.mxu0 0.0
      %240 = vmatprep.subr.mxu0 0.0
      %241 = vmatpush1.msra.mxu0 0.0
      %242 = vmatprep.subr.mxu0 0.0
      %243 = vmatpush1.msra.mxu0 0.0
      %244 = vmatprep.subr.mxu0 0.0
      %245 = vmatpush1.msra.mxu0 0.0
      %246 = vmatprep.subr.mxu0 0.0
      %247 = vmatpush1.msra.mxu0 0.0
      %248 = vmatprep.subr.mxu0 0.0
      %249 = vmatpush1.msra.mxu0 0.0
      %250 = vmatprep.subr.mxu0 0.0
      %251 = vmatpush1.msra.mxu0 0.0
      %252 = vmatprep.subr.mxu0 0.0
      %253 = vmatpush1.msra.mxu0 0.0
      %254 = vmatprep.subr.mxu0 0.0
      %255 = vmatpush1.msra.mxu0 0.0
      %256 = vmatprep.subr.mxu0 0.0
      %257 = vmatpush1.msra.mxu0 0.0
      %258 = vmatprep.subr.mxu0 0.0
      %259 = vmatpush1.msra.mxu0 0.0
      %260 = vmatprep.subr.mxu0 0.0
      %261 = vmatpush1.msra.mxu0 0.0
      %262 = vmatprep.subr.mxu0 0.0
      %263 = vmatpush1.msra.mxu0 0.0
      %264 = vmatprep.subr.mxu0 0.0
      %265 = vmatpush1.msra.mxu0 0.0
      %266 = vmatprep.subr.mxu0 0.0
      %267 = vmatpush1.msra.mxu0 0.0
      %268 = vmatprep.subr.mxu0 0.0
      %269 = vmatpush1.msra.mxu0 0.0
      %270 = vmatprep.subr.mxu0 0.0
      %271 = vmatpush1.msra.mxu0 0.0
      %272 = vmatprep.subr.mxu0 0.0
      %273 = vmatpush1.msra.mxu0 0.0
      %274 = vmatprep.subr.mxu0 0.0
      %275 = vmatpush1.msra.mxu0 0.0
      %276 = vmatprep.subr.mxu0 0.0
      %277 = vmatpush1.msra.mxu0 0.0
      %278 = vmatprep.subr.mxu0 0.0
      %279 = vmatpush1.msra.mxu0 0.0
      %280 = vmatprep.mubr.f32.mxu0 0.0
      %281 = vmatmul.mubr.f32.gmra.mrb[0].mxu0 %v214
      %v282 = vpop.f32.mrb[0].mxu0
      %v283 = vadd.f32 %v211, %v282
      %v284 = vpop.f32.mrb[0].mxu0
      %v285 = vadd.f32 %v211, %v284
      %286 = vdwg.mxu0
      %287 = vmatprep.subr.mxu0 %v175
      %288 = vmatpush1.msra.mxu0 %v174
      %289 = vmatprep.subr.mxu0 %v180
      %290 = vmatpush1.msra.mxu0 %v179
      %291 = vmatprep.subr.mxu0 %v185
      %292 = vmatpush1.msra.mxu0 %v184
      %293 = vmatprep.subr.mxu0 %v190
      %294 = vmatpush1.msra.mxu0 %v189
      %295 = vmatprep.subr.mxu0 %v195
      %296 = vmatpush1.msra.mxu0 %v194
      %297 = vmatprep.subr.mxu0 %v200
      %298 = vmatpush1.msra.mxu0 %v199
      %299 = vmatprep.subr.mxu0 0.0
      %300 = vmatpush1.msra.mxu0 0.0
      %301 = vmatprep.subr.mxu0 0.0
      %302 = vmatpush1.msra.mxu0 0.0
      %303 = vmatprep.subr.mxu0 0.0
      %304 = vmatpush1.msra.mxu0 0.0
      %305 = vmatprep.subr.mxu0 0.0
      %306 = vmatpush1.msra.mxu0 0.0
      %307 = vmatprep.subr.mxu0 0.0
      %308 = vmatpush1.msra.mxu0 0.0
      %309 = vmatprep.subr.mxu0 0.0
      %310 = vmatpush1.msra.mxu0 0.0
      %311 = vmatprep.subr.mxu0 0.0
      %312 = vmatpush1.msra.mxu0 0.0
      %313 = vmatprep.subr.mxu0 0.0
      %314 = vmatpush1.msra.mxu0 0.0
      %315 = vmatprep.subr.mxu0 0.0
      %316 = vmatpush1.msra.mxu0 0.0
      %317 = vmatprep.subr.mxu0 0.0
      %318 = vmatpush1.msra.mxu0 0.0
      %319 = vmatprep.subr.mxu0 0.0
      %320 = vmatpush1.msra.mxu0 0.0
      %321 = vmatprep.subr.mxu0 0.0
      %322 = vmatpush1.msra.mxu0 0.0
      %323 = vmatprep.subr.mxu0 0.0
      %324 = vmatpush1.msra.mxu0 0.0
      %325 = vmatprep.subr.mxu0 0.0
      %326 = vmatpush1.msra.mxu0 0.0
      %327 = vmatprep.subr.mxu0 0.0
      %328 = vmatpush1.msra.mxu0 0.0
      %329 = vmatprep.subr.mxu0 0.0
      %330 = vmatpush1.msra.mxu0 0.0
      %331 = vmatprep.subr.mxu0 0.0
      %332 = vmatpush1.msra.mxu0 0.0
      %333 = vmatprep.subr.mxu0 0.0
      %334 = vmatpush1.msra.mxu0 0.0
      %335 = vmatprep.subr.mxu0 0.0
      %336 = vmatpush1.msra.mxu0 0.0
      %337 = vmatprep.subr.mxu0 0.0
      %338 = vmatpush1.msra.mxu0 0.0
      %339 = vmatprep.subr.mxu0 0.0
      %340 = vmatpush1.msra.mxu0 0.0
      %341 = vmatprep.subr.mxu0 0.0
      %342 = vmatpush1.msra.mxu0 0.0
      %343 = vmatprep.subr.mxu0 0.0
      %344 = vmatpush1.msra.mxu0 0.0
      %345 = vmatprep.subr.mxu0 0.0
      %346 = vmatpush1.msra.mxu0 0.0
      %347 = vmatprep.subr.mxu0 0.0
      %348 = vmatpush1.msra.mxu0 0.0
      %349 = vmatprep.subr.mxu0 0.0
      %350 = vmatpush1.msra.mxu0 0.0
      %351 = vmatprep.mubr.f32.mxu0 0.0
      %352 = vmatmul.mubr.f32.gmra.mrb[0].mxu0 %v214
      %v353 = vpop.f32.mrb[0].mxu0
      %v354 = vadd.f32 %v211, %v353
      %v355 = vpop.f32.mrb[0].mxu0
      %v356 = vadd.f32 %v211, %v355
      %357 = vdwg.mxu0
      %358 = vmatprep.subr.mxu0 0.0
      %359 = vmatpush1.msra.mxu0 %v176
      %360 = vmatprep.subr.mxu0 0.0
      %361 = vmatpush1.msra.mxu0 %v181
      %362 = vmatprep.subr.mxu0 0.0
      %363 = vmatpush1.msra.mxu0 %v186
      %364 = vmatprep.subr.mxu0 0.0
      %365 = vmatpush1.msra.mxu0 %v191
      %366 = vmatprep.subr.mxu0 0.0
      %367 = vmatpush1.msra.mxu0 %v196
      %368 = vmatprep.subr.mxu0 0.0
      %369 = vmatpush1.msra.mxu0 %v201
      %370 = vmatprep.subr.mxu0 0.0
      %371 = vmatpush1.msra.mxu0 0.0
      %372 = vmatprep.subr.mxu0 0.0
      %373 = vmatpush1.msra.mxu0 0.0
      %374 = vmatprep.subr.mxu0 0.0
      %375 = vmatpush1.msra.mxu0 0.0
      %376 = vmatprep.subr.mxu0 0.0
      %377 = vmatpush1.msra.mxu0 0.0
      %378 = vmatprep.subr.mxu0 0.0
      %379 = vmatpush1.msra.mxu0 0.0
      %380 = vmatprep.subr.mxu0 0.0
      %381 = vmatpush1.msra.mxu0 0.0
      %382 = vmatprep.subr.mxu0 0.0
      %383 = vmatpush1.msra.mxu0 0.0
      %384 = vmatprep.subr.mxu0 0.0
      %385 = vmatpush1.msra.mxu0 0.0
      %386 = vmatprep.subr.mxu0 0.0
      %387 = vmatpush1.msra.mxu0 0.0
      %388 = vmatprep.subr.mxu0 0.0
      %389 = vmatpush1.msra.mxu0 0.0
      %390 = vmatprep.subr.mxu0 0.0
      %391 = vmatpush1.msra.mxu0 0.0
      %392 = vmatprep.subr.mxu0 0.0
      %393 = vmatpush1.msra.mxu0 0.0
      %394 = vmatprep.subr.mxu0 0.0
      %395 = vmatpush1.msra.mxu0 0.0
      %396 = vmatprep.subr.mxu0 0.0
      %397 = vmatpush1.msra.mxu0 0.0
      %398 = vmatprep.subr.mxu0 0.0
      %399 = vmatpush1.msra.mxu0 0.0
      %400 = vmatprep.subr.mxu0 0.0
      %401 = vmatpush1.msra.mxu0 0.0
      %402 = vmatprep.subr.mxu0 0.0
      %403 = vmatpush1.msra.mxu0 0.0
      %404 = vmatprep.subr.mxu0 0.0
      %405 = vmatpush1.msra.mxu0 0.0
      %406 = vmatprep.subr.mxu0 0.0
      %407 = vmatpush1.msra.mxu0 0.0
      %408 = vmatprep.subr.mxu0 0.0
      %409 = vmatpush1.msra.mxu0 0.0
      %410 = vmatprep.subr.mxu0 0.0
      %411 = vmatpush1.msra.mxu0 0.0
      %412 = vmatprep.subr.mxu0 0.0
      %413 = vmatpush1.msra.mxu0 0.0
      %414 = vmatprep.subr.mxu0 0.0
      %415 = vmatpush1.msra.mxu0 0.0
      %416 = vmatprep.subr.mxu0 0.0
      %417 = vmatpush1.msra.mxu0 0.0
      %418 = vmatprep.subr.mxu0 0.0
      %419 = vmatpush1.msra.mxu0 0.0
      %420 = vmatprep.subr.mxu0 0.0
      %421 = vmatpush1.msra.mxu0 0.0
      %422 = vmatprep.mubr.f32.mxu0 0.0
      %423 = vmatmul.mubr.f32.gmra.mrb[0].mxu0 %v214
      %v424 = vpop.f32.mrb[0].mxu0
      %v425 = vadd.f32 %v211, %v424
      %v426 = vpop.f32.mrb[0].mxu0
      %427 = vdwg.mxu0
      %v428 = vxor.u32 %v283, 2147483648
      %v429 = vxor.u32 %v285, 2147483648
      %v430 = vxor.u32 %v354, 2147483648
      %v431 = vxor.u32 %v356, 2147483648
      %v432 = vxor.u32 %v425, 2147483648
      %v433 = vmul.f32 %v428, 1.442695
      %v434 = vpow.pop %v433
      %v435 = vmul.f32 %v429, 1.442695
      %v436 = vpow.pop %v435
      %v437 = vmul.f32 %v430, 1.442695
      %v438 = vpow.pop %v437
      %v439 = vmul.f32 %v431, 1.442695
      %v440 = vpow.pop %v439
      %v441 = vmul.f32 %v432, 1.442695
      %v442 = vpow.pop %v441
      %v443 = vadd.f32 %v434, 1.0
      %v444 = vadd.f32 %v436, 1.0
      %v445 = vadd.f32 %v438, 1.0
      %v446 = vadd.f32 %v440, 1.0
      %v447 = vadd.f32 %v442, 1.0
      %v448 = vrcp.pop %v443
      %v449 = vmul.f32 1.0, %v448
      %v450 = vrcp.pop %v444
      %v451 = vmul.f32 1.0, %v450
      %v452 = vrcp.pop %v445
      %v453 = vmul.f32 1.0, %v452
      %v454 = vrcp.pop %v446
      %v455 = vmul.f32 1.0, %v454
      %v456 = vrcp.pop %v447
      %v457 = vmul.f32 1.0, %v456
      %v463 = vcombine.low %v449, %v451
      %v464 = vcombine.low %v453, %v455
      %v466 = vunpack.c.l.s4 1966171168
      %v467 = vunpack.c.0.s8 %v466
      %v468 = vlaneseq
      %v469 = vshrl.u32 %v468, 7
      %v470 = vsub.s32 %v467, %v469
      %v471 = vrot.slane %v463, %v470
      %v473 = vunpack.c.l.s4 1966171168
      %v474 = vunpack.c.0.s8 %v473
      %v475 = vlaneseq
      %v476 = vshrl.u32 %v475, 7
      %v477 = vsub.s32 %v474, %v476
      %v478 = vrot.slane %v464, %v477
      %v480 = vunpack.c.l.s4 1966171168
      %v481 = vunpack.c.0.s8 %v480
      %v482 = vlaneseq
      %v483 = vshrl.u32 %v482, 7
      %v484 = vsub.s32 %v481, %v483
      %v485 = vrot.slane %v457, %v484
      %v486 = vcombine.low %v471, %v478
      %v488 = vunpack.c.l.s4 1966171168
      %v489 = vunpack.c.0.s8 %v488
      %v490 = vlaneseq
      %v491 = vshrl.u32 %v490, 7
      %v492 = vsub.s32 %v489, %v491
      %v493 = vrot.slane %v486, %v492
      %v495 = vunpack.c.l.s4 1966171168
      %v496 = vunpack.c.0.s8 %v495
      %v497 = vlaneseq
      %v498 = vshrl.u32 %v497, 7
      %v499 = vsub.s32 %v496, %v498
      %v500 = vrot.slane %v485, %v499
      %v501 = vcombine.low %v493, %v500
      %v503 = vlaneseq
      %vm504 = vcmp.ge.s32.totalorder %v503, 0
      %vm505 = vcmp.lt.s32.totalorder %v503, 576
      %vm506 = vmand %vm504, %vm505
      %507 = vst.msk [vmem:[%s170] sm:$0x1f] %vm506, %v501
      %p508 = scmp.lt.s32.totalorder %s16, 5
      %s509 = scalar_select %p508, %s16, 5
      %s510 = smul.addr %s509, 5
      %s511 = scalar_lea.vmem %s3, %s510
      // Predicated region
      $region33: #{rnn_forward.11} parent=31 // pred_check
        %p512 = pneg %p102
      $region34: #{rnn_forward.11} parent=31 // pred_check_branch
        %514 = sbr.rel (%p512) target = $region36
      $region35: #{rnn_forward.11} parent=31 // pred_region
        _
      $region36: #{rnn_forward.11} parent=31 // pred_fallthru
        _
    $region32: #{rnn_forward.11} parent=5 // pred_fallthru
      _
    %p515 = scmp.le.s32.totalorder 2, %s11
    // Predicated region
    $region37: #{rnn_forward.11} parent=5 // pred_check
      %p516 = pneg %p515
    $region38: #{rnn_forward.11} parent=5 // pred_check_branch
      %518 = sbr.rel (%p516) target = $region40
    $region39: #{rnn_forward.11} parent=5 // pred_region
      %s519 = ssub.s32 %s11, 2
      // Predicated region
      $region41: #{rnn_forward.11} parent=39 // pred_check
        %p520 = pneg %p108
      $region42: #{rnn_forward.11} parent=39 // pred_check_branch
        %522 = sbr.rel (%p520) target = $region44
      $region43: #{rnn_forward.11} parent=39 // pred_region
        %p523 = scmp.lt.s32.totalorder %s17, 5
        %s524 = scalar_select %p523, %s17, 5
        %s525 = smul.addr %s524, 5
        %s526 = scalar_lea.vmem %s3, %s525
      $region44: #{rnn_forward.11} parent=39 // pred_fallthru
        _
    $region40: #{rnn_forward.11} parent=5 // pred_fallthru
      _
  $region6: #{rnn_forward.11} parent=0 // loop_footer
    %s15 = sadd.s32 1, %s11
  $region7: #{rnn_forward.11} parent=0 // loop_footer_branch
    %10 = sbr.rel target = $region3
  $region8: #{rnn_forward.11} parent=0 // loop_exit
    _

</llo_original>
